<compile_context>
chip_gen: v6e
topology: v6e:2x2x1
jax: 0.10.0
libtpu: 0.0.40
codegen_flags: <defaults>
</compile_context>

<pallas_src>
import functools

import jax
import jax.numpy as jnp
import numpy as np
from jax.experimental import pallas as pl
from jax.experimental.pallas import tpu as pltpu

# ---- model hyper-parameters (small, TPU-friendly, consistent with __init__) ----
VOCAB_SIZE = 64
EMBED_DIM = 128          # embed_dim
NUM_HEADS = 4            # num_heads
HEAD_DIM = EMBED_DIM // NUM_HEADS
HIDDEN_DIM = 128         # hidden_dim / dim_feedforward
NUM_CLASSES = 5          # num_classes
NUM_LAYERS = 2           # num_layers
MAX_SEQ_LEN = 16         # max_seq_len
LN_EPS = 1e-5
LOGIT_PAD = 128          # lane-dense padded logits width (sliced to 5 outside)
GELU_C = 0.7978845608028654  # sqrt(2/pi)


# ------------------------------ shared math ------------------------------
def _gelu_tanh(x):
    # TODO(synk): PyTorch nn.GELU() default is the exact erf form; the tanh
    # approximation (|diff| < ~3e-3) avoids relying on an erf lowering.
    return 0.5 * x * (1.0 + jnp.tanh(GELU_C * (x + 0.044715 * x ** 3)))


def _layernorm_1pass(x, gamma, beta):
    # single-pass LN: E[x] and E[x^2] are independent reductions -> shorter XLU chain
    mu = jnp.mean(x, axis=-1, keepdims=True)
    ms = jnp.mean(x * x, axis=-1, keepdims=True)
    var = ms - mu * mu
    return (x - mu) * jax.lax.rsqrt(var + LN_EPS) * gamma + beta


# --------------------------- fused Pallas kernel ---------------------------
def fused_forward_kernel(ids_ref, tok_ref, pos_ref,
                         wqkv_ref, bqkv_ref, wo_ref, bo_ref,
                         ln1_g_ref, ln1_b_ref, w1_ref, b1_ref,
                         w2_ref, b2_ref, ln2_g_ref, ln2_b_ref,
                         fc1_wc_ref, fc1_wp_ref, fc1_b_ref,
                         fc2_w_ref, fc2_b_ref,
                         o_ref, *, seq_len):
    S = seq_len
    BS = ids_ref.shape[0]                 # batch-tile * seq_len
    B = BS // S
    E, H, D = EMBED_DIM, NUM_HEADS, HEAD_DIM

    # ---- token embedding as a one-hot MXU gather + positional add (in-kernel) ----
    ids = ids_ref[...]                                            # (BS, 1) int32
    vocab_iota = jax.lax.broadcasted_iota(jnp.int32, (BS, VOCAB_SIZE), 1)
    onehot = (vocab_iota == ids).astype(tok_ref.dtype)            # (BS, V) bf16
    x = jnp.dot(onehot, tok_ref[...], preferred_element_type=jnp.float32)
    pos = pos_ref[0:S, :]                                         # (S, E) f32, static
    x = (x.reshape(B, S, E) + pos[None, :, :]).reshape(BS, E)     # (BS, E) f32

    # -------- encoder layers, statically unrolled (NUM_LAYERS=2) --------
    for l in range(NUM_LAYERS):
        # fused QKV projection (1/sqrt(head_dim) pre-folded into the Q columns)
        qkv = jnp.dot(x.astype(jnp.bfloat16), wqkv_ref[l],
                      preferred_element_type=jnp.float32) + bqkv_ref[l]
        qkv16 = qkv.astype(jnp.bfloat16)
        q3 = qkv16[:, 0 * E:1 * E].reshape(B, S, E)
        k3 = qkv16[:, 1 * E:2 * E].reshape(B, S, E)
        v3 = qkv16[:, 2 * E:3 * E].reshape(B, S, E)

        # head-batched (H*B, S, D) layout via static lane slices + leading concat
        qh = jnp.concatenate([q3[:, :, h * D:(h + 1) * D] for h in range(H)], axis=0)
        kh = jnp.concatenate([k3[:, :, h * D:(h + 1) * D] for h in range(H)], axis=0)
        vh = jnp.concatenate([v3[:, :, h * D:(h + 1) * D] for h in range(H)], axis=0)

        # ONE batched score einsum + ONE softmax + ONE PV einsum
        s = jnp.einsum('bqd,bkd->bqk', qh, kh,
                       preferred_element_type=jnp.float32)        # (H*B, S, S)
        m = jnp.max(s, axis=-1, keepdims=True)
        e = jnp.exp(s - m)
        p = e * pl.reciprocal(jnp.sum(e, axis=-1, keepdims=True), approx=True)
        oh = jnp.einsum('bqk,bkd->bqd', p.astype(jnp.bfloat16), vh,
                        preferred_element_type=jnp.float32)       # (H*B, S, D)

        # lay heads back into 128 lanes, then ONE K=E output-projection dot
        oh16 = oh.astype(jnp.bfloat16)
        o_cat = jnp.concatenate([oh16[h * B:(h + 1) * B] for h in range(H)],
                                axis=-1).reshape(BS, E)
        attn = jnp.dot(o_cat, wo_ref[l],
                       preferred_element_type=jnp.float32) + bo_ref[l]

        # post-norm residual blocks (dropout = identity at inference)
        x1 = _layernorm_1pass(x + attn, ln1_g_ref[l], ln1_b_ref[l])
        hdn = jnp.maximum(
            jnp.dot(x1.astype(jnp.bfloat16), w1_ref[l],
                    preferred_element_type=jnp.float32) + b1_ref[l], 0.0)
        ff = jnp.dot(hdn.astype(jnp.bfloat16), w2_ref[l],
                     preferred_element_type=jnp.float32) + b2_ref[l]
        x = _layernorm_1pass(x1 + ff, ln2_g_ref[l], ln2_b_ref[l])

    # ---- classifier head: fc1 over [cls, max-pool] as two lane-dense K=128 dots ----
    x3 = x.reshape(B, S, E)
    cls_tok = x3[:, 0, :]                                         # x[:, 0, :]
    pooled = jnp.max(x3, axis=1)                                  # torch.max(x, dim=1).values
    h1 = (jnp.dot(cls_tok.astype(jnp.bfloat16), fc1_wc_ref[...],
                  preferred_element_type=jnp.float32)
          + jnp.dot(pooled.astype(jnp.bfloat16), fc1_wp_ref[...],
                    preferred_element_type=jnp.float32)
          + fc1_b_ref[...])
    h1 = _gelu_tanh(h1)
    # fc2 zero-padded to 128 lanes -> lane-dense (B, 128) store
    out = jnp.dot(h1.astype(jnp.bfloat16), fc2_w_ref[...],
                  preferred_element_type=jnp.float32) + fc2_b_ref[...]
    o_ref[...] = out.astype(o_ref.dtype)


# ------------------------------ pallas_call glue ------------------------------
_WEIGHT_ORDER = ('tok_emb', 'pos_emb', 'wqkv', 'bqkv', 'wo', 'bo',
                 'ln1_g', 'ln1_b', 'w1', 'b1', 'w2', 'b2', 'ln2_g', 'ln2_b',
                 'fc1_wc', 'fc1_wp', 'fc1_b', 'fc2_w', 'fc2_b')


def _const_spec(shape):
    zeros = (0,) * len(shape)
    return pl.BlockSpec(tuple(shape), lambda i: zeros)   # whole array, every step


@jax.jit
def forward(input_ids, kp):
    B, S = input_ids.shape
    ids2d = input_ids.reshape(B * S, 1).astype(jnp.int32)

    # batch grid: 1 step at this size; at serving batch sizes the "parallel"
    # semantics shard batch tiles across v7x's two TensorCores.
    TB = B if B <= 8 else 8
    assert B % TB == 0, "batch must be divisible by the batch tile"
    grid = (B // TB,)

    weights = [kp[name] for name in _WEIGHT_ORDER]
    in_specs = ([pl.BlockSpec((TB * S, 1), lambda i: (i, 0))]
                + [_const_spec(w.shape) for w in weights])
    out_spec = pl.BlockSpec((TB, LOGIT_PAD), lambda i: (i, 0))

    flops = (2 * B * S * (VOCAB_SIZE * EMBED_DIM
                          + NUM_LAYERS * (4 * EMBED_DIM * EMBED_DIM
                                          + 2 * EMBED_DIM * HIDDEN_DIM
                                          + 2 * S * EMBED_DIM))
             + 2 * B * (2 * EMBED_DIM * HIDDEN_DIM + HIDDEN_DIM * LOGIT_PAD))
    transcendentals = NUM_LAYERS * NUM_HEADS * B * S * S + B * HIDDEN_DIM
    bytes_accessed = (sum(int(np.prod(w.shape)) * w.dtype.itemsize for w in weights)
                      + int(ids2d.size) * 4 + B * LOGIT_PAD * 4)

    padded = pl.pallas_call(
        functools.partial(fused_forward_kernel, seq_len=S),
        grid=grid,
        in_specs=in_specs,
        out_specs=out_spec,
        out_shape=jax.ShapeDtypeStruct((B, LOGIT_PAD), jnp.float32),
        compiler_params=pltpu.CompilerParams(dimension_semantics=("parallel",)),
        cost_estimate=pl.CostEstimate(flops=int(flops),
                                      transcendentals=int(transcendentals),
                                      bytes_accessed=int(bytes_accessed)),
    )(ids2d, *weights)
    return padded[:, :NUM_CLASSES]                        # drop lane padding


# ------------------------------ parameters ------------------------------
def init_params(key):
    """Master f32 weights in PyTorch-equivalent (in_features, out_features) layout."""
    def nrm(k, shape, scale=0.02):
        return scale * jax.random.normal(k, shape, dtype=jnp.float32)

    keys = iter(jax.random.split(key, 16))
    L, E, Hd = NUM_LAYERS, EMBED_DIM, HIDDEN_DIM
    return {
        'tok_emb': nrm(next(keys), (VOCAB_SIZE, E)),       # nn.Embedding
        'pos_emb': nrm(next(keys), (MAX_SEQ_LEN, E)),      # PositionalEmbedding
        'enc': {                                           # stacked per-layer weights
            'wqkv': nrm(next(keys), (L, E, 3 * E)),        # fused q|k|v in_proj
            'bqkv': nrm(next(keys), (L, 1, 3 * E)),
            'wo':   nrm(next(keys), (L, E, E)),
            'bo':   nrm(next(keys), (L, 1, E)),
            'ln1_g': jnp.ones((L, 1, E), jnp.float32),
            'ln1_b': jnp.zeros((L, 1, E), jnp.float32),
            'w1':   nrm(next(keys), (L, E, Hd)),
            'b1':   nrm(next(keys), (L, 1, Hd)),
            'w2':   nrm(next(keys), (L, Hd, E)),
            'b2':   nrm(next(keys), (L, 1, E)),
            'ln2_g': jnp.ones((L, 1, E), jnp.float32),
            'ln2_b': jnp.zeros((L, 1, E), jnp.float32),
        },
        'head': {
            'fc1_w': nrm(next(keys), (2 * E, Hd)),         # rows: [cls | pooled]
            'fc1_b': nrm(next(keys), (1, Hd)),
            'fc2_w': nrm(next(keys), (Hd, NUM_CLASSES)),
            'fc2_b': nrm(next(keys), (1, NUM_CLASSES)),
        },
    }


def prepare_kernel_params(params):
    """One-time weight prep: fold 1/sqrt(head_dim) into the Q columns, split fc1
    into [cls|pool] halves, zero-pad fc2 to 128 lanes, cast matmul weights to
    bf16 (MXU operands); biases / LN params / pos table stay f32."""
    enc, head = params['enc'], params['head']
    E, Hd = EMBED_DIM, HIDDEN_DIM
    scale = 1.0 / np.sqrt(HEAD_DIM)
    wqkv = enc['wqkv'].at[:, :, :E].multiply(scale)
    bqkv = enc['bqkv'].at[:, :, :E].multiply(scale)
    fc2_w_pad = jnp.zeros((Hd, LOGIT_PAD), jnp.float32).at[:, :NUM_CLASSES].set(head['fc2_w'])
    fc2_b_pad = jnp.zeros((1, LOGIT_PAD), jnp.float32).at[:, :NUM_CLASSES].set(head['fc2_b'])
    bf = lambda a: a.astype(jnp.bfloat16)
    return {
        'tok_emb': bf(params['tok_emb']),
        'pos_emb': params['pos_emb'],
        'wqkv': bf(wqkv), 'bqkv': bqkv,
        'wo': bf(enc['wo']), 'bo': enc['bo'],
        'ln1_g': enc['ln1_g'], 'ln1_b': enc['ln1_b'],
        'w1': bf(enc['w1']), 'b1': enc['b1'],
        'w2': bf(enc['w2']), 'b2': enc['b2'],
        'ln2_g': enc['ln2_g'], 'ln2_b': enc['ln2_b'],
        'fc1_wc': bf(head['fc1_w'][:E]),
        'fc1_wp': bf(head['fc1_w'][E:]),
        'fc1_b': head['fc1_b'],
        'fc2_w': bf(fc2_w_pad),
        'fc2_b': fc2_b_pad,
    }


# ------------------------------ pure-JAX reference ------------------------------
def _ln_ref(x, gamma, beta):
    mu = jnp.mean(x, axis=-1, keepdims=True)
    var = jnp.mean((x - mu) ** 2, axis=-1, keepdims=True)
    return (x - mu) * jax.lax.rsqrt(var + LN_EPS) * gamma + beta


def forward_ref(input_ids, params):
    """Pure-JAX f32 reference with PyTorch inference semantics, for validation."""
    B, S = input_ids.shape
    E, H, D = EMBED_DIM, NUM_HEADS, HEAD_DIM
    enc, head = params['enc'], params['head']
    x = jnp.take(params['tok_emb'], input_ids, axis=0) + params['pos_emb'][:S][None]
    x = x.reshape(B * S, E)
    for l in range(NUM_LAYERS):
        qkv = x @ enc['wqkv'][l] + enc['bqkv'][l]
        q = qkv[:, :E].reshape(B, S, E)
        k = qkv[:, E:2 * E].reshape(B, S, E)
        v = qkv[:, 2 * E:].reshape(B, S, E)
        heads = []
        for h in range(H):
            sl = slice(h * D, (h + 1) * D)
            s = jnp.einsum('bqd,bkd->bqk', q[..., sl], k[..., sl]) / np.sqrt(D)
            heads.append(jnp.einsum('bqk,bkd->bqd', jax.nn.softmax(s, axis=-1), v[..., sl]))
        attn = jnp.concatenate(heads, axis=-1).reshape(B * S, E) @ enc['wo'][l] + enc['bo'][l]
        x1 = _ln_ref(x + attn, enc['ln1_g'][l], enc['ln1_b'][l])
        ff = jnp.maximum(x1 @ enc['w1'][l] + enc['b1'][l], 0.0) @ enc['w2'][l] + enc['b2'][l]
        x = _ln_ref(x1 + ff, enc['ln2_g'][l], enc['ln2_b'][l])
    x = x.reshape(B, S, E)
    cat = jnp.concatenate([x[:, 0, :], jnp.max(x, axis=1)], axis=-1)
    h1 = _gelu_tanh(cat @ head['fc1_w'] + head['fc1_b'])
    return h1 @ head['fc2_w'] + head['fc2_b']


if __name__ == "__main__":
    key = jax.random.PRNGKey(0)
    pkey, ikey = jax.random.split(key)
    params = init_params(pkey)
    kparams = prepare_kernel_params(params)
    input_ids = jax.random.randint(ikey, (2, 8), 0, VOCAB_SIZE, dtype=jnp.int32)

    logits = forward(input_ids, kparams)
    logits = jax.block_until_ready(logits)
    assert logits.shape == (2, NUM_CLASSES)

    ref = forward_ref(input_ids, params)
    np.testing.assert_allclose(np.asarray(logits), np.asarray(ref),
                               rtol=1e-2, atol=1e-2)
    print("KERNEL_OK")
</pallas_src>

<mosaic_0001>
module attributes {stable_mosaic.version = 11 : i64} {
  func.func @fused_forward_kernel(%arg0: i32, %arg1: memref<16x1xi32, #tpu.memory_space<vmem>>, %arg2: memref<64x128xbf16, #tpu.memory_space<vmem>>, %arg3: memref<16x128xf32, #tpu.memory_space<vmem>>, %arg4: memref<2x128x384xbf16, #tpu.memory_space<vmem>>, %arg5: memref<2x1x384xf32, #tpu.memory_space<vmem>>, %arg6: memref<2x128x128xbf16, #tpu.memory_space<vmem>>, %arg7: memref<2x1x128xf32, #tpu.memory_space<vmem>>, %arg8: memref<2x1x128xf32, #tpu.memory_space<vmem>>, %arg9: memref<2x1x128xf32, #tpu.memory_space<vmem>>, %arg10: memref<2x128x128xbf16, #tpu.memory_space<vmem>>, %arg11: memref<2x1x128xf32, #tpu.memory_space<vmem>>, %arg12: memref<2x128x128xbf16, #tpu.memory_space<vmem>>, %arg13: memref<2x1x128xf32, #tpu.memory_space<vmem>>, %arg14: memref<2x1x128xf32, #tpu.memory_space<vmem>>, %arg15: memref<2x1x128xf32, #tpu.memory_space<vmem>>, %arg16: memref<128x128xbf16, #tpu.memory_space<vmem>>, %arg17: memref<128x128xbf16, #tpu.memory_space<vmem>>, %arg18: memref<1x128xf32, #tpu.memory_space<vmem>>, %arg19: memref<128x128xbf16, #tpu.memory_space<vmem>>, %arg20: memref<1x128xf32, #tpu.memory_space<vmem>>, %arg21: memref<2x128xf32, #tpu.memory_space<vmem>>) attributes {dimension_semantics = [#tpu.dimension_semantics<parallel>], iteration_bounds = array<i64: 1>, scalar_prefetch = 0 : i64, scratch_operands = 0 : i64, tpu.core_type = #tpu.core_type<tc>, window_params = [{transform_indices = @transform_0, window_bounds = array<i64: 16, 1>}, {pipeline_mode = #tpu.pipeline_mode<synchronous>, transform_indices = @transform_1, window_bounds = array<i64: 64, 128>}, {pipeline_mode = #tpu.pipeline_mode<synchronous>, transform_indices = @transform_2, window_bounds = array<i64: 16, 128>}, {pipeline_mode = #tpu.pipeline_mode<synchronous>, transform_indices = @transform_3, window_bounds = array<i64: 2, 128, 384>}, {pipeline_mode = #tpu.pipeline_mode<synchronous>, transform_indices = @transform_4, window_bounds = array<i64: 2, 1, 384>}, {pipeline_mode = #tpu.pipeline_mode<synchronous>, transform_indices = @transform_5, window_bounds = array<i64: 2, 128, 128>}, {pipeline_mode = #tpu.pipeline_mode<synchronous>, transform_indices = @transform_6, window_bounds = array<i64: 2, 1, 128>}, {pipeline_mode = #tpu.pipeline_mode<synchronous>, transform_indices = @transform_7, window_bounds = array<i64: 2, 1, 128>}, {pipeline_mode = #tpu.pipeline_mode<synchronous>, transform_indices = @transform_8, window_bounds = array<i64: 2, 1, 128>}, {pipeline_mode = #tpu.pipeline_mode<synchronous>, transform_indices = @transform_9, window_bounds = array<i64: 2, 128, 128>}, {pipeline_mode = #tpu.pipeline_mode<synchronous>, transform_indices = @transform_10, window_bounds = array<i64: 2, 1, 128>}, {pipeline_mode = #tpu.pipeline_mode<synchronous>, transform_indices = @transform_11, window_bounds = array<i64: 2, 128, 128>}, {pipeline_mode = #tpu.pipeline_mode<synchronous>, transform_indices = @transform_12, window_bounds = array<i64: 2, 1, 128>}, {pipeline_mode = #tpu.pipeline_mode<synchronous>, transform_indices = @transform_13, window_bounds = array<i64: 2, 1, 128>}, {pipeline_mode = #tpu.pipeline_mode<synchronous>, transform_indices = @transform_14, window_bounds = array<i64: 2, 1, 128>}, {pipeline_mode = #tpu.pipeline_mode<synchronous>, transform_indices = @transform_15, window_bounds = array<i64: 128, 128>}, {pipeline_mode = #tpu.pipeline_mode<synchronous>, transform_indices = @transform_16, window_bounds = array<i64: 128, 128>}, {pipeline_mode = #tpu.pipeline_mode<synchronous>, transform_indices = @transform_17, window_bounds = array<i64: 1, 128>}, {pipeline_mode = #tpu.pipeline_mode<synchronous>, transform_indices = @transform_18, window_bounds = array<i64: 128, 128>}, {pipeline_mode = #tpu.pipeline_mode<synchronous>, transform_indices = @transform_19, window_bounds = array<i64: 1, 128>}, {transform_indices = @transform_20, window_bounds = array<i64: 2, 128>}]} {
    %c0 = arith.constant 0 : index
    %c0_0 = arith.constant 0 : index
    %0 = vector.load %arg1[%c0, %c0_0] : memref<16x1xi32, #tpu.memory_space<vmem>>, vector<16x1xi32>
    %1 = tpu.iota {dimensions = array<i32: 1>} : vector<16x64xi32>
    %2 = vector.broadcast %0 : vector<16x1xi32> to vector<16x64xi32>
    %3 = arith.cmpi eq, %1, %2 : vector<16x64xi32>
    %4 = arith.extui %3 : vector<16x64xi1> to vector<16x64xi32>
    %5 = arith.sitofp %4 : vector<16x64xi32> to vector<16x64xf32>
    %6 = arith.truncf %5 : vector<16x64xf32> to vector<16x64xbf16>
    %c0_1 = arith.constant 0 : index
    %c0_2 = arith.constant 0 : index
    %7 = vector.load %arg2[%c0_1, %c0_2] : memref<64x128xbf16, #tpu.memory_space<vmem>>, vector<64x128xbf16>
    %cst = arith.constant dense<0.000000e+00> : vector<16x128xf32>
    %8 = tpu.matmul %6, %7, %cst {dimension_numbers = #tpu.dot_dimension_numbers<[1], [0], [0], [1], [0, 0, 1, 1], [], []>} : vector<16x64xbf16>, vector<64x128xbf16>, vector<16x128xf32> -> vector<16x128xf32>
    %c0_3 = arith.constant 0 : index
    %c0_4 = arith.constant 0 : index
    %9 = vector.load %arg3[%c0_3, %c0_4] : memref<16x128xf32, #tpu.memory_space<vmem>>, vector<8x128xf32>
    %10 = vector.shape_cast %8 : vector<16x128xf32> to vector<2x8x128xf32>
    %11 = vector.shape_cast %9 : vector<8x128xf32> to vector<1x8x128xf32>
    %12 = vector.broadcast %11 : vector<1x8x128xf32> to vector<2x8x128xf32>
    %13 = arith.addf %10, %12 : vector<2x8x128xf32>
    %14 = vector.shape_cast %13 : vector<2x8x128xf32> to vector<16x128xf32>
    %15 = arith.truncf %14 : vector<16x128xf32> to vector<16x128xbf16>
    %c0_5 = arith.constant 0 : index
    %c0_6 = arith.constant 0 : index
    %c0_7 = arith.constant 0 : index
    %16 = vector.load %arg4[%c0_5, %c0_6, %c0_7] : memref<2x128x384xbf16, #tpu.memory_space<vmem>>, vector<1x128x384xbf16>
    %17 = vector.shape_cast %16 : vector<1x128x384xbf16> to vector<128x384xbf16>
    %cst_8 = arith.constant dense<0.000000e+00> : vector<16x384xf32>
    %18 = tpu.matmul %15, %17, %cst_8 {dimension_numbers = #tpu.dot_dimension_numbers<[1], [0], [0], [1], [0, 0, 1, 1], [], []>} : vector<16x128xbf16>, vector<128x384xbf16>, vector<16x384xf32> -> vector<16x384xf32>
    %c0_9 = arith.constant 0 : index
    %c0_10 = arith.constant 0 : index
    %c0_11 = arith.constant 0 : index
    %19 = vector.load %arg5[%c0_9, %c0_10, %c0_11] : memref<2x1x384xf32, #tpu.memory_space<vmem>>, vector<1x1x384xf32>
    %20 = vector.shape_cast %19 : vector<1x1x384xf32> to vector<1x384xf32>
    %21 = vector.broadcast %20 : vector<1x384xf32> to vector<16x384xf32>
    %22 = arith.addf %18, %21 : vector<16x384xf32>
    %23 = arith.truncf %22 : vector<16x384xf32> to vector<16x384xbf16>
    %24 = vector.extract_strided_slice %23 {offsets = [0, 0], sizes = [16, 128], strides = [1, 1]} : vector<16x384xbf16> to vector<16x128xbf16>
    %25 = vector.shape_cast %24 : vector<16x128xbf16> to vector<2x8x128xbf16>
    %26 = vector.extract_strided_slice %23 {offsets = [0, 128], sizes = [16, 128], strides = [1, 1]} : vector<16x384xbf16> to vector<16x128xbf16>
    %27 = vector.shape_cast %26 : vector<16x128xbf16> to vector<2x8x128xbf16>
    %28 = vector.extract_strided_slice %23 {offsets = [0, 256], sizes = [16, 128], strides = [1, 1]} : vector<16x384xbf16> to vector<16x128xbf16>
    %29 = vector.shape_cast %28 : vector<16x128xbf16> to vector<2x8x128xbf16>
    %30 = vector.extract_strided_slice %25 {offsets = [0, 0, 0], sizes = [2, 8, 32], strides = [1, 1, 1]} : vector<2x8x128xbf16> to vector<2x8x32xbf16>
    %31 = vector.extract_strided_slice %25 {offsets = [0, 0, 32], sizes = [2, 8, 32], strides = [1, 1, 1]} : vector<2x8x128xbf16> to vector<2x8x32xbf16>
    %32 = vector.extract_strided_slice %25 {offsets = [0, 0, 64], sizes = [2, 8, 32], strides = [1, 1, 1]} : vector<2x8x128xbf16> to vector<2x8x32xbf16>
    %33 = vector.extract_strided_slice %25 {offsets = [0, 0, 96], sizes = [2, 8, 32], strides = [1, 1, 1]} : vector<2x8x128xbf16> to vector<2x8x32xbf16>
    %34 = tpu.concatenate %30, %31, %32, %33 in 0 : vector<2x8x32xbf16>, vector<2x8x32xbf16>, vector<2x8x32xbf16>, vector<2x8x32xbf16> -> vector<8x8x32xbf16>
    %35 = vector.extract_strided_slice %27 {offsets = [0, 0, 0], sizes = [2, 8, 32], strides = [1, 1, 1]} : vector<2x8x128xbf16> to vector<2x8x32xbf16>
    %36 = vector.extract_strided_slice %27 {offsets = [0, 0, 32], sizes = [2, 8, 32], strides = [1, 1, 1]} : vector<2x8x128xbf16> to vector<2x8x32xbf16>
    %37 = vector.extract_strided_slice %27 {offsets = [0, 0, 64], sizes = [2, 8, 32], strides = [1, 1, 1]} : vector<2x8x128xbf16> to vector<2x8x32xbf16>
    %38 = vector.extract_strided_slice %27 {offsets = [0, 0, 96], sizes = [2, 8, 32], strides = [1, 1, 1]} : vector<2x8x128xbf16> to vector<2x8x32xbf16>
    %39 = tpu.concatenate %35, %36, %37, %38 in 0 : vector<2x8x32xbf16>, vector<2x8x32xbf16>, vector<2x8x32xbf16>, vector<2x8x32xbf16> -> vector<8x8x32xbf16>
    %40 = vector.extract_strided_slice %29 {offsets = [0, 0, 0], sizes = [2, 8, 32], strides = [1, 1, 1]} : vector<2x8x128xbf16> to vector<2x8x32xbf16>
    %41 = vector.extract_strided_slice %29 {offsets = [0, 0, 32], sizes = [2, 8, 32], strides = [1, 1, 1]} : vector<2x8x128xbf16> to vector<2x8x32xbf16>
    %42 = vector.extract_strided_slice %29 {offsets = [0, 0, 64], sizes = [2, 8, 32], strides = [1, 1, 1]} : vector<2x8x128xbf16> to vector<2x8x32xbf16>
    %43 = vector.extract_strided_slice %29 {offsets = [0, 0, 96], sizes = [2, 8, 32], strides = [1, 1, 1]} : vector<2x8x128xbf16> to vector<2x8x32xbf16>
    %44 = tpu.concatenate %40, %41, %42, %43 in 0 : vector<2x8x32xbf16>, vector<2x8x32xbf16>, vector<2x8x32xbf16>, vector<2x8x32xbf16> -> vector<8x8x32xbf16>
    "tpu.trace_start"() <{level = 10 : i32, message = "bqd,bkd->bqk"}> : () -> ()
    %cst_12 = arith.constant dense<0.000000e+00> : vector<8x8x8xf32>
    %45 = tpu.matmul %34, %39, %cst_12 {dimension_numbers = #tpu.dot_dimension_numbers<[2], [2], [1], [1], [0, 0, 0, 1, 1, 1], [0], [0]>} : vector<8x8x32xbf16>, vector<8x8x32xbf16>, vector<8x8x8xf32> -> vector<8x8x8xf32>
    "tpu.trace_stop"() : () -> ()
    %cst_13 = arith.constant dense<0xFF800000> : vector<8x8xf32>
    %46 = vector.multi_reduction <maximumf>, %45, %cst_13 [2] : vector<8x8x8xf32> to vector<8x8xf32>
    %47 = vector.shape_cast %46 : vector<8x8xf32> to vector<8x8x1xf32>
    %48 = vector.broadcast %47 : vector<8x8x1xf32> to vector<8x8x8xf32>
    %49 = arith.subf %45, %48 : vector<8x8x8xf32>
    %50 = math.exp %49 : vector<8x8x8xf32>
    %cst_14 = arith.constant dense<0.000000e+00> : vector<8x8xf32>
    %51 = vector.multi_reduction <add>, %50, %cst_14 [2] : vector<8x8x8xf32> to vector<8x8xf32>
    %52 = vector.shape_cast %51 : vector<8x8xf32> to vector<8x8x1xf32>
    %53 = tpu.reciprocal %52 {approx = true} : vector<8x8x1xf32> -> vector<8x8x1xf32>
    %54 = vector.broadcast %53 : vector<8x8x1xf32> to vector<8x8x8xf32>
    %55 = arith.mulf %50, %54 : vector<8x8x8xf32>
    %56 = arith.truncf %55 : vector<8x8x8xf32> to vector<8x8x8xbf16>
    "tpu.trace_start"() <{level = 10 : i32, message = "bqk,bkd->bqd"}> : () -> ()
    %cst_15 = arith.constant dense<0.000000e+00> : vector<8x8x32xf32>
    %57 = tpu.matmul %56, %44, %cst_15 {dimension_numbers = #tpu.dot_dimension_numbers<[2], [1], [1], [2], [0, 0, 0, 1, 1, 2], [0], [0]>} : vector<8x8x8xbf16>, vector<8x8x32xbf16>, vector<8x8x32xf32> -> vector<8x8x32xf32>
    "tpu.trace_stop"() : () -> ()
    %58 = arith.truncf %57 : vector<8x8x32xf32> to vector<8x8x32xbf16>
    %59 = vector.extract_strided_slice %58 {offsets = [0, 0, 0], sizes = [2, 8, 32], strides = [1, 1, 1]} : vector<8x8x32xbf16> to vector<2x8x32xbf16>
    %60 = vector.extract_strided_slice %58 {offsets = [2, 0, 0], sizes = [2, 8, 32], strides = [1, 1, 1]} : vector<8x8x32xbf16> to vector<2x8x32xbf16>
    %61 = vector.extract_strided_slice %58 {offsets = [4, 0, 0], sizes = [2, 8, 32], strides = [1, 1, 1]} : vector<8x8x32xbf16> to vector<2x8x32xbf16>
    %62 = vector.extract_strided_slice %58 {offsets = [6, 0, 0], sizes = [2, 8, 32], strides = [1, 1, 1]} : vector<8x8x32xbf16> to vector<2x8x32xbf16>
    %63 = tpu.concatenate %59, %60, %61, %62 in 2 : vector<2x8x32xbf16>, vector<2x8x32xbf16>, vector<2x8x32xbf16>, vector<2x8x32xbf16> -> vector<2x8x128xbf16>
    %64 = vector.shape_cast %63 : vector<2x8x128xbf16> to vector<16x128xbf16>
    %c0_16 = arith.constant 0 : index
    %c0_17 = arith.constant 0 : index
    %c0_18 = arith.constant 0 : index
    %65 = vector.load %arg6[%c0_16, %c0_17, %c0_18] : memref<2x128x128xbf16, #tpu.memory_space<vmem>>, vector<1x128x128xbf16>
    %66 = vector.shape_cast %65 : vector<1x128x128xbf16> to vector<128x128xbf16>
    %cst_19 = arith.constant dense<0.000000e+00> : vector<16x128xf32>
    %67 = tpu.matmul %64, %66, %cst_19 {dimension_numbers = #tpu.dot_dimension_numbers<[1], [0], [0], [1], [0, 0, 1, 1], [], []>} : vector<16x128xbf16>, vector<128x128xbf16>, vector<16x128xf32> -> vector<16x128xf32>
    %c0_20 = arith.constant 0 : index
    %c0_21 = arith.constant 0 : index
    %c0_22 = arith.constant 0 : index
    %68 = vector.load %arg7[%c0_20, %c0_21, %c0_22] : memref<2x1x128xf32, #tpu.memory_space<vmem>>, vector<1x1x128xf32>
    %69 = vector.shape_cast %68 : vector<1x1x128xf32> to vector<1x128xf32>
    %70 = vector.broadcast %69 : vector<1x128xf32> to vector<16x128xf32>
    %71 = arith.addf %67, %70 : vector<16x128xf32>
    %72 = arith.addf %14, %71 : vector<16x128xf32>
    %c0_23 = arith.constant 0 : index
    %c0_24 = arith.constant 0 : index
    %c0_25 = arith.constant 0 : index
    %73 = vector.load %arg8[%c0_23, %c0_24, %c0_25] : memref<2x1x128xf32, #tpu.memory_space<vmem>>, vector<1x1x128xf32>
    %74 = vector.shape_cast %73 : vector<1x1x128xf32> to vector<1x128xf32>
    %c0_26 = arith.constant 0 : index
    %c0_27 = arith.constant 0 : index
    %c0_28 = arith.constant 0 : index
    %75 = vector.load %arg9[%c0_26, %c0_27, %c0_28] : memref<2x1x128xf32, #tpu.memory_space<vmem>>, vector<1x1x128xf32>
    %76 = vector.shape_cast %75 : vector<1x1x128xf32> to vector<1x128xf32>
    %cst_29 = arith.constant dense<0.000000e+00> : vector<16xf32>
    %77 = vector.multi_reduction <add>, %72, %cst_29 [1] : vector<16x128xf32> to vector<16xf32>
    %78 = vector.shape_cast %77 : vector<16xf32> to vector<16x1xf32>
    %cst_30 = arith.constant 1.280000e+02 : f32
    %79 = vector.broadcast %cst_30 : f32 to vector<16x1xf32>
    %80 = arith.divf %78, %79 : vector<16x1xf32>
    %81 = arith.mulf %72, %72 : vector<16x128xf32>
    %cst_31 = arith.constant dense<0.000000e+00> : vector<16xf32>
    %82 = vector.multi_reduction <add>, %81, %cst_31 [1] : vector<16x128xf32> to vector<16xf32>
    %83 = vector.shape_cast %82 : vector<16xf32> to vector<16x1xf32>
    %cst_32 = arith.constant 1.280000e+02 : f32
    %84 = vector.broadcast %cst_32 : f32 to vector<16x1xf32>
    %85 = arith.divf %83, %84 : vector<16x1xf32>
    %86 = arith.mulf %80, %80 : vector<16x1xf32>
    %87 = arith.subf %85, %86 : vector<16x1xf32>
    %88 = vector.broadcast %80 : vector<16x1xf32> to vector<16x128xf32>
    %89 = arith.subf %72, %88 : vector<16x128xf32>
    %cst_33 = arith.constant 9.99999974E-6 : f32
    %90 = vector.broadcast %cst_33 : f32 to vector<16x1xf32>
    %91 = arith.addf %87, %90 : vector<16x1xf32>
    %92 = math.rsqrt %91 : vector<16x1xf32>
    %93 = vector.broadcast %92 : vector<16x1xf32> to vector<16x128xf32>
    %94 = arith.mulf %89, %93 : vector<16x128xf32>
    %95 = vector.broadcast %74 : vector<1x128xf32> to vector<16x128xf32>
    %96 = arith.mulf %94, %95 : vector<16x128xf32>
    %97 = vector.broadcast %76 : vector<1x128xf32> to vector<16x128xf32>
    %98 = arith.addf %96, %97 : vector<16x128xf32>
    %99 = arith.truncf %98 : vector<16x128xf32> to vector<16x128xbf16>
    %c0_34 = arith.constant 0 : index
    %c0_35 = arith.constant 0 : index
    %c0_36 = arith.constant 0 : index
    %100 = vector.load %arg10[%c0_34, %c0_35, %c0_36] : memref<2x128x128xbf16, #tpu.memory_space<vmem>>, vector<1x128x128xbf16>
    %101 = vector.shape_cast %100 : vector<1x128x128xbf16> to vector<128x128xbf16>
    %cst_37 = arith.constant dense<0.000000e+00> : vector<16x128xf32>
    %102 = tpu.matmul %99, %101, %cst_37 {dimension_numbers = #tpu.dot_dimension_numbers<[1], [0], [0], [1], [0, 0, 1, 1], [], []>} : vector<16x128xbf16>, vector<128x128xbf16>, vector<16x128xf32> -> vector<16x128xf32>
    %c0_38 = arith.constant 0 : index
    %c0_39 = arith.constant 0 : index
    %c0_40 = arith.constant 0 : index
    %103 = vector.load %arg11[%c0_38, %c0_39, %c0_40] : memref<2x1x128xf32, #tpu.memory_space<vmem>>, vector<1x1x128xf32>
    %104 = vector.shape_cast %103 : vector<1x1x128xf32> to vector<1x128xf32>
    %105 = vector.broadcast %104 : vector<1x128xf32> to vector<16x128xf32>
    %106 = arith.addf %102, %105 : vector<16x128xf32>
    %cst_41 = arith.constant 0.000000e+00 : f32
    %107 = vector.broadcast %cst_41 : f32 to vector<16x128xf32>
    %108 = arith.maximumf %106, %107 : vector<16x128xf32>
    %109 = arith.truncf %108 : vector<16x128xf32> to vector<16x128xbf16>
    %c0_42 = arith.constant 0 : index
    %c0_43 = arith.constant 0 : index
    %c0_44 = arith.constant 0 : index
    %110 = vector.load %arg12[%c0_42, %c0_43, %c0_44] : memref<2x128x128xbf16, #tpu.memory_space<vmem>>, vector<1x128x128xbf16>
    %111 = vector.shape_cast %110 : vector<1x128x128xbf16> to vector<128x128xbf16>
    %cst_45 = arith.constant dense<0.000000e+00> : vector<16x128xf32>
    %112 = tpu.matmul %109, %111, %cst_45 {dimension_numbers = #tpu.dot_dimension_numbers<[1], [0], [0], [1], [0, 0, 1, 1], [], []>} : vector<16x128xbf16>, vector<128x128xbf16>, vector<16x128xf32> -> vector<16x128xf32>
    %c0_46 = arith.constant 0 : index
    %c0_47 = arith.constant 0 : index
    %c0_48 = arith.constant 0 : index
    %113 = vector.load %arg13[%c0_46, %c0_47, %c0_48] : memref<2x1x128xf32, #tpu.memory_space<vmem>>, vector<1x1x128xf32>
    %114 = vector.shape_cast %113 : vector<1x1x128xf32> to vector<1x128xf32>
    %115 = vector.broadcast %114 : vector<1x128xf32> to vector<16x128xf32>
    %116 = arith.addf %112, %115 : vector<16x128xf32>
    %117 = arith.addf %98, %116 : vector<16x128xf32>
    %c0_49 = arith.constant 0 : index
    %c0_50 = arith.constant 0 : index
    %c0_51 = arith.constant 0 : index
    %118 = vector.load %arg14[%c0_49, %c0_50, %c0_51] : memref<2x1x128xf32, #tpu.memory_space<vmem>>, vector<1x1x128xf32>
    %119 = vector.shape_cast %118 : vector<1x1x128xf32> to vector<1x128xf32>
    %c0_52 = arith.constant 0 : index
    %c0_53 = arith.constant 0 : index
    %c0_54 = arith.constant 0 : index
    %120 = vector.load %arg15[%c0_52, %c0_53, %c0_54] : memref<2x1x128xf32, #tpu.memory_space<vmem>>, vector<1x1x128xf32>
    %121 = vector.shape_cast %120 : vector<1x1x128xf32> to vector<1x128xf32>
    %cst_55 = arith.constant dense<0.000000e+00> : vector<16xf32>
    %122 = vector.multi_reduction <add>, %117, %cst_55 [1] : vector<16x128xf32> to vector<16xf32>
    %123 = vector.shape_cast %122 : vector<16xf32> to vector<16x1xf32>
    %cst_56 = arith.constant 1.280000e+02 : f32
    %124 = vector.broadcast %cst_56 : f32 to vector<16x1xf32>
    %125 = arith.divf %123, %124 : vector<16x1xf32>
    %126 = arith.mulf %117, %117 : vector<16x128xf32>
    %cst_57 = arith.constant dense<0.000000e+00> : vector<16xf32>
    %127 = vector.multi_reduction <add>, %126, %cst_57 [1] : vector<16x128xf32> to vector<16xf32>
    %128 = vector.shape_cast %127 : vector<16xf32> to vector<16x1xf32>
    %cst_58 = arith.constant 1.280000e+02 : f32
    %129 = vector.broadcast %cst_58 : f32 to vector<16x1xf32>
    %130 = arith.divf %128, %129 : vector<16x1xf32>
    %131 = arith.mulf %125, %125 : vector<16x1xf32>
    %132 = arith.subf %130, %131 : vector<16x1xf32>
    %133 = vector.broadcast %125 : vector<16x1xf32> to vector<16x128xf32>
    %134 = arith.subf %117, %133 : vector<16x128xf32>
    %cst_59 = arith.constant 9.99999974E-6 : f32
    %135 = vector.broadcast %cst_59 : f32 to vector<16x1xf32>
    %136 = arith.addf %132, %135 : vector<16x1xf32>
    %137 = math.rsqrt %136 : vector<16x1xf32>
    %138 = vector.broadcast %137 : vector<16x1xf32> to vector<16x128xf32>
    %139 = arith.mulf %134, %138 : vector<16x128xf32>
    %140 = vector.broadcast %119 : vector<1x128xf32> to vector<16x128xf32>
    %141 = arith.mulf %139, %140 : vector<16x128xf32>
    %142 = vector.broadcast %121 : vector<1x128xf32> to vector<16x128xf32>
    %143 = arith.addf %141, %142 : vector<16x128xf32>
    %144 = arith.truncf %143 : vector<16x128xf32> to vector<16x128xbf16>
    %c1 = arith.constant 1 : index
    %c0_60 = arith.constant 0 : index
    %c0_61 = arith.constant 0 : index
    %145 = vector.load %arg4[%c1, %c0_60, %c0_61] : memref<2x128x384xbf16, #tpu.memory_space<vmem>>, vector<1x128x384xbf16>
    %146 = vector.shape_cast %145 : vector<1x128x384xbf16> to vector<128x384xbf16>
    %cst_62 = arith.constant dense<0.000000e+00> : vector<16x384xf32>
    %147 = tpu.matmul %144, %146, %cst_62 {dimension_numbers = #tpu.dot_dimension_numbers<[1], [0], [0], [1], [0, 0, 1, 1], [], []>} : vector<16x128xbf16>, vector<128x384xbf16>, vector<16x384xf32> -> vector<16x384xf32>
    %c1_63 = arith.constant 1 : index
    %c0_64 = arith.constant 0 : index
    %c0_65 = arith.constant 0 : index
    %148 = vector.load %arg5[%c1_63, %c0_64, %c0_65] : memref<2x1x384xf32, #tpu.memory_space<vmem>>, vector<1x1x384xf32>
    %149 = vector.shape_cast %148 : vector<1x1x384xf32> to vector<1x384xf32>
    %150 = vector.broadcast %149 : vector<1x384xf32> to vector<16x384xf32>
    %151 = arith.addf %147, %150 : vector<16x384xf32>
    %152 = arith.truncf %151 : vector<16x384xf32> to vector<16x384xbf16>
    %153 = vector.extract_strided_slice %152 {offsets = [0, 0], sizes = [16, 128], strides = [1, 1]} : vector<16x384xbf16> to vector<16x128xbf16>
    %154 = vector.shape_cast %153 : vector<16x128xbf16> to vector<2x8x128xbf16>
    %155 = vector.extract_strided_slice %152 {offsets = [0, 128], sizes = [16, 128], strides = [1, 1]} : vector<16x384xbf16> to vector<16x128xbf16>
    %156 = vector.shape_cast %155 : vector<16x128xbf16> to vector<2x8x128xbf16>
    %157 = vector.extract_strided_slice %152 {offsets = [0, 256], sizes = [16, 128], strides = [1, 1]} : vector<16x384xbf16> to vector<16x128xbf16>
    %158 = vector.shape_cast %157 : vector<16x128xbf16> to vector<2x8x128xbf16>
    %159 = vector.extract_strided_slice %154 {offsets = [0, 0, 0], sizes = [2, 8, 32], strides = [1, 1, 1]} : vector<2x8x128xbf16> to vector<2x8x32xbf16>
    %160 = vector.extract_strided_slice %154 {offsets = [0, 0, 32], sizes = [2, 8, 32], strides = [1, 1, 1]} : vector<2x8x128xbf16> to vector<2x8x32xbf16>
    %161 = vector.extract_strided_slice %154 {offsets = [0, 0, 64], sizes = [2, 8, 32], strides = [1, 1, 1]} : vector<2x8x128xbf16> to vector<2x8x32xbf16>
    %162 = vector.extract_strided_slice %154 {offsets = [0, 0, 96], sizes = [2, 8, 32], strides = [1, 1, 1]} : vector<2x8x128xbf16> to vector<2x8x32xbf16>
    %163 = tpu.concatenate %159, %160, %161, %162 in 0 : vector<2x8x32xbf16>, vector<2x8x32xbf16>, vector<2x8x32xbf16>, vector<2x8x32xbf16> -> vector<8x8x32xbf16>
    %164 = vector.extract_strided_slice %156 {offsets = [0, 0, 0], sizes = [2, 8, 32], strides = [1, 1, 1]} : vector<2x8x128xbf16> to vector<2x8x32xbf16>
    %165 = vector.extract_strided_slice %156 {offsets = [0, 0, 32], sizes = [2, 8, 32], strides = [1, 1, 1]} : vector<2x8x128xbf16> to vector<2x8x32xbf16>
    %166 = vector.extract_strided_slice %156 {offsets = [0, 0, 64], sizes = [2, 8, 32], strides = [1, 1, 1]} : vector<2x8x128xbf16> to vector<2x8x32xbf16>
    %167 = vector.extract_strided_slice %156 {offsets = [0, 0, 96], sizes = [2, 8, 32], strides = [1, 1, 1]} : vector<2x8x128xbf16> to vector<2x8x32xbf16>
    %168 = tpu.concatenate %164, %165, %166, %167 in 0 : vector<2x8x32xbf16>, vector<2x8x32xbf16>, vector<2x8x32xbf16>, vector<2x8x32xbf16> -> vector<8x8x32xbf16>
    %169 = vector.extract_strided_slice %158 {offsets = [0, 0, 0], sizes = [2, 8, 32], strides = [1, 1, 1]} : vector<2x8x128xbf16> to vector<2x8x32xbf16>
    %170 = vector.extract_strided_slice %158 {offsets = [0, 0, 32], sizes = [2, 8, 32], strides = [1, 1, 1]} : vector<2x8x128xbf16> to vector<2x8x32xbf16>
    %171 = vector.extract_strided_slice %158 {offsets = [0, 0, 64], sizes = [2, 8, 32], strides = [1, 1, 1]} : vector<2x8x128xbf16> to vector<2x8x32xbf16>
    %172 = vector.extract_strided_slice %158 {offsets = [0, 0, 96], sizes = [2, 8, 32], strides = [1, 1, 1]} : vector<2x8x128xbf16> to vector<2x8x32xbf16>
    %173 = tpu.concatenate %169, %170, %171, %172 in 0 : vector<2x8x32xbf16>, vector<2x8x32xbf16>, vector<2x8x32xbf16>, vector<2x8x32xbf16> -> vector<8x8x32xbf16>
    "tpu.trace_start"() <{level = 10 : i32, message = "bqd,bkd->bqk"}> : () -> ()
    %cst_66 = arith.constant dense<0.000000e+00> : vector<8x8x8xf32>
    %174 = tpu.matmul %163, %168, %cst_66 {dimension_numbers = #tpu.dot_dimension_numbers<[2], [2], [1], [1], [0, 0, 0, 1, 1, 1], [0], [0]>} : vector<8x8x32xbf16>, vector<8x8x32xbf16>, vector<8x8x8xf32> -> vector<8x8x8xf32>
    "tpu.trace_stop"() : () -> ()
    %cst_67 = arith.constant dense<0xFF800000> : vector<8x8xf32>
    %175 = vector.multi_reduction <maximumf>, %174, %cst_67 [2] : vector<8x8x8xf32> to vector<8x8xf32>
    %176 = vector.shape_cast %175 : vector<8x8xf32> to vector<8x8x1xf32>
    %177 = vector.broadcast %176 : vector<8x8x1xf32> to vector<8x8x8xf32>
    %178 = arith.subf %174, %177 : vector<8x8x8xf32>
    %179 = math.exp %178 : vector<8x8x8xf32>
    %cst_68 = arith.constant dense<0.000000e+00> : vector<8x8xf32>
    %180 = vector.multi_reduction <add>, %179, %cst_68 [2] : vector<8x8x8xf32> to vector<8x8xf32>
    %181 = vector.shape_cast %180 : vector<8x8xf32> to vector<8x8x1xf32>
    %182 = tpu.reciprocal %181 {approx = true} : vector<8x8x1xf32> -> vector<8x8x1xf32>
    %183 = vector.broadcast %182 : vector<8x8x1xf32> to vector<8x8x8xf32>
    %184 = arith.mulf %179, %183 : vector<8x8x8xf32>
    %185 = arith.truncf %184 : vector<8x8x8xf32> to vector<8x8x8xbf16>
    "tpu.trace_start"() <{level = 10 : i32, message = "bqk,bkd->bqd"}> : () -> ()
    %cst_69 = arith.constant dense<0.000000e+00> : vector<8x8x32xf32>
    %186 = tpu.matmul %185, %173, %cst_69 {dimension_numbers = #tpu.dot_dimension_numbers<[2], [1], [1], [2], [0, 0, 0, 1, 1, 2], [0], [0]>} : vector<8x8x8xbf16>, vector<8x8x32xbf16>, vector<8x8x32xf32> -> vector<8x8x32xf32>
    "tpu.trace_stop"() : () -> ()
    %187 = arith.truncf %186 : vector<8x8x32xf32> to vector<8x8x32xbf16>
    %188 = vector.extract_strided_slice %187 {offsets = [0, 0, 0], sizes = [2, 8, 32], strides = [1, 1, 1]} : vector<8x8x32xbf16> to vector<2x8x32xbf16>
    %189 = vector.extract_strided_slice %187 {offsets = [2, 0, 0], sizes = [2, 8, 32], strides = [1, 1, 1]} : vector<8x8x32xbf16> to vector<2x8x32xbf16>
    %190 = vector.extract_strided_slice %187 {offsets = [4, 0, 0], sizes = [2, 8, 32], strides = [1, 1, 1]} : vector<8x8x32xbf16> to vector<2x8x32xbf16>
    %191 = vector.extract_strided_slice %187 {offsets = [6, 0, 0], sizes = [2, 8, 32], strides = [1, 1, 1]} : vector<8x8x32xbf16> to vector<2x8x32xbf16>
    %192 = tpu.concatenate %188, %189, %190, %191 in 2 : vector<2x8x32xbf16>, vector<2x8x32xbf16>, vector<2x8x32xbf16>, vector<2x8x32xbf16> -> vector<2x8x128xbf16>
    %193 = vector.shape_cast %192 : vector<2x8x128xbf16> to vector<16x128xbf16>
    %c1_70 = arith.constant 1 : index
    %c0_71 = arith.constant 0 : index
    %c0_72 = arith.constant 0 : index
    %194 = vector.load %arg6[%c1_70, %c0_71, %c0_72] : memref<2x128x128xbf16, #tpu.memory_space<vmem>>, vector<1x128x128xbf16>
    %195 = vector.shape_cast %194 : vector<1x128x128xbf16> to vector<128x128xbf16>
    %cst_73 = arith.constant dense<0.000000e+00> : vector<16x128xf32>
    %196 = tpu.matmul %193, %195, %cst_73 {dimension_numbers = #tpu.dot_dimension_numbers<[1], [0], [0], [1], [0, 0, 1, 1], [], []>} : vector<16x128xbf16>, vector<128x128xbf16>, vector<16x128xf32> -> vector<16x128xf32>
    %c1_74 = arith.constant 1 : index
    %c0_75 = arith.constant 0 : index
    %c0_76 = arith.constant 0 : index
    %197 = vector.load %arg7[%c1_74, %c0_75, %c0_76] : memref<2x1x128xf32, #tpu.memory_space<vmem>>, vector<1x1x128xf32>
    %198 = vector.shape_cast %197 : vector<1x1x128xf32> to vector<1x128xf32>
    %199 = vector.broadcast %198 : vector<1x128xf32> to vector<16x128xf32>
    %200 = arith.addf %196, %199 : vector<16x128xf32>
    %201 = arith.addf %143, %200 : vector<16x128xf32>
    %c1_77 = arith.constant 1 : index
    %c0_78 = arith.constant 0 : index
    %c0_79 = arith.constant 0 : index
    %202 = vector.load %arg8[%c1_77, %c0_78, %c0_79] : memref<2x1x128xf32, #tpu.memory_space<vmem>>, vector<1x1x128xf32>
    %203 = vector.shape_cast %202 : vector<1x1x128xf32> to vector<1x128xf32>
    %c1_80 = arith.constant 1 : index
    %c0_81 = arith.constant 0 : index
    %c0_82 = arith.constant 0 : index
    %204 = vector.load %arg9[%c1_80, %c0_81, %c0_82] : memref<2x1x128xf32, #tpu.memory_space<vmem>>, vector<1x1x128xf32>
    %205 = vector.shape_cast %204 : vector<1x1x128xf32> to vector<1x128xf32>
    %cst_83 = arith.constant dense<0.000000e+00> : vector<16xf32>
    %206 = vector.multi_reduction <add>, %201, %cst_83 [1] : vector<16x128xf32> to vector<16xf32>
    %207 = vector.shape_cast %206 : vector<16xf32> to vector<16x1xf32>
    %cst_84 = arith.constant 1.280000e+02 : f32
    %208 = vector.broadcast %cst_84 : f32 to vector<16x1xf32>
    %209 = arith.divf %207, %208 : vector<16x1xf32>
    %210 = arith.mulf %201, %201 : vector<16x128xf32>
    %cst_85 = arith.constant dense<0.000000e+00> : vector<16xf32>
    %211 = vector.multi_reduction <add>, %210, %cst_85 [1] : vector<16x128xf32> to vector<16xf32>
    %212 = vector.shape_cast %211 : vector<16xf32> to vector<16x1xf32>
    %cst_86 = arith.constant 1.280000e+02 : f32
    %213 = vector.broadcast %cst_86 : f32 to vector<16x1xf32>
    %214 = arith.divf %212, %213 : vector<16x1xf32>
    %215 = arith.mulf %209, %209 : vector<16x1xf32>
    %216 = arith.subf %214, %215 : vector<16x1xf32>
    %217 = vector.broadcast %209 : vector<16x1xf32> to vector<16x128xf32>
    %218 = arith.subf %201, %217 : vector<16x128xf32>
    %cst_87 = arith.constant 9.99999974E-6 : f32
    %219 = vector.broadcast %cst_87 : f32 to vector<16x1xf32>
    %220 = arith.addf %216, %219 : vector<16x1xf32>
    %221 = math.rsqrt %220 : vector<16x1xf32>
    %222 = vector.broadcast %221 : vector<16x1xf32> to vector<16x128xf32>
    %223 = arith.mulf %218, %222 : vector<16x128xf32>
    %224 = vector.broadcast %203 : vector<1x128xf32> to vector<16x128xf32>
    %225 = arith.mulf %223, %224 : vector<16x128xf32>
    %226 = vector.broadcast %205 : vector<1x128xf32> to vector<16x128xf32>
    %227 = arith.addf %225, %226 : vector<16x128xf32>
    %228 = arith.truncf %227 : vector<16x128xf32> to vector<16x128xbf16>
    %c1_88 = arith.constant 1 : index
    %c0_89 = arith.constant 0 : index
    %c0_90 = arith.constant 0 : index
    %229 = vector.load %arg10[%c1_88, %c0_89, %c0_90] : memref<2x128x128xbf16, #tpu.memory_space<vmem>>, vector<1x128x128xbf16>
    %230 = vector.shape_cast %229 : vector<1x128x128xbf16> to vector<128x128xbf16>
    %cst_91 = arith.constant dense<0.000000e+00> : vector<16x128xf32>
    %231 = tpu.matmul %228, %230, %cst_91 {dimension_numbers = #tpu.dot_dimension_numbers<[1], [0], [0], [1], [0, 0, 1, 1], [], []>} : vector<16x128xbf16>, vector<128x128xbf16>, vector<16x128xf32> -> vector<16x128xf32>
    %c1_92 = arith.constant 1 : index
    %c0_93 = arith.constant 0 : index
    %c0_94 = arith.constant 0 : index
    %232 = vector.load %arg11[%c1_92, %c0_93, %c0_94] : memref<2x1x128xf32, #tpu.memory_space<vmem>>, vector<1x1x128xf32>
    %233 = vector.shape_cast %232 : vector<1x1x128xf32> to vector<1x128xf32>
    %234 = vector.broadcast %233 : vector<1x128xf32> to vector<16x128xf32>
    %235 = arith.addf %231, %234 : vector<16x128xf32>
    %cst_95 = arith.constant 0.000000e+00 : f32
    %236 = vector.broadcast %cst_95 : f32 to vector<16x128xf32>
    %237 = arith.maximumf %235, %236 : vector<16x128xf32>
    %238 = arith.truncf %237 : vector<16x128xf32> to vector<16x128xbf16>
    %c1_96 = arith.constant 1 : index
    %c0_97 = arith.constant 0 : index
    %c0_98 = arith.constant 0 : index
    %239 = vector.load %arg12[%c1_96, %c0_97, %c0_98] : memref<2x128x128xbf16, #tpu.memory_space<vmem>>, vector<1x128x128xbf16>
    %240 = vector.shape_cast %239 : vector<1x128x128xbf16> to vector<128x128xbf16>
    %cst_99 = arith.constant dense<0.000000e+00> : vector<16x128xf32>
    %241 = tpu.matmul %238, %240, %cst_99 {dimension_numbers = #tpu.dot_dimension_numbers<[1], [0], [0], [1], [0, 0, 1, 1], [], []>} : vector<16x128xbf16>, vector<128x128xbf16>, vector<16x128xf32> -> vector<16x128xf32>
    %c1_100 = arith.constant 1 : index
    %c0_101 = arith.constant 0 : index
    %c0_102 = arith.constant 0 : index
    %242 = vector.load %arg13[%c1_100, %c0_101, %c0_102] : memref<2x1x128xf32, #tpu.memory_space<vmem>>, vector<1x1x128xf32>
    %243 = vector.shape_cast %242 : vector<1x1x128xf32> to vector<1x128xf32>
    %244 = vector.broadcast %243 : vector<1x128xf32> to vector<16x128xf32>
    %245 = arith.addf %241, %244 : vector<16x128xf32>
    %246 = arith.addf %227, %245 : vector<16x128xf32>
    %c1_103 = arith.constant 1 : index
    %c0_104 = arith.constant 0 : index
    %c0_105 = arith.constant 0 : index
    %247 = vector.load %arg14[%c1_103, %c0_104, %c0_105] : memref<2x1x128xf32, #tpu.memory_space<vmem>>, vector<1x1x128xf32>
    %248 = vector.shape_cast %247 : vector<1x1x128xf32> to vector<1x128xf32>
    %c1_106 = arith.constant 1 : index
    %c0_107 = arith.constant 0 : index
    %c0_108 = arith.constant 0 : index
    %249 = vector.load %arg15[%c1_106, %c0_107, %c0_108] : memref<2x1x128xf32, #tpu.memory_space<vmem>>, vector<1x1x128xf32>
    %250 = vector.shape_cast %249 : vector<1x1x128xf32> to vector<1x128xf32>
    %cst_109 = arith.constant dense<0.000000e+00> : vector<16xf32>
    %251 = vector.multi_reduction <add>, %246, %cst_109 [1] : vector<16x128xf32> to vector<16xf32>
    %252 = vector.shape_cast %251 : vector<16xf32> to vector<16x1xf32>
    %cst_110 = arith.constant 1.280000e+02 : f32
    %253 = vector.broadcast %cst_110 : f32 to vector<16x1xf32>
    %254 = arith.divf %252, %253 : vector<16x1xf32>
    %255 = arith.mulf %246, %246 : vector<16x128xf32>
    %cst_111 = arith.constant dense<0.000000e+00> : vector<16xf32>
    %256 = vector.multi_reduction <add>, %255, %cst_111 [1] : vector<16x128xf32> to vector<16xf32>
    %257 = vector.shape_cast %256 : vector<16xf32> to vector<16x1xf32>
    %cst_112 = arith.constant 1.280000e+02 : f32
    %258 = vector.broadcast %cst_112 : f32 to vector<16x1xf32>
    %259 = arith.divf %257, %258 : vector<16x1xf32>
    %260 = arith.mulf %254, %254 : vector<16x1xf32>
    %261 = arith.subf %259, %260 : vector<16x1xf32>
    %262 = vector.broadcast %254 : vector<16x1xf32> to vector<16x128xf32>
    %263 = arith.subf %246, %262 : vector<16x128xf32>
    %cst_113 = arith.constant 9.99999974E-6 : f32
    %264 = vector.broadcast %cst_113 : f32 to vector<16x1xf32>
    %265 = arith.addf %261, %264 : vector<16x1xf32>
    %266 = math.rsqrt %265 : vector<16x1xf32>
    %267 = vector.broadcast %266 : vector<16x1xf32> to vector<16x128xf32>
    %268 = arith.mulf %263, %267 : vector<16x128xf32>
    %269 = vector.broadcast %248 : vector<1x128xf32> to vector<16x128xf32>
    %270 = arith.mulf %268, %269 : vector<16x128xf32>
    %271 = vector.broadcast %250 : vector<1x128xf32> to vector<16x128xf32>
    %272 = arith.addf %270, %271 : vector<16x128xf32>
    %273 = vector.shape_cast %272 : vector<16x128xf32> to vector<2x8x128xf32>
    %274 = vector.extract_strided_slice %273 {offsets = [0, 0, 0], sizes = [2, 1, 128], strides = [1, 1, 1]} : vector<2x8x128xf32> to vector<2x1x128xf32>
    %275 = vector.shape_cast %274 : vector<2x1x128xf32> to vector<2x128xf32>
    %cst_114 = arith.constant dense<0xFF800000> : vector<2x128xf32>
    %276 = vector.multi_reduction <maximumf>, %273, %cst_114 [1] : vector<2x8x128xf32> to vector<2x128xf32>
    %277 = arith.truncf %275 : vector<2x128xf32> to vector<2x128xbf16>
    %c0_115 = arith.constant 0 : index
    %c0_116 = arith.constant 0 : index
    %278 = vector.load %arg16[%c0_115, %c0_116] : memref<128x128xbf16, #tpu.memory_space<vmem>>, vector<128x128xbf16>
    %cst_117 = arith.constant dense<0.000000e+00> : vector<2x128xf32>
    %279 = tpu.matmul %277, %278, %cst_117 {dimension_numbers = #tpu.dot_dimension_numbers<[1], [0], [0], [1], [0, 0, 1, 1], [], []>} : vector<2x128xbf16>, vector<128x128xbf16>, vector<2x128xf32> -> vector<2x128xf32>
    %280 = arith.truncf %276 : vector<2x128xf32> to vector<2x128xbf16>
    %c0_118 = arith.constant 0 : index
    %c0_119 = arith.constant 0 : index
    %281 = vector.load %arg17[%c0_118, %c0_119] : memref<128x128xbf16, #tpu.memory_space<vmem>>, vector<128x128xbf16>
    %cst_120 = arith.constant dense<0.000000e+00> : vector<2x128xf32>
    %282 = tpu.matmul %280, %281, %cst_120 {dimension_numbers = #tpu.dot_dimension_numbers<[1], [0], [0], [1], [0, 0, 1, 1], [], []>} : vector<2x128xbf16>, vector<128x128xbf16>, vector<2x128xf32> -> vector<2x128xf32>
    %283 = arith.addf %279, %282 : vector<2x128xf32>
    %c0_121 = arith.constant 0 : index
    %c0_122 = arith.constant 0 : index
    %284 = vector.load %arg18[%c0_121, %c0_122] : memref<1x128xf32, #tpu.memory_space<vmem>>, vector<1x128xf32>
    %285 = vector.broadcast %284 : vector<1x128xf32> to vector<2x128xf32>
    %286 = arith.addf %283, %285 : vector<2x128xf32>
    %cst_123 = arith.constant 5.000000e-01 : f32
    %287 = vector.broadcast %cst_123 : f32 to vector<2x128xf32>
    %288 = arith.mulf %287, %286 : vector<2x128xf32>
    %289 = arith.mulf %286, %286 : vector<2x128xf32>
    %290 = arith.mulf %286, %289 : vector<2x128xf32>
    %cst_124 = arith.constant 4.471500e-02 : f32
    %291 = vector.broadcast %cst_124 : f32 to vector<2x128xf32>
    %292 = arith.mulf %291, %290 : vector<2x128xf32>
    %293 = arith.addf %286, %292 : vector<2x128xf32>
    %cst_125 = arith.constant 0.797884583 : f32
    %294 = vector.broadcast %cst_125 : f32 to vector<2x128xf32>
    %295 = arith.mulf %294, %293 : vector<2x128xf32>
    %296 = math.tanh %295 : vector<2x128xf32>
    %cst_126 = arith.constant 1.000000e+00 : f32
    %297 = vector.broadcast %cst_126 : f32 to vector<2x128xf32>
    %298 = arith.addf %297, %296 : vector<2x128xf32>
    %299 = arith.mulf %288, %298 : vector<2x128xf32>
    %300 = arith.truncf %299 : vector<2x128xf32> to vector<2x128xbf16>
    %c0_127 = arith.constant 0 : index
    %c0_128 = arith.constant 0 : index
    %301 = vector.load %arg19[%c0_127, %c0_128] : memref<128x128xbf16, #tpu.memory_space<vmem>>, vector<128x128xbf16>
    %cst_129 = arith.constant dense<0.000000e+00> : vector<2x128xf32>
    %302 = tpu.matmul %300, %301, %cst_129 {dimension_numbers = #tpu.dot_dimension_numbers<[1], [0], [0], [1], [0, 0, 1, 1], [], []>} : vector<2x128xbf16>, vector<128x128xbf16>, vector<2x128xf32> -> vector<2x128xf32>
    %c0_130 = arith.constant 0 : index
    %c0_131 = arith.constant 0 : index
    %303 = vector.load %arg20[%c0_130, %c0_131] : memref<1x128xf32, #tpu.memory_space<vmem>>, vector<1x128xf32>
    %304 = vector.broadcast %303 : vector<1x128xf32> to vector<2x128xf32>
    %305 = arith.addf %302, %304 : vector<2x128xf32>
    %c0_132 = arith.constant 0 : index
    %c0_133 = arith.constant 0 : index
    %306 = vector.load %arg21[%c0_132, %c0_133] : memref<2x128xf32, #tpu.memory_space<vmem>>, vector<2x128xf32>
    tpu.vector_store %arg21[%c0_132, %c0_133], %305 {strides = array<i32>} : memref<2x128xf32, #tpu.memory_space<vmem>>, vector<2x128xf32>,
    return
  }
  func.func @transform_0(%arg0: i32) -> (i32, i32) {
    %c0_i32 = arith.constant 0 : i32
    %c0_i32_0 = arith.constant 0 : i32
    return %arg0, %c0_i32 : i32, i32
  }
  func.func @transform_1(%arg0: i32) -> (i32, i32) {
    %c0_i32 = arith.constant 0 : i32
    %c0_i32_0 = arith.constant 0 : i32
    %c0_i32_1 = arith.constant 0 : i32
    return %c0_i32, %c0_i32_0 : i32, i32
  }
  func.func @transform_2(%arg0: i32) -> (i32, i32) {
    %c0_i32 = arith.constant 0 : i32
    %c0_i32_0 = arith.constant 0 : i32
    %c0_i32_1 = arith.constant 0 : i32
    return %c0_i32, %c0_i32_0 : i32, i32
  }
  func.func @transform_3(%arg0: i32) -> (i32, i32, i32) {
    %c0_i32 = arith.constant 0 : i32
    %c0_i32_0 = arith.constant 0 : i32
    %c0_i32_1 = arith.constant 0 : i32
    %c0_i32_2 = arith.constant 0 : i32
    return %c0_i32, %c0_i32_0, %c0_i32_1 : i32, i32, i32
  }
  func.func @transform_4(%arg0: i32) -> (i32, i32, i32) {
    %c0_i32 = arith.constant 0 : i32
    %c0_i32_0 = arith.constant 0 : i32
    %c0_i32_1 = arith.constant 0 : i32
    %c0_i32_2 = arith.constant 0 : i32
    return %c0_i32, %c0_i32_0, %c0_i32_1 : i32, i32, i32
  }
  func.func @transform_5(%arg0: i32) -> (i32, i32, i32) {
    %c0_i32 = arith.constant 0 : i32
    %c0_i32_0 = arith.constant 0 : i32
    %c0_i32_1 = arith.constant 0 : i32
    %c0_i32_2 = arith.constant 0 : i32
    return %c0_i32, %c0_i32_0, %c0_i32_1 : i32, i32, i32
  }
  func.func @transform_6(%arg0: i32) -> (i32, i32, i32) {
    %c0_i32 = arith.constant 0 : i32
    %c0_i32_0 = arith.constant 0 : i32
    %c0_i32_1 = arith.constant 0 : i32
    %c0_i32_2 = arith.constant 0 : i32
    return %c0_i32, %c0_i32_0, %c0_i32_1 : i32, i32, i32
  }
  func.func @transform_7(%arg0: i32) -> (i32, i32, i32) {
    %c0_i32 = arith.constant 0 : i32
    %c0_i32_0 = arith.constant 0 : i32
    %c0_i32_1 = arith.constant 0 : i32
    %c0_i32_2 = arith.constant 0 : i32
    return %c0_i32, %c0_i32_0, %c0_i32_1 : i32, i32, i32
  }
  func.func @transform_8(%arg0: i32) -> (i32, i32, i32) {
    %c0_i32 = arith.constant 0 : i32
    %c0_i32_0 = arith.constant 0 : i32
    %c0_i32_1 = arith.constant 0 : i32
    %c0_i32_2 = arith.constant 0 : i32
    return %c0_i32, %c0_i32_0, %c0_i32_1 : i32, i32, i32
  }
  func.func @transform_9(%arg0: i32) -> (i32, i32, i32) {
    %c0_i32 = arith.constant 0 : i32
    %c0_i32_0 = arith.constant 0 : i32
    %c0_i32_1 = arith.constant 0 : i32
    %c0_i32_2 = arith.constant 0 : i32
    return %c0_i32, %c0_i32_0, %c0_i32_1 : i32, i32, i32
  }
  func.func @transform_10(%arg0: i32) -> (i32, i32, i32) {
    %c0_i32 = arith.constant 0 : i32
    %c0_i32_0 = arith.constant 0 : i32
    %c0_i32_1 = arith.constant 0 : i32
    %c0_i32_2 = arith.constant 0 : i32
    return %c0_i32, %c0_i32_0, %c0_i32_1 : i32, i32, i32
  }
  func.func @transform_11(%arg0: i32) -> (i32, i32, i32) {
    %c0_i32 = arith.constant 0 : i32
    %c0_i32_0 = arith.constant 0 : i32
    %c0_i32_1 = arith.constant 0 : i32
    %c0_i32_2 = arith.constant 0 : i32
    return %c0_i32, %c0_i32_0, %c0_i32_1 : i32, i32, i32
  }
  func.func @transform_12(%arg0: i32) -> (i32, i32, i32) {
    %c0_i32 = arith.constant 0 : i32
    %c0_i32_0 = arith.constant 0 : i32
    %c0_i32_1 = arith.constant 0 : i32
    %c0_i32_2 = arith.constant 0 : i32
    return %c0_i32, %c0_i32_0, %c0_i32_1 : i32, i32, i32
  }
  func.func @transform_13(%arg0: i32) -> (i32, i32, i32) {
    %c0_i32 = arith.constant 0 : i32
    %c0_i32_0 = arith.constant 0 : i32
    %c0_i32_1 = arith.constant 0 : i32
    %c0_i32_2 = arith.constant 0 : i32
    return %c0_i32, %c0_i32_0, %c0_i32_1 : i32, i32, i32
  }
  func.func @transform_14(%arg0: i32) -> (i32, i32, i32) {
    %c0_i32 = arith.constant 0 : i32
    %c0_i32_0 = arith.constant 0 : i32
    %c0_i32_1 = arith.constant 0 : i32
    %c0_i32_2 = arith.constant 0 : i32
    return %c0_i32, %c0_i32_0, %c0_i32_1 : i32, i32, i32
  }
  func.func @transform_15(%arg0: i32) -> (i32, i32) {
    %c0_i32 = arith.constant 0 : i32
    %c0_i32_0 = arith.constant 0 : i32
    %c0_i32_1 = arith.constant 0 : i32
    return %c0_i32, %c0_i32_0 : i32, i32
  }
  func.func @transform_16(%arg0: i32) -> (i32, i32) {
    %c0_i32 = arith.constant 0 : i32
    %c0_i32_0 = arith.constant 0 : i32
    %c0_i32_1 = arith.constant 0 : i32
    return %c0_i32, %c0_i32_0 : i32, i32
  }
  func.func @transform_17(%arg0: i32) -> (i32, i32) {
    %c0_i32 = arith.constant 0 : i32
    %c0_i32_0 = arith.constant 0 : i32
    %c0_i32_1 = arith.constant 0 : i32
    return %c0_i32, %c0_i32_0 : i32, i32
  }
  func.func @transform_18(%arg0: i32) -> (i32, i32) {
    %c0_i32 = arith.constant 0 : i32
    %c0_i32_0 = arith.constant 0 : i32
    %c0_i32_1 = arith.constant 0 : i32
    return %c0_i32, %c0_i32_0 : i32, i32
  }
  func.func @transform_19(%arg0: i32) -> (i32, i32) {
    %c0_i32 = arith.constant 0 : i32
    %c0_i32_0 = arith.constant 0 : i32
    %c0_i32_1 = arith.constant 0 : i32
    return %c0_i32, %c0_i32_0 : i32, i32
  }
  func.func @transform_20(%arg0: i32) -> (i32, i32) {
    %c0_i32 = arith.constant 0 : i32
    %c0_i32_0 = arith.constant 0 : i32
    return %arg0, %c0_i32 : i32, i32
  }
}

</mosaic_0001>

<llo_original>
// kernel: forward.1
$region0: #{forward.1}
  #allocation0 [shape = 'u32[]', space=smem, size = 0x4, offset = 0x4, fixed_abs, tag = 'smem constant byte address 0x4 - core index']
  #allocation1 [shape = 'u32[144,128]{1,0:T(1,128)}', space=vmem, size = 0x12000, scoped, tag = 'internal scratch']
  %s0 = inlined_call_operand.vmem [shape: s32[16,1], index: 0, kind: input, shape index: {}]
  %s1 = inlined_call_operand.vmem [shape: bf16[64,128], index: 1, kind: input, shape index: {}]
  %s2 = inlined_call_operand.hbm [shape: f32[16,128], index: 2, kind: input, shape index: {}]
  %s3 = inlined_call_operand.hbm [shape: bf16[2,128,384], index: 3, kind: input, shape index: {}]
  %s4 = inlined_call_operand.vmem [shape: f32[2,1,384], index: 4, kind: input, shape index: {}]
  %s5 = inlined_call_operand.hbm [shape: bf16[2,128,128], index: 5, kind: input, shape index: {}]
  %s6 = inlined_call_operand.vmem [shape: f32[2,1,128], index: 6, kind: input, shape index: {}]
  %s7 = inlined_call_operand.vmem [shape: f32[2,1,128], index: 7, kind: input, shape index: {}]
  %s8 = inlined_call_operand.vmem [shape: f32[2,1,128], index: 8, kind: input, shape index: {}]
  %s9 = inlined_call_operand.hbm [shape: bf16[2,128,128], index: 9, kind: input, shape index: {}]
  %s10 = inlined_call_operand.hbm [shape: f32[2,1,128], index: 10, kind: input, shape index: {}]
  %s11 = inlined_call_operand.hbm [shape: bf16[2,128,128], index: 11, kind: input, shape index: {}]
  %s12 = inlined_call_operand.hbm [shape: f32[2,1,128], index: 12, kind: input, shape index: {}]
  %s13 = inlined_call_operand.hbm [shape: f32[2,1,128], index: 13, kind: input, shape index: {}]
  %s14 = inlined_call_operand.hbm [shape: f32[2,1,128], index: 14, kind: input, shape index: {}]
  %s15 = inlined_call_operand.hbm [shape: bf16[128,128], index: 15, kind: input, shape index: {}]
  %s16 = inlined_call_operand.hbm [shape: bf16[128,128], index: 16, kind: input, shape index: {}]
  %s17 = inlined_call_operand.vmem [shape: f32[1,128], index: 17, kind: input, shape index: {}]
  %s18 = inlined_call_operand.hbm [shape: bf16[128,128], index: 18, kind: input, shape index: {}]
  %s19 = inlined_call_operand.hbm [shape: f32[1,128], index: 19, kind: input, shape index: {}]
  %s20 = inlined_call_operand.hbm [shape: f32[2,128], index: 20, kind: output, shape index: {}]
  %s21 = sld [smem:[#allocation0]]
  $region142: #{forward.1} parent=0
    _
  %s23 = ssub.s32 1, %s21
  %s24 = scalar_select 0, %s23, %s21
  $region1: #{forward.1} parent=0
    #allocation2 [shape = 'u8[8192]{0}', space=vmem, size = 0x2000, scoped, tag = 'input window, operand 2, single buffered']
    #allocation3 [shape = 's32[1]{0}', space=sflag, size = 0x4, scoped, tag = 'scoped memory for forward.1']
    #allocation4 [shape = 's32[1]{0}', space=sflag, size = 0x4, scoped, tag = 'scoped memory for forward.1']
    #allocation5 [shape = 'u8[196608]{0}', space=vmem, size = 0x30000, scoped, tag = 'input window, operand 3, single buffered']
    #allocation6 [shape = 's32[1]{0}', space=sflag, size = 0x4, scoped, tag = 'scoped memory for forward.1']
    #allocation7 [shape = 'u8[65536]{0}', space=vmem, size = 0x10000, scoped, tag = 'input window, operand 5, single buffered']
    #allocation8 [shape = 'u8[65536]{0}', space=vmem, size = 0x10000, scoped, tag = 'input window, operand 9, single buffered']
    #allocation9 [shape = 's32[1]{0}', space=sflag, size = 0x4, scoped, tag = 'scoped memory for forward.1']
    #allocation10 [shape = 'u8[1024]{0}', space=vmem, size = 0x400, scoped, tag = 'input window, operand 10, single buffered']
    #allocation11 [shape = 'u8[65536]{0}', space=vmem, size = 0x10000, scoped, tag = 'input window, operand 11, single buffered']
    #allocation12 [shape = 's32[1]{0}', space=sflag, size = 0x4, scoped, tag = 'scoped memory for forward.1']
    #allocation13 [shape = 'u8[1024]{0}', space=vmem, size = 0x400, scoped, tag = 'input window, operand 12, single buffered']
    #allocation14 [shape = 'u8[1024]{0}', space=vmem, size = 0x400, scoped, tag = 'input window, operand 13, single buffered']
    #allocation15 [shape = 's32[1]{0}', space=sflag, size = 0x4, scoped, tag = 'scoped memory for forward.1']
    #allocation16 [shape = 'u8[1024]{0}', space=vmem, size = 0x400, scoped, tag = 'input window, operand 14, single buffered']
    #allocation17 [shape = 'u8[32768]{0}', space=vmem, size = 0x8000, scoped, tag = 'input window, operand 15, single buffered']
    #allocation18 [shape = 's32[1]{0}', space=sflag, size = 0x4, scoped, tag = 'scoped memory for forward.1']
    #allocation19 [shape = 'u8[32768]{0}', space=vmem, size = 0x8000, scoped, tag = 'input window, operand 16, single buffered']
    #allocation20 [shape = 'u8[32768]{0}', space=vmem, size = 0x8000, scoped, tag = 'input window, operand 18, single buffered']
    #allocation21 [shape = 's32[1]{0}', space=sflag, size = 0x4, scoped, tag = 'scoped memory for forward.1']
    #allocation22 [shape = 'u8[512]{0}', space=vmem, size = 0x400, scoped, tag = 'input window, operand 19, single buffered']
    #allocation23 [shape = 'u8[1024]{0}', space=vmem, size = 0x400, scoped, tag = 'output window, operand 0, single buffered']
    %25 = vsyncpa [#allocation3], 0
    %26 = vsyncpa [#allocation6], 0
    %27 = vsyncpa [#allocation9], 0
    %28 = vsyncpa [#allocation12], 0
    %29 = vsyncpa [#allocation15], 0
    %30 = vsyncpa [#allocation18], 0
    %31 = vsyncpa [#allocation21], 0
    %32 = vsyncpa [#allocation4], 0
    // Predicated region
    $region2: #{forward.1} parent=1 // pred_check
      _
    $region3: #{forward.1} parent=1 // pred_check_branch
      %34 = sbr.rel (0) target = $region5
    $region4: #{forward.1} parent=1 // pred_region
      _
    $region5: #{forward.1} parent=1 // pred_fallthru
      _
    // Predicated region
    $region6: #{forward.1} parent=1 // pred_check
      _
    $region7: #{forward.1} parent=1 // pred_check_branch
      %36 = sbr.rel (0) target = $region9
    $region8: #{forward.1} parent=1 // pred_region
      _
    $region9: #{forward.1} parent=1 // pred_fallthru
      _
    // Predicated region
    $region10: #{forward.1} parent=1 // pred_check
      _
    $region11: #{forward.1} parent=1 // pred_check_branch
      %38 = sbr.rel (0) target = $region13
    $region12: #{forward.1} parent=1 // pred_region
      %s40 = ssub.s32 256, 256
      %41 = vsyncadd [#allocation3], %s40
      %s42 = sshll.u32 [#allocation2], 4
      %s43 = int_to_ptr.vmem [resolvable:$true] %s42
      %48 = dma.hbm_to_vmem [thread:$0]  %s2, 256, %s43, [#allocation3], 128, 128, 8
    $region13: #{forward.1} parent=1 // pred_fallthru
      _
    // Predicated region
    $region14: #{forward.1} parent=1 // pred_check
      _
    $region15: #{forward.1} parent=1 // pred_check_branch
      %50 = sbr.rel (0) target = $region17
    $region16: #{forward.1} parent=1 // pred_region
      %s52 = ssub.s32 6144, 6144
      %53 = vsyncadd [#allocation6], %s52
      %s54 = sshll.u32 [#allocation5], 4
      %s55 = int_to_ptr.vmem [resolvable:$true] %s54
      %60 = dma.hbm_to_vmem [thread:$0]  %s3, 6144, %s55, [#allocation6], 192, 192, 12
    $region17: #{forward.1} parent=1 // pred_fallthru
      _
    // Predicated region
    $region18: #{forward.1} parent=1 // pred_check
      _
    $region19: #{forward.1} parent=1 // pred_check_branch
      %62 = sbr.rel (0) target = $region21
    $region20: #{forward.1} parent=1 // pred_region
      _
    $region21: #{forward.1} parent=1 // pred_fallthru
      _
    // Predicated region
    $region22: #{forward.1} parent=1 // pred_check
      _
    $region23: #{forward.1} parent=1 // pred_check_branch
      %64 = sbr.rel (0) target = $region25
    $region24: #{forward.1} parent=1 // pred_region
      %s66 = ssub.s32 2048, 2048
      %67 = vsyncadd [#allocation6], %s66
      %s68 = sshll.u32 [#allocation7], 4
      %s69 = int_to_ptr.vmem [resolvable:$true] %s68
      %74 = dma.hbm_to_vmem [thread:$0]  %s5, 2048, %s69, [#allocation6], 64, 64, 4
    $region25: #{forward.1} parent=1 // pred_fallthru
      _
    // Predicated region
    $region26: #{forward.1} parent=1 // pred_check
      _
    $region27: #{forward.1} parent=1 // pred_check_branch
      %76 = sbr.rel (0) target = $region29
    $region28: #{forward.1} parent=1 // pred_region
      _
    $region29: #{forward.1} parent=1 // pred_fallthru
      _
    // Predicated region
    $region30: #{forward.1} parent=1 // pred_check
      _
    $region31: #{forward.1} parent=1 // pred_check_branch
      %78 = sbr.rel (0) target = $region33
    $region32: #{forward.1} parent=1 // pred_region
      _
    $region33: #{forward.1} parent=1 // pred_fallthru
      _
    // Predicated region
    $region34: #{forward.1} parent=1 // pred_check
      _
    $region35: #{forward.1} parent=1 // pred_check_branch
      %80 = sbr.rel (0) target = $region37
    $region36: #{forward.1} parent=1 // pred_region
      _
    $region37: #{forward.1} parent=1 // pred_fallthru
      _
    // Predicated region
    $region38: #{forward.1} parent=1 // pred_check
      _
    $region39: #{forward.1} parent=1 // pred_check_branch
      %82 = sbr.rel (0) target = $region41
    $region40: #{forward.1} parent=1 // pred_region
      %s84 = ssub.s32 2048, 2048
      %85 = vsyncadd [#allocation9], %s84
      %s86 = sshll.u32 [#allocation8], 4
      %s87 = int_to_ptr.vmem [resolvable:$true] %s86
      %92 = dma.hbm_to_vmem [thread:$0]  %s9, 2048, %s87, [#allocation9], 64, 64, 4
    $region41: #{forward.1} parent=1 // pred_fallthru
      _
    // Predicated region
    $region42: #{forward.1} parent=1 // pred_check
      _
    $region43: #{forward.1} parent=1 // pred_check_branch
      %94 = sbr.rel (0) target = $region45
    $region44: #{forward.1} parent=1 // pred_region
      %s96 = ssub.s32 32, 32
      %97 = vsyncadd [#allocation9], %s96
      %s98 = sshll.u32 [#allocation10], 4
      %s99 = int_to_ptr.vmem [resolvable:$true] %s98
      %104 = dma.hbm_to_vmem [thread:$0]  %s10, 32, %s99, [#allocation9], 16, 16, 1
    $region45: #{forward.1} parent=1 // pred_fallthru
      _
    // Predicated region
    $region46: #{forward.1} parent=1 // pred_check
      _
    $region47: #{forward.1} parent=1 // pred_check_branch
      %106 = sbr.rel (0) target = $region49
    $region48: #{forward.1} parent=1 // pred_region
      %s108 = ssub.s32 2048, 2048
      %109 = vsyncadd [#allocation12], %s108
      %s110 = sshll.u32 [#allocation11], 4
      %s111 = int_to_ptr.vmem [resolvable:$true] %s110
      %116 = dma.hbm_to_vmem [thread:$0]  %s11, 2048, %s111, [#allocation12], 64, 64, 4
    $region49: #{forward.1} parent=1 // pred_fallthru
      _
    // Predicated region
    $region50: #{forward.1} parent=1 // pred_check
      _
    $region51: #{forward.1} parent=1 // pred_check_branch
      %118 = sbr.rel (0) target = $region53
    $region52: #{forward.1} parent=1 // pred_region
      %s120 = ssub.s32 32, 32
      %121 = vsyncadd [#allocation12], %s120
      %s122 = sshll.u32 [#allocation13], 4
      %s123 = int_to_ptr.vmem [resolvable:$true] %s122
      %128 = dma.hbm_to_vmem [thread:$0]  %s12, 32, %s123, [#allocation12], 16, 16, 1
    $region53: #{forward.1} parent=1 // pred_fallthru
      _
    // Predicated region
    $region54: #{forward.1} parent=1 // pred_check
      _
    $region55: #{forward.1} parent=1 // pred_check_branch
      %130 = sbr.rel (0) target = $region57
    $region56: #{forward.1} parent=1 // pred_region
      %s132 = ssub.s32 32, 32
      %133 = vsyncadd [#allocation15], %s132
      %s134 = sshll.u32 [#allocation14], 4
      %s135 = int_to_ptr.vmem [resolvable:$true] %s134
      %140 = dma.hbm_to_vmem [thread:$0]  %s13, 32, %s135, [#allocation15], 16, 16, 1
    $region57: #{forward.1} parent=1 // pred_fallthru
      _
    // Predicated region
    $region58: #{forward.1} parent=1 // pred_check
      _
    $region59: #{forward.1} parent=1 // pred_check_branch
      %142 = sbr.rel (0) target = $region61
    $region60: #{forward.1} parent=1 // pred_region
      %s144 = ssub.s32 32, 32
      %145 = vsyncadd [#allocation15], %s144
      %s146 = sshll.u32 [#allocation16], 4
      %s147 = int_to_ptr.vmem [resolvable:$true] %s146
      %152 = dma.hbm_to_vmem [thread:$0]  %s14, 32, %s147, [#allocation15], 16, 16, 1
    $region61: #{forward.1} parent=1 // pred_fallthru
      _
    // Predicated region
    $region62: #{forward.1} parent=1 // pred_check
      _
    $region63: #{forward.1} parent=1 // pred_check_branch
      %154 = sbr.rel (0) target = $region65
    $region64: #{forward.1} parent=1 // pred_region
      %s156 = ssub.s32 1024, 1024
      %157 = vsyncadd [#allocation18], %s156
      %s158 = sshll.u32 [#allocation17], 4
      %s159 = int_to_ptr.vmem [resolvable:$true] %s158
      %164 = dma.hbm_to_vmem [thread:$0]  %s15, 1024, %s159, [#allocation18], 64, 64, 4
    $region65: #{forward.1} parent=1 // pred_fallthru
      _
    // Predicated region
    $region66: #{forward.1} parent=1 // pred_check
      _
    $region67: #{forward.1} parent=1 // pred_check_branch
      %166 = sbr.rel (0) target = $region69
    $region68: #{forward.1} parent=1 // pred_region
      %s168 = ssub.s32 1024, 1024
      %169 = vsyncadd [#allocation18], %s168
      %s170 = sshll.u32 [#allocation19], 4
      %s171 = int_to_ptr.vmem [resolvable:$true] %s170
      %176 = dma.hbm_to_vmem [thread:$0]  %s16, 1024, %s171, [#allocation18], 64, 64, 4
    $region69: #{forward.1} parent=1 // pred_fallthru
      _
    // Predicated region
    $region70: #{forward.1} parent=1 // pred_check
      _
    $region71: #{forward.1} parent=1 // pred_check_branch
      %178 = sbr.rel (0) target = $region73
    $region72: #{forward.1} parent=1 // pred_region
      _
    $region73: #{forward.1} parent=1 // pred_fallthru
      _
    // Predicated region
    $region74: #{forward.1} parent=1 // pred_check
      _
    $region75: #{forward.1} parent=1 // pred_check_branch
      %180 = sbr.rel (0) target = $region77
    $region76: #{forward.1} parent=1 // pred_region
      %s182 = ssub.s32 1024, 1024
      %183 = vsyncadd [#allocation21], %s182
      %s184 = sshll.u32 [#allocation20], 4
      %s185 = int_to_ptr.vmem [resolvable:$true] %s184
      %190 = dma.hbm_to_vmem [thread:$0]  %s18, 1024, %s185, [#allocation21], 64, 64, 4
    $region77: #{forward.1} parent=1 // pred_fallthru
      _
    // Predicated region
    $region78: #{forward.1} parent=1 // pred_check
      _
    $region79: #{forward.1} parent=1 // pred_check_branch
      %192 = sbr.rel (0) target = $region81
    $region80: #{forward.1} parent=1 // pred_region
      %s194 = ssub.s32 16, 16
      %195 = vsyncadd [#allocation21], %s194
      %s197 = sshll.u32 [#allocation22], 4
      %s198 = int_to_ptr.vmem [resolvable:$true] %s197
      %200 = dma.hbm_to_vmem [thread:$0]  %s19, 16, %s198, [#allocation21]
    $region81: #{forward.1} parent=1 // pred_fallthru
      _
    // Predicated region
    $region82: #{forward.1} parent=1 // pred_check
      _
    $region83: #{forward.1} parent=1 // pred_check_branch
      %202 = sbr.rel (0) target = $region85
    $region84: #{forward.1} parent=1 // pred_region
      %203 = dma.done [#allocation3], 256
    $region85: #{forward.1} parent=1 // pred_fallthru
      _
    // Predicated region
    $region86: #{forward.1} parent=1 // pred_check
      _
    $region87: #{forward.1} parent=1 // pred_check_branch
      %205 = sbr.rel (0) target = $region89
    $region88: #{forward.1} parent=1 // pred_region
      %206 = dma.done [#allocation6], 6144
    $region89: #{forward.1} parent=1 // pred_fallthru
      _
    // Predicated region
    $region90: #{forward.1} parent=1 // pred_check
      _
    $region91: #{forward.1} parent=1 // pred_check_branch
      %208 = sbr.rel (0) target = $region93
    $region92: #{forward.1} parent=1 // pred_region
      %209 = dma.done [#allocation6], 2048
    $region93: #{forward.1} parent=1 // pred_fallthru
      _
    // Predicated region
    $region94: #{forward.1} parent=1 // pred_check
      _
    $region95: #{forward.1} parent=1 // pred_check_branch
      %211 = sbr.rel (0) target = $region97
    $region96: #{forward.1} parent=1 // pred_region
      %212 = dma.done [#allocation9], 2048
    $region97: #{forward.1} parent=1 // pred_fallthru
      _
    // Predicated region
    $region98: #{forward.1} parent=1 // pred_check
      _
    $region99: #{forward.1} parent=1 // pred_check_branch
      %214 = sbr.rel (0) target = $region101
    $region100: #{forward.1} parent=1 // pred_region
      %215 = dma.done [#allocation9], 32
    $region101: #{forward.1} parent=1 // pred_fallthru
      _
    // Predicated region
    $region102: #{forward.1} parent=1 // pred_check
      _
    $region103: #{forward.1} parent=1 // pred_check_branch
      %217 = sbr.rel (0) target = $region105
    $region104: #{forward.1} parent=1 // pred_region
      %218 = dma.done [#allocation12], 2048
    $region105: #{forward.1} parent=1 // pred_fallthru
      _
    // Predicated region
    $region106: #{forward.1} parent=1 // pred_check
      _
    $region107: #{forward.1} parent=1 // pred_check_branch
      %220 = sbr.rel (0) target = $region109
    $region108: #{forward.1} parent=1 // pred_region
      %221 = dma.done [#allocation12], 32
    $region109: #{forward.1} parent=1 // pred_fallthru
      _
    // Predicated region
    $region110: #{forward.1} parent=1 // pred_check
      _
    $region111: #{forward.1} parent=1 // pred_check_branch
      %223 = sbr.rel (0) target = $region113
    $region112: #{forward.1} parent=1 // pred_region
      %224 = dma.done [#allocation15], 32
    $region113: #{forward.1} parent=1 // pred_fallthru
      _
    // Predicated region
    $region114: #{forward.1} parent=1 // pred_check
      _
    $region115: #{forward.1} parent=1 // pred_check_branch
      %226 = sbr.rel (0) target = $region117
    $region116: #{forward.1} parent=1 // pred_region
      %227 = dma.done [#allocation15], 32
    $region117: #{forward.1} parent=1 // pred_fallthru
      _
    // Predicated region
    $region118: #{forward.1} parent=1 // pred_check
      _
    $region119: #{forward.1} parent=1 // pred_check_branch
      %229 = sbr.rel (0) target = $region121
    $region120: #{forward.1} parent=1 // pred_region
      %230 = dma.done [#allocation18], 1024
    $region121: #{forward.1} parent=1 // pred_fallthru
      _
    // Predicated region
    $region122: #{forward.1} parent=1 // pred_check
      _
    $region123: #{forward.1} parent=1 // pred_check_branch
      %232 = sbr.rel (0) target = $region125
    $region124: #{forward.1} parent=1 // pred_region
      %233 = dma.done [#allocation18], 1024
    $region125: #{forward.1} parent=1 // pred_fallthru
      _
    // Predicated region
    $region126: #{forward.1} parent=1 // pred_check
      _
    $region127: #{forward.1} parent=1 // pred_check_branch
      %235 = sbr.rel (0) target = $region129
    $region128: #{forward.1} parent=1 // pred_region
      %236 = dma.done [#allocation21], 1024
    $region129: #{forward.1} parent=1 // pred_fallthru
      _
    // Predicated region
    $region130: #{forward.1} parent=1 // pred_check
      _
    $region131: #{forward.1} parent=1 // pred_check_branch
      %238 = sbr.rel (0) target = $region133
    $region132: #{forward.1} parent=1 // pred_region
      %239 = dma.done [#allocation21], 16
    $region133: #{forward.1} parent=1 // pred_fallthru
      _
    %v241 = vld [vmem:[%s0] sm:$0xff]
    %v242 = vld [vmem:[%s0 + $0x8] sm:$0xff]
    %v243 = vlaneseq
    %v244 = vand.u32 %v243, 127
    %245 = vset.pattern.permute.xlu0 0
    %246 = vperm.xlu0 %245, %v241
    %v247 = vpop.permute.xlu0 %246
    %248 = vset.pattern.permute.xlu0 0
    %249 = vperm.xlu0 %248, %v242
    %v250 = vpop.permute.xlu0 %249
    %vm251 = vcmp.eq.s32.totalorder %v244, %v247
    %vm252 = vcmp.eq.s32.totalorder %v244, %v250
    %v253 = vsel %vm251, 1, 0
    %v254 = vsel %vm252, 1, 0
    %v255 = vcvt.s32.f32 %v253
    %v256 = vcvt.s32.f32 %v254
    %v257 = vpack.c.bf16 %v256, %v255
    %v258 = vld [vmem:[%s1] sm:$0xf]
    %v259 = vld [vmem:[%s1 + $0x4] sm:$0xf]
    %v260 = vld [vmem:[%s1 + $0x8] sm:$0xf]
    %v261 = vld [vmem:[%s1 + $0xc] sm:$0xf]
    %v262 = vld [vmem:[%s1 + $0x10] sm:$0xf]
    %v263 = vld [vmem:[%s1 + $0x14] sm:$0xf]
    %v264 = vld [vmem:[%s1 + $0x18] sm:$0xf]
    %v265 = vld [vmem:[%s1 + $0x1c] sm:$0xf]
    %v274 = vunpack.c.l.b16 %v258
    %v275 = vunpack.c.l.b16 %v259
    %v276 = vunpack.c.l.b16 %v260
    %v277 = vunpack.c.l.b16 %v261
    %v278 = vunpack.c.l.b16 %v262
    %v279 = vunpack.c.l.b16 %v263
    %v280 = vunpack.c.l.b16 %v264
    %v281 = vunpack.c.l.b16 %v265
    %v282 = vpack.c.b16 %v275, %v274
    %v283 = vpack.c.b16 %v277, %v276
    %v284 = vpack.c.b16 %v279, %v278
    %v285 = vpack.c.b16 %v281, %v280
    %vm290 = vcmask 523264
    %v292 = vsel %vm290, %v257, 0
    %294 = vmatprep.subr.bf16.mxu0 0
    %295 = vmatpush1.bf16.msra.mxu0 0
    %296 = vmatprep.subr.bf16.mxu0 0
    %297 = vmatpush1.bf16.msra.mxu0 0
    %298 = vmatprep.subr.bf16.mxu0 0
    %299 = vmatpush1.bf16.msra.mxu0 0
    %300 = vmatprep.subr.bf16.mxu0 0
    %301 = vmatpush1.bf16.msra.mxu0 0
    %302 = vmatprep.subr.bf16.mxu0 0
    %303 = vmatpush1.bf16.msra.mxu0 %v285
    %304 = vmatprep.subr.bf16.mxu0 0
    %305 = vmatpush1.bf16.msra.mxu0 %v284
    %306 = vmatprep.subr.bf16.mxu0 0
    %307 = vmatpush1.bf16.msra.mxu0 %v283
    %308 = vmatprep.subr.bf16.mxu0 0
    %309 = vmatpush1.bf16.msra.mxu0 %v282
    %310 = vmatprep.subr.bf16.mxu0 0
    %311 = vmatpush2.bf16.msra.mxu0 0
    %312 = vmatprep.subr.bf16.mxu0 0
    %313 = vmatpush2.bf16.msra.mxu0 0
    %314 = vmatprep.subr.bf16.mxu0 0
    %315 = vmatpush2.bf16.msra.mxu0 0
    %316 = vmatprep.subr.bf16.mxu0 0
    %317 = vmatpush2.bf16.msra.mxu0 0
    %318 = vmatprep.subr.bf16.mxu0 0
    %319 = vmatpush2.bf16.msra.mxu0 0
    %320 = vmatprep.subr.bf16.mxu0 0
    %321 = vmatpush2.bf16.msra.mxu0 0
    %322 = vmatprep.subr.bf16.mxu0 0
    %323 = vmatpush2.bf16.msra.mxu0 0
    %324 = vmatprep.subr.bf16.mxu0 0
    %325 = vmatpush2.bf16.msra.mxu0 0
    %326 = vmatprep.mubr.bf16.mxu0 0
    %327 = vmatmul.mubr.bf16.gmra.mxu0 %v292
    %v328 = vpop.f32.mrf.mxu0
    %v329 = vadd.f32 0.0, %v328
    %v330 = vpop.f32.mrf.mxu0
    %v331 = vpop.f32.mrf.mxu0
    %v332 = vadd.f32 0.0, %v331
    %v333 = vpop.f32.mrf.mxu0
    %334 = vdwg.mxu0
    %v335 = vld [vmem:[#allocation2] sm:$0xff]
    %v336 = vadd.f32 %v329, %v335
    %v337 = vadd.f32 %v332, %v335
    %v338 = vpack.c.bf16 %v337, %v336
    %v339 = vld [vmem:[#allocation5] sm:$0xff]
    %v340 = vld [vmem:[#allocation5 + $0x8] sm:$0xf]
    %v341 = vld [vmem:[#allocation5 + $0xc] sm:$0xff]
    %v342 = vld [vmem:[#allocation5 + $0x14] sm:$0xf]
    %v343 = vld [vmem:[#allocation5 + $0x18] sm:$0xff]
    %v344 = vld [vmem:[#allocation5 + $0x20] sm:$0xf]
    %v345 = vld [vmem:[#allocation5 + $0x24] sm:$0xff]
    %v346 = vld [vmem:[#allocation5 + $0x2c] sm:$0xf]
    %v347 = vld [vmem:[#allocation5 + $0x30] sm:$0xff]
    %v348 = vld [vmem:[#allocation5 + $0x38] sm:$0xf]
    %v349 = vld [vmem:[#allocation5 + $0x3c] sm:$0xff]
    %v350 = vld [vmem:[#allocation5 + $0x44] sm:$0xf]
    %v351 = vld [vmem:[#allocation5 + $0x48] sm:$0xff]
    %v352 = vld [vmem:[#allocation5 + $0x50] sm:$0xf]
    %v353 = vld [vmem:[#allocation5 + $0x54] sm:$0xff]
    %v354 = vld [vmem:[#allocation5 + $0x5c] sm:$0xf]
    %v355 = vld [vmem:[#allocation5 + $0x60] sm:$0xff]
    %v356 = vld [vmem:[#allocation5 + $0x68] sm:$0xf]
    %v357 = vld [vmem:[#allocation5 + $0x6c] sm:$0xff]
    %v358 = vld [vmem:[#allocation5 + $0x74] sm:$0xf]
    %v359 = vld [vmem:[#allocation5 + $0x78] sm:$0xff]
    %v360 = vld [vmem:[#allocation5 + $0x80] sm:$0xf]
    %v361 = vld [vmem:[#allocation5 + $0x84] sm:$0xff]
    %v362 = vld [vmem:[#allocation5 + $0x8c] sm:$0xf]
    %v363 = vld [vmem:[#allocation5 + $0x90] sm:$0xff]
    %v364 = vld [vmem:[#allocation5 + $0x98] sm:$0xf]
    %v365 = vld [vmem:[#allocation5 + $0x9c] sm:$0xff]
    %v366 = vld [vmem:[#allocation5 + $0xa4] sm:$0xf]
    %v367 = vld [vmem:[#allocation5 + $0xa8] sm:$0xff]
    %v368 = vld [vmem:[#allocation5 + $0xb0] sm:$0xf]
    %v369 = vld [vmem:[#allocation5 + $0xb4] sm:$0xff]
    %v370 = vld [vmem:[#allocation5 + $0xbc] sm:$0xf]
    %v371 = vld [vmem:[%s4] sm:$0x7]
    %v373 = vlaneseq
    %v374 = vshrl.u32 %v373, 7
    %v375 = vsub.s32 0, %v374
    %v376 = vrot.slane %v371, %v375
    %v377 = vlaneseq
    %v378 = vshrl.u32 %v377, 7
    %v379 = vsub.s32 1, %v378
    %v380 = vrot.slane %v371, %v379
    %v381 = vlaneseq
    %v382 = vshrl.u32 %v381, 7
    %v383 = vsub.s32 2, %v382
    %v384 = vrot.slane %v371, %v383
    %v420 = vunpack.c.l.b16 %v339
    %v421 = vunpack.c.h.b16 %v339
    %v422 = vunpack.c.l.b16 %v340
    %v423 = vunpack.c.l.b16 %v341
    %v424 = vunpack.c.h.b16 %v341
    %v425 = vunpack.c.l.b16 %v342
    %v426 = vunpack.c.l.b16 %v343
    %v427 = vunpack.c.h.b16 %v343
    %v428 = vunpack.c.l.b16 %v344
    %v429 = vunpack.c.l.b16 %v345
    %v430 = vunpack.c.h.b16 %v345
    %v431 = vunpack.c.l.b16 %v346
    %v432 = vunpack.c.l.b16 %v347
    %v433 = vunpack.c.h.b16 %v347
    %v434 = vunpack.c.l.b16 %v348
    %v435 = vunpack.c.l.b16 %v349
    %v436 = vunpack.c.h.b16 %v349
    %v437 = vunpack.c.l.b16 %v350
    %v438 = vunpack.c.l.b16 %v351
    %v439 = vunpack.c.h.b16 %v351
    %v440 = vunpack.c.l.b16 %v352
    %v441 = vunpack.c.l.b16 %v353
    %v442 = vunpack.c.h.b16 %v353
    %v443 = vunpack.c.l.b16 %v354
    %v444 = vunpack.c.l.b16 %v355
    %v445 = vunpack.c.h.b16 %v355
    %v446 = vunpack.c.l.b16 %v356
    %v447 = vunpack.c.l.b16 %v357
    %v448 = vunpack.c.h.b16 %v357
    %v449 = vunpack.c.l.b16 %v358
    %v450 = vunpack.c.l.b16 %v359
    %v451 = vunpack.c.h.b16 %v359
    %v452 = vunpack.c.l.b16 %v360
    %v453 = vunpack.c.l.b16 %v361
    %v454 = vunpack.c.h.b16 %v361
    %v455 = vunpack.c.l.b16 %v362
    %v456 = vunpack.c.l.b16 %v363
    %v457 = vunpack.c.h.b16 %v363
    %v458 = vunpack.c.l.b16 %v364
    %v459 = vunpack.c.l.b16 %v365
    %v460 = vunpack.c.h.b16 %v365
    %v461 = vunpack.c.l.b16 %v366
    %v462 = vunpack.c.l.b16 %v367
    %v463 = vunpack.c.h.b16 %v367
    %v464 = vunpack.c.l.b16 %v368
    %v465 = vunpack.c.l.b16 %v369
    %v466 = vunpack.c.h.b16 %v369
    %v467 = vunpack.c.l.b16 %v370
    %v468 = vpack.c.b16 %v423, %v420
    %v469 = vpack.c.b16 %v424, %v421
    %v470 = vpack.c.b16 %v425, %v422
    %v471 = vpack.c.b16 %v429, %v426
    %v472 = vpack.c.b16 %v430, %v427
    %v473 = vpack.c.b16 %v431, %v428
    %v474 = vpack.c.b16 %v435, %v432
    %v475 = vpack.c.b16 %v436, %v433
    %v476 = vpack.c.b16 %v437, %v434
    %v477 = vpack.c.b16 %v441, %v438
    %v478 = vpack.c.b16 %v442, %v439
    %v479 = vpack.c.b16 %v443, %v440
    %v480 = vpack.c.b16 %v447, %v444
    %v481 = vpack.c.b16 %v448, %v445
    %v482 = vpack.c.b16 %v449, %v446
    %v483 = vpack.c.b16 %v453, %v450
    %v484 = vpack.c.b16 %v454, %v451
    %v485 = vpack.c.b16 %v455, %v452
    %v486 = vpack.c.b16 %v459, %v456
    %v487 = vpack.c.b16 %v460, %v457
    %v488 = vpack.c.b16 %v461, %v458
    %v489 = vpack.c.b16 %v465, %v462
    %v490 = vpack.c.b16 %v466, %v463
    %v491 = vpack.c.b16 %v467, %v464
    %516 = vmatprep.subr.bf16.mxu0 %v490
    %517 = vmatpush1.bf16.msra.mxu0 %v489
    %518 = vmatprep.subr.bf16.mxu0 %v487
    %519 = vmatpush1.bf16.msra.mxu0 %v486
    %520 = vmatprep.subr.bf16.mxu0 %v484
    %521 = vmatpush1.bf16.msra.mxu0 %v483
    %522 = vmatprep.subr.bf16.mxu0 %v481
    %523 = vmatpush1.bf16.msra.mxu0 %v480
    %524 = vmatprep.subr.bf16.mxu0 %v478
    %525 = vmatpush1.bf16.msra.mxu0 %v477
    %526 = vmatprep.subr.bf16.mxu0 %v475
    %527 = vmatpush1.bf16.msra.mxu0 %v474
    %528 = vmatprep.subr.bf16.mxu0 %v472
    %529 = vmatpush1.bf16.msra.mxu0 %v471
    %530 = vmatprep.subr.bf16.mxu0 %v469
    %531 = vmatpush1.bf16.msra.mxu0 %v468
    %532 = vmatprep.subr.bf16.mxu0 0
    %533 = vmatpush2.bf16.msra.mxu0 0
    %534 = vmatprep.subr.bf16.mxu0 0
    %535 = vmatpush2.bf16.msra.mxu0 0
    %536 = vmatprep.subr.bf16.mxu0 0
    %537 = vmatpush2.bf16.msra.mxu0 0
    %538 = vmatprep.subr.bf16.mxu0 0
    %539 = vmatpush2.bf16.msra.mxu0 0
    %540 = vmatprep.subr.bf16.mxu0 0
    %541 = vmatpush2.bf16.msra.mxu0 0
    %542 = vmatprep.subr.bf16.mxu0 0
    %543 = vmatpush2.bf16.msra.mxu0 0
    %544 = vmatprep.subr.bf16.mxu0 0
    %545 = vmatpush2.bf16.msra.mxu0 0
    %546 = vmatprep.subr.bf16.mxu0 0
    %547 = vmatpush2.bf16.msra.mxu0 0
    %548 = vmatprep.mubr.bf16.mxu0 0
    %549 = vmatmul.mubr.bf16.gmra.mxu0 %v338
    %v550 = vpop.f32.mrf.mxu0
    %v551 = vadd.f32 %v376, %v550
    %v552 = vpop.f32.mrf.mxu0
    %v553 = vadd.f32 %v380, %v552
    %v554 = vpop.f32.mrf.mxu0
    %v555 = vadd.f32 %v376, %v554
    %v556 = vpop.f32.mrf.mxu0
    %v557 = vadd.f32 %v380, %v556
    %558 = vdwg.mxu0
    %559 = vmatprep.subr.bf16.mxu0 0
    %560 = vmatpush1.bf16.msra.mxu0 %v491
    %561 = vmatprep.subr.bf16.mxu0 0
    %562 = vmatpush1.bf16.msra.mxu0 %v488
    %563 = vmatprep.subr.bf16.mxu0 0
    %564 = vmatpush1.bf16.msra.mxu0 %v485
    %565 = vmatprep.subr.bf16.mxu0 0
    %566 = vmatpush1.bf16.msra.mxu0 %v482
    %567 = vmatprep.subr.bf16.mxu0 0
    %568 = vmatpush1.bf16.msra.mxu0 %v479
    %569 = vmatprep.subr.bf16.mxu0 0
    %570 = vmatpush1.bf16.msra.mxu0 %v476
    %571 = vmatprep.subr.bf16.mxu0 0
    %572 = vmatpush1.bf16.msra.mxu0 %v473
    %573 = vmatprep.subr.bf16.mxu0 0
    %574 = vmatpush1.bf16.msra.mxu0 %v470
    %575 = vmatprep.subr.bf16.mxu0 0
    %576 = vmatpush2.bf16.msra.mxu0 0
    %577 = vmatprep.subr.bf16.mxu0 0
    %578 = vmatpush2.bf16.msra.mxu0 0
    %579 = vmatprep.subr.bf16.mxu0 0
    %580 = vmatpush2.bf16.msra.mxu0 0
    %581 = vmatprep.subr.bf16.mxu0 0
    %582 = vmatpush2.bf16.msra.mxu0 0
    %583 = vmatprep.subr.bf16.mxu0 0
    %584 = vmatpush2.bf16.msra.mxu0 0
    %585 = vmatprep.subr.bf16.mxu0 0
    %586 = vmatpush2.bf16.msra.mxu0 0
    %587 = vmatprep.subr.bf16.mxu0 0
    %588 = vmatpush2.bf16.msra.mxu0 0
    %589 = vmatprep.subr.bf16.mxu0 0
    %590 = vmatpush2.bf16.msra.mxu0 0
    %591 = vmatprep.mubr.bf16.mxu0 0
    %592 = vmatmul.mubr.bf16.gmra.mxu0 %v338
    %v593 = vpop.f32.mrf.mxu0
    %v594 = vadd.f32 %v384, %v593
    %v595 = vpop.f32.mrf.mxu0
    %v596 = vpop.f32.mrf.mxu0
    %v597 = vadd.f32 %v384, %v596
    %v598 = vpop.f32.mrf.mxu0
    %599 = vdwg.mxu0
    %v600 = vpack.c.bf16 %v555, %v551
    %v601 = vpack.c.bf16 %v557, %v553
    %v602 = vpack.c.bf16 %v597, %v594
    %v604 = vunpack.c.l.b16 %v600
    %v605 = vunpack.c.h.b16 %v600
    %v606 = vpack.c.b16 %v604, %v604
    %v607 = vpack.c.b16 %v605, %v605
    %v609 = vunpack.c.l.b16 %v601
    %v610 = vunpack.c.h.b16 %v601
    %v611 = vpack.c.b16 %v609, %v609
    %v612 = vpack.c.b16 %v610, %v610
    %v614 = vunpack.c.l.b16 %v602
    %v615 = vunpack.c.h.b16 %v602
    %v616 = vpack.c.b16 %v614, %v614
    %v617 = vpack.c.b16 %v615, %v615
    %618 = vrot.lane.b32.xlu0 %v606, 96
    %v619 = vpop.permute.xlu0 %618
    %620 = vrot.lane.b32.xlu0 %v607, 96
    %v621 = vpop.permute.xlu0 %620
    %622 = vrot.lane.b32.xlu0 %v606, 64
    %v623 = vpop.permute.xlu0 %622
    %624 = vrot.lane.b32.xlu0 %v607, 64
    %v625 = vpop.permute.xlu0 %624
    %626 = vrot.lane.b32.xlu0 %v606, 32
    %v627 = vpop.permute.xlu0 %626
    %628 = vrot.lane.b32.xlu0 %v607, 32
    %v629 = vpop.permute.xlu0 %628
    %630 = vrot.lane.b32.xlu0 %v611, 96
    %v631 = vpop.permute.xlu0 %630
    %632 = vrot.lane.b32.xlu0 %v612, 96
    %v633 = vpop.permute.xlu0 %632
    %634 = vrot.lane.b32.xlu0 %v611, 64
    %v635 = vpop.permute.xlu0 %634
    %636 = vrot.lane.b32.xlu0 %v612, 64
    %v637 = vpop.permute.xlu0 %636
    %638 = vrot.lane.b32.xlu0 %v611, 32
    %v639 = vpop.permute.xlu0 %638
    %640 = vrot.lane.b32.xlu0 %v612, 32
    %v641 = vpop.permute.xlu0 %640
    %642 = vrot.lane.b32.xlu0 %v616, 96
    %v643 = vpop.permute.xlu0 %642
    %644 = vrot.lane.b32.xlu0 %v617, 96
    %v645 = vpop.permute.xlu0 %644
    %646 = vrot.lane.b32.xlu0 %v616, 64
    %v647 = vpop.permute.xlu0 %646
    %648 = vrot.lane.b32.xlu0 %v617, 64
    %v649 = vpop.permute.xlu0 %648
    %650 = vrot.lane.b32.xlu0 %v616, 32
    %v651 = vpop.permute.xlu0 %650
    %652 = vrot.lane.b32.xlu0 %v617, 32
    %v653 = vpop.permute.xlu0 %652
    %vm654 = vcmask 261120
    %v656 = vsel %vm654, %v606, 0
    %v659 = vsel %vm654, %v611, 0
    %661 = vmatprep.subr.bf16.mxu0 0
    %662 = vmatpush1.bf16.xpose.msra.mxu0 0
    %663 = vmatprep.subr.bf16.mxu0 0
    %664 = vmatpush1.bf16.xpose.msra.mxu0 0
    %665 = vmatprep.subr.bf16.mxu0 0
    %666 = vmatpush1.bf16.xpose.msra.mxu0 0
    %667 = vmatprep.subr.bf16.mxu0 0
    %668 = vmatpush1.bf16.xpose.msra.mxu0 0
    %669 = vmatprep.subr.bf16.mxu0 0
    %670 = vmatpush1.bf16.xpose.msra.mxu0 0
    %671 = vmatprep.subr.bf16.mxu0 0
    %672 = vmatpush1.bf16.xpose.msra.mxu0 0
    %673 = vmatprep.subr.bf16.mxu0 0
    %674 = vmatpush1.bf16.xpose.msra.mxu0 0
    %675 = vmatprep.subr.bf16.mxu0 0
    %676 = vmatpush1.bf16.xpose.msra.mxu0 %v659
    %677 = vmatprep.subr.bf16.mxu0 0
    %678 = vmatpush2.bf16.xpose.msra.mxu0 0
    %679 = vmatprep.subr.bf16.mxu0 0
    %680 = vmatpush2.bf16.xpose.msra.mxu0 0
    %681 = vmatprep.subr.bf16.mxu0 0
    %682 = vmatpush2.bf16.xpose.msra.mxu0 0
    %683 = vmatprep.subr.bf16.mxu0 0
    %684 = vmatpush2.bf16.xpose.msra.mxu0 0
    %685 = vmatprep.subr.bf16.mxu0 0
    %686 = vmatpush2.bf16.xpose.msra.mxu0 0
    %687 = vmatprep.subr.bf16.mxu0 0
    %688 = vmatpush2.bf16.xpose.msra.mxu0 0
    %689 = vmatprep.subr.bf16.mxu0 0
    %690 = vmatpush2.bf16.xpose.msra.mxu0 0
    %691 = vmatprep.subr.bf16.mxu0 0
    %692 = vmatpush2.bf16.xpose.msra.mxu0 0
    %693 = vmatprep.mubr.bf16.mxu0 0
    %694 = vmatmul.mubr.bf16.gmra.mxu0 %v656
    %v695 = vpop.f32.mrf.mxu0
    %v696 = vadd.f32 0.0, %v695
    %v697 = vpop.f32.mrf.mxu0
    %v698 = vpop.f32.mrf.mxu0
    %v699 = vpop.f32.mrf.mxu0
    %700 = vdwg.mxu0
    %v702 = vsel %vm654, %v607, 0
    %v705 = vsel %vm654, %v612, 0
    %707 = vmatprep.subr.bf16.mxu0 0
    %708 = vmatpush1.bf16.xpose.msra.mxu0 0
    %709 = vmatprep.subr.bf16.mxu0 0
    %710 = vmatpush1.bf16.xpose.msra.mxu0 0
    %711 = vmatprep.subr.bf16.mxu0 0
    %712 = vmatpush1.bf16.xpose.msra.mxu0 0
    %713 = vmatprep.subr.bf16.mxu0 0
    %714 = vmatpush1.bf16.xpose.msra.mxu0 0
    %715 = vmatprep.subr.bf16.mxu0 0
    %716 = vmatpush1.bf16.xpose.msra.mxu0 0
    %717 = vmatprep.subr.bf16.mxu0 0
    %718 = vmatpush1.bf16.xpose.msra.mxu0 0
    %719 = vmatprep.subr.bf16.mxu0 0
    %720 = vmatpush1.bf16.xpose.msra.mxu0 0
    %721 = vmatprep.subr.bf16.mxu0 0
    %722 = vmatpush1.bf16.xpose.msra.mxu0 %v705
    %723 = vmatprep.subr.bf16.mxu0 0
    %724 = vmatpush2.bf16.xpose.msra.mxu0 0
    %725 = vmatprep.subr.bf16.mxu0 0
    %726 = vmatpush2.bf16.xpose.msra.mxu0 0
    %727 = vmatprep.subr.bf16.mxu0 0
    %728 = vmatpush2.bf16.xpose.msra.mxu0 0
    %729 = vmatprep.subr.bf16.mxu0 0
    %730 = vmatpush2.bf16.xpose.msra.mxu0 0
    %731 = vmatprep.subr.bf16.mxu0 0
    %732 = vmatpush2.bf16.xpose.msra.mxu0 0
    %733 = vmatprep.subr.bf16.mxu0 0
    %734 = vmatpush2.bf16.xpose.msra.mxu0 0
    %735 = vmatprep.subr.bf16.mxu0 0
    %736 = vmatpush2.bf16.xpose.msra.mxu0 0
    %737 = vmatprep.subr.bf16.mxu0 0
    %738 = vmatpush2.bf16.xpose.msra.mxu0 0
    %739 = vmatprep.mubr.bf16.mxu0 0
    %740 = vmatmul.mubr.bf16.gmra.mxu0 %v702
    %v741 = vpop.f32.mrf.mxu0
    %v742 = vadd.f32 0.0, %v741
    %v743 = vpop.f32.mrf.mxu0
    %v744 = vpop.f32.mrf.mxu0
    %v745 = vpop.f32.mrf.mxu0
    %746 = vdwg.mxu0
    %v748 = vsel %vm654, %v619, 0
    %v751 = vsel %vm654, %v631, 0
    %753 = vmatprep.subr.bf16.mxu0 0
    %754 = vmatpush1.bf16.xpose.msra.mxu0 0
    %755 = vmatprep.subr.bf16.mxu0 0
    %756 = vmatpush1.bf16.xpose.msra.mxu0 0
    %757 = vmatprep.subr.bf16.mxu0 0
    %758 = vmatpush1.bf16.xpose.msra.mxu0 0
    %759 = vmatprep.subr.bf16.mxu0 0
    %760 = vmatpush1.bf16.xpose.msra.mxu0 0
    %761 = vmatprep.subr.bf16.mxu0 0
    %762 = vmatpush1.bf16.xpose.msra.mxu0 0
    %763 = vmatprep.subr.bf16.mxu0 0
    %764 = vmatpush1.bf16.xpose.msra.mxu0 0
    %765 = vmatprep.subr.bf16.mxu0 0
    %766 = vmatpush1.bf16.xpose.msra.mxu0 0
    %767 = vmatprep.subr.bf16.mxu0 0
    %768 = vmatpush1.bf16.xpose.msra.mxu0 %v751
    %769 = vmatprep.subr.bf16.mxu0 0
    %770 = vmatpush2.bf16.xpose.msra.mxu0 0
    %771 = vmatprep.subr.bf16.mxu0 0
    %772 = vmatpush2.bf16.xpose.msra.mxu0 0
    %773 = vmatprep.subr.bf16.mxu0 0
    %774 = vmatpush2.bf16.xpose.msra.mxu0 0
    %775 = vmatprep.subr.bf16.mxu0 0
    %776 = vmatpush2.bf16.xpose.msra.mxu0 0
    %777 = vmatprep.subr.bf16.mxu0 0
    %778 = vmatpush2.bf16.xpose.msra.mxu0 0
    %779 = vmatprep.subr.bf16.mxu0 0
    %780 = vmatpush2.bf16.xpose.msra.mxu0 0
    %781 = vmatprep.subr.bf16.mxu0 0
    %782 = vmatpush2.bf16.xpose.msra.mxu0 0
    %783 = vmatprep.subr.bf16.mxu0 0
    %784 = vmatpush2.bf16.xpose.msra.mxu0 0
    %785 = vmatprep.mubr.bf16.mxu0 0
    %786 = vmatmul.mubr.bf16.gmra.mxu0 %v748
    %v787 = vpop.f32.mrf.mxu0
    %v788 = vadd.f32 0.0, %v787
    %v789 = vpop.f32.mrf.mxu0
    %v790 = vpop.f32.mrf.mxu0
    %v791 = vpop.f32.mrf.mxu0
    %792 = vdwg.mxu0
    %v794 = vsel %vm654, %v621, 0
    %v797 = vsel %vm654, %v633, 0
    %799 = vmatprep.subr.bf16.mxu0 0
    %800 = vmatpush1.bf16.xpose.msra.mxu0 0
    %801 = vmatprep.subr.bf16.mxu0 0
    %802 = vmatpush1.bf16.xpose.msra.mxu0 0
    %803 = vmatprep.subr.bf16.mxu0 0
    %804 = vmatpush1.bf16.xpose.msra.mxu0 0
    %805 = vmatprep.subr.bf16.mxu0 0
    %806 = vmatpush1.bf16.xpose.msra.mxu0 0
    %807 = vmatprep.subr.bf16.mxu0 0
    %808 = vmatpush1.bf16.xpose.msra.mxu0 0
    %809 = vmatprep.subr.bf16.mxu0 0
    %810 = vmatpush1.bf16.xpose.msra.mxu0 0
    %811 = vmatprep.subr.bf16.mxu0 0
    %812 = vmatpush1.bf16.xpose.msra.mxu0 0
    %813 = vmatprep.subr.bf16.mxu0 0
    %814 = vmatpush1.bf16.xpose.msra.mxu0 %v797
    %815 = vmatprep.subr.bf16.mxu0 0
    %816 = vmatpush2.bf16.xpose.msra.mxu0 0
    %817 = vmatprep.subr.bf16.mxu0 0
    %818 = vmatpush2.bf16.xpose.msra.mxu0 0
    %819 = vmatprep.subr.bf16.mxu0 0
    %820 = vmatpush2.bf16.xpose.msra.mxu0 0
    %821 = vmatprep.subr.bf16.mxu0 0
    %822 = vmatpush2.bf16.xpose.msra.mxu0 0
    %823 = vmatprep.subr.bf16.mxu0 0
    %824 = vmatpush2.bf16.xpose.msra.mxu0 0
    %825 = vmatprep.subr.bf16.mxu0 0
    %826 = vmatpush2.bf16.xpose.msra.mxu0 0
    %827 = vmatprep.subr.bf16.mxu0 0
    %828 = vmatpush2.bf16.xpose.msra.mxu0 0
    %829 = vmatprep.subr.bf16.mxu0 0
    %830 = vmatpush2.bf16.xpose.msra.mxu0 0
    %831 = vmatprep.mubr.bf16.mxu0 0
    %832 = vmatmul.mubr.bf16.gmra.mxu0 %v794
    %v833 = vpop.f32.mrf.mxu0
    %v834 = vadd.f32 0.0, %v833
    %v835 = vpop.f32.mrf.mxu0
    %v836 = vpop.f32.mrf.mxu0
    %v837 = vpop.f32.mrf.mxu0
    %838 = vdwg.mxu0
    %v840 = vsel %vm654, %v623, 0
    %v843 = vsel %vm654, %v635, 0
    %845 = vmatprep.subr.bf16.mxu0 0
    %846 = vmatpush1.bf16.xpose.msra.mxu0 0
    %847 = vmatprep.subr.bf16.mxu0 0
    %848 = vmatpush1.bf16.xpose.msra.mxu0 0
    %849 = vmatprep.subr.bf16.mxu0 0
    %850 = vmatpush1.bf16.xpose.msra.mxu0 0
    %851 = vmatprep.subr.bf16.mxu0 0
    %852 = vmatpush1.bf16.xpose.msra.mxu0 0
    %853 = vmatprep.subr.bf16.mxu0 0
    %854 = vmatpush1.bf16.xpose.msra.mxu0 0
    %855 = vmatprep.subr.bf16.mxu0 0
    %856 = vmatpush1.bf16.xpose.msra.mxu0 0
    %857 = vmatprep.subr.bf16.mxu0 0
    %858 = vmatpush1.bf16.xpose.msra.mxu0 0
    %859 = vmatprep.subr.bf16.mxu0 0
    %860 = vmatpush1.bf16.xpose.msra.mxu0 %v843
    %861 = vmatprep.subr.bf16.mxu0 0
    %862 = vmatpush2.bf16.xpose.msra.mxu0 0
    %863 = vmatprep.subr.bf16.mxu0 0
    %864 = vmatpush2.bf16.xpose.msra.mxu0 0
    %865 = vmatprep.subr.bf16.mxu0 0
    %866 = vmatpush2.bf16.xpose.msra.mxu0 0
    %867 = vmatprep.subr.bf16.mxu0 0
    %868 = vmatpush2.bf16.xpose.msra.mxu0 0
    %869 = vmatprep.subr.bf16.mxu0 0
    %870 = vmatpush2.bf16.xpose.msra.mxu0 0
    %871 = vmatprep.subr.bf16.mxu0 0
    %872 = vmatpush2.bf16.xpose.msra.mxu0 0
    %873 = vmatprep.subr.bf16.mxu0 0
    %874 = vmatpush2.bf16.xpose.msra.mxu0 0
    %875 = vmatprep.subr.bf16.mxu0 0
    %876 = vmatpush2.bf16.xpose.msra.mxu0 0
    %877 = vmatprep.mubr.bf16.mxu0 0
    %878 = vmatmul.mubr.bf16.gmra.mxu0 %v840
    %v879 = vpop.f32.mrf.mxu0
    %v880 = vadd.f32 0.0, %v879
    %v881 = vpop.f32.mrf.mxu0
    %v882 = vpop.f32.mrf.mxu0
    %v883 = vpop.f32.mrf.mxu0
    %884 = vdwg.mxu0
    %v886 = vsel %vm654, %v625, 0
    %v889 = vsel %vm654, %v637, 0
    %891 = vmatprep.subr.bf16.mxu0 0
    %892 = vmatpush1.bf16.xpose.msra.mxu0 0
    %893 = vmatprep.subr.bf16.mxu0 0
    %894 = vmatpush1.bf16.xpose.msra.mxu0 0
    %895 = vmatprep.subr.bf16.mxu0 0
    %896 = vmatpush1.bf16.xpose.msra.mxu0 0
    %897 = vmatprep.subr.bf16.mxu0 0
    %898 = vmatpush1.bf16.xpose.msra.mxu0 0
    %899 = vmatprep.subr.bf16.mxu0 0
    %900 = vmatpush1.bf16.xpose.msra.mxu0 0
    %901 = vmatprep.subr.bf16.mxu0 0
    %902 = vmatpush1.bf16.xpose.msra.mxu0 0
    %903 = vmatprep.subr.bf16.mxu0 0
    %904 = vmatpush1.bf16.xpose.msra.mxu0 0
    %905 = vmatprep.subr.bf16.mxu0 0
    %906 = vmatpush1.bf16.xpose.msra.mxu0 %v889
    %907 = vmatprep.subr.bf16.mxu0 0
    %908 = vmatpush2.bf16.xpose.msra.mxu0 0
    %909 = vmatprep.subr.bf16.mxu0 0
    %910 = vmatpush2.bf16.xpose.msra.mxu0 0
    %911 = vmatprep.subr.bf16.mxu0 0
    %912 = vmatpush2.bf16.xpose.msra.mxu0 0
    %913 = vmatprep.subr.bf16.mxu0 0
    %914 = vmatpush2.bf16.xpose.msra.mxu0 0
    %915 = vmatprep.subr.bf16.mxu0 0
    %916 = vmatpush2.bf16.xpose.msra.mxu0 0
    %917 = vmatprep.subr.bf16.mxu0 0
    %918 = vmatpush2.bf16.xpose.msra.mxu0 0
    %919 = vmatprep.subr.bf16.mxu0 0
    %920 = vmatpush2.bf16.xpose.msra.mxu0 0
    %921 = vmatprep.subr.bf16.mxu0 0
    %922 = vmatpush2.bf16.xpose.msra.mxu0 0
    %923 = vmatprep.mubr.bf16.mxu0 0
    %924 = vmatmul.mubr.bf16.gmra.mxu0 %v886
    %v925 = vpop.f32.mrf.mxu0
    %v926 = vadd.f32 0.0, %v925
    %v927 = vpop.f32.mrf.mxu0
    %v928 = vpop.f32.mrf.mxu0
    %v929 = vpop.f32.mrf.mxu0
    %930 = vdwg.mxu0
    %v932 = vsel %vm654, %v627, 0
    %v935 = vsel %vm654, %v639, 0
    %937 = vmatprep.subr.bf16.mxu0 0
    %938 = vmatpush1.bf16.xpose.msra.mxu0 0
    %939 = vmatprep.subr.bf16.mxu0 0
    %940 = vmatpush1.bf16.xpose.msra.mxu0 0
    %941 = vmatprep.subr.bf16.mxu0 0
    %942 = vmatpush1.bf16.xpose.msra.mxu0 0
    %943 = vmatprep.subr.bf16.mxu0 0
    %944 = vmatpush1.bf16.xpose.msra.mxu0 0
    %945 = vmatprep.subr.bf16.mxu0 0
    %946 = vmatpush1.bf16.xpose.msra.mxu0 0
    %947 = vmatprep.subr.bf16.mxu0 0
    %948 = vmatpush1.bf16.xpose.msra.mxu0 0
    %949 = vmatprep.subr.bf16.mxu0 0
    %950 = vmatpush1.bf16.xpose.msra.mxu0 0
    %951 = vmatprep.subr.bf16.mxu0 0
    %952 = vmatpush1.bf16.xpose.msra.mxu0 %v935
    %953 = vmatprep.subr.bf16.mxu0 0
    %954 = vmatpush2.bf16.xpose.msra.mxu0 0
    %955 = vmatprep.subr.bf16.mxu0 0
    %956 = vmatpush2.bf16.xpose.msra.mxu0 0
    %957 = vmatprep.subr.bf16.mxu0 0
    %958 = vmatpush2.bf16.xpose.msra.mxu0 0
    %959 = vmatprep.subr.bf16.mxu0 0
    %960 = vmatpush2.bf16.xpose.msra.mxu0 0
    %961 = vmatprep.subr.bf16.mxu0 0
    %962 = vmatpush2.bf16.xpose.msra.mxu0 0
    %963 = vmatprep.subr.bf16.mxu0 0
    %964 = vmatpush2.bf16.xpose.msra.mxu0 0
    %965 = vmatprep.subr.bf16.mxu0 0
    %966 = vmatpush2.bf16.xpose.msra.mxu0 0
    %967 = vmatprep.subr.bf16.mxu0 0
    %968 = vmatpush2.bf16.xpose.msra.mxu0 0
    %969 = vmatprep.mubr.bf16.mxu0 0
    %970 = vmatmul.mubr.bf16.gmra.mxu0 %v932
    %v971 = vpop.f32.mrf.mxu0
    %v972 = vadd.f32 0.0, %v971
    %v973 = vpop.f32.mrf.mxu0
    %v974 = vpop.f32.mrf.mxu0
    %v975 = vpop.f32.mrf.mxu0
    %976 = vdwg.mxu0
    %v978 = vsel %vm654, %v629, 0
    %v981 = vsel %vm654, %v641, 0
    %983 = vmatprep.subr.bf16.mxu0 0
    %984 = vmatpush1.bf16.xpose.msra.mxu0 0
    %985 = vmatprep.subr.bf16.mxu0 0
    %986 = vmatpush1.bf16.xpose.msra.mxu0 0
    %987 = vmatprep.subr.bf16.mxu0 0
    %988 = vmatpush1.bf16.xpose.msra.mxu0 0
    %989 = vmatprep.subr.bf16.mxu0 0
    %990 = vmatpush1.bf16.xpose.msra.mxu0 0
    %991 = vmatprep.subr.bf16.mxu0 0
    %992 = vmatpush1.bf16.xpose.msra.mxu0 0
    %993 = vmatprep.subr.bf16.mxu0 0
    %994 = vmatpush1.bf16.xpose.msra.mxu0 0
    %995 = vmatprep.subr.bf16.mxu0 0
    %996 = vmatpush1.bf16.xpose.msra.mxu0 0
    %997 = vmatprep.subr.bf16.mxu0 0
    %998 = vmatpush1.bf16.xpose.msra.mxu0 %v981
    %999 = vmatprep.subr.bf16.mxu0 0
    %1000 = vmatpush2.bf16.xpose.msra.mxu0 0
    %1001 = vmatprep.subr.bf16.mxu0 0
    %1002 = vmatpush2.bf16.xpose.msra.mxu0 0
    %1003 = vmatprep.subr.bf16.mxu0 0
    %1004 = vmatpush2.bf16.xpose.msra.mxu0 0
    %1005 = vmatprep.subr.bf16.mxu0 0
    %1006 = vmatpush2.bf16.xpose.msra.mxu0 0
    %1007 = vmatprep.subr.bf16.mxu0 0
    %1008 = vmatpush2.bf16.xpose.msra.mxu0 0
    %1009 = vmatprep.subr.bf16.mxu0 0
    %1010 = vmatpush2.bf16.xpose.msra.mxu0 0
    %1011 = vmatprep.subr.bf16.mxu0 0
    %1012 = vmatpush2.bf16.xpose.msra.mxu0 0
    %1013 = vmatprep.subr.bf16.mxu0 0
    %1014 = vmatpush2.bf16.xpose.msra.mxu0 0
    %1015 = vmatprep.mubr.bf16.mxu0 0
    %1016 = vmatmul.mubr.bf16.gmra.mxu0 %v978
    %v1017 = vpop.f32.mrf.mxu0
    %v1018 = vadd.f32 0.0, %v1017
    %v1019 = vpop.f32.mrf.mxu0
    %v1020 = vpop.f32.mrf.mxu0
    %v1021 = vpop.f32.mrf.mxu0
    %1022 = vdwg.mxu0
    %vm1023 = vcmask 64512
    %v1024 = vsel %vm1023, %v696, -inf
    %1025 = vmax.xlane.f32.xlu0 %v1024
    %v1026 = vpop.xlane.xlu0 %1025
    %v1027 = vsel %vm1023, %v742, -inf
    %1028 = vmax.xlane.f32.xlu0 %v1027
    %v1029 = vpop.xlane.xlu0 %1028
    %v1030 = vsel %vm1023, %v788, -inf
    %1031 = vmax.xlane.f32.xlu0 %v1030
    %v1032 = vpop.xlane.xlu0 %1031
    %v1033 = vsel %vm1023, %v834, -inf
    %1034 = vmax.xlane.f32.xlu0 %v1033
    %v1035 = vpop.xlane.xlu0 %1034
    %v1036 = vsel %vm1023, %v880, -inf
    %1037 = vmax.xlane.f32.xlu0 %v1036
    %v1038 = vpop.xlane.xlu0 %1037
    %v1039 = vsel %vm1023, %v926, -inf
    %1040 = vmax.xlane.f32.xlu0 %v1039
    %v1041 = vpop.xlane.xlu0 %1040
    %v1042 = vsel %vm1023, %v972, -inf
    %1043 = vmax.xlane.f32.xlu0 %v1042
    %v1044 = vpop.xlane.xlu0 %1043
    %v1045 = vsel %vm1023, %v1018, -inf
    %1046 = vmax.xlane.f32.xlu0 %v1045
    %v1047 = vpop.xlane.xlu0 %1046
    %v1048 = vsub.f32 %v696, %v1026
    %v1049 = vsub.f32 %v742, %v1029
    %v1050 = vsub.f32 %v788, %v1032
    %v1051 = vsub.f32 %v834, %v1035
    %v1052 = vsub.f32 %v880, %v1038
    %v1053 = vsub.f32 %v926, %v1041
    %v1054 = vsub.f32 %v972, %v1044
    %v1055 = vsub.f32 %v1018, %v1047
    %v1056 = vmul.f32 %v1048, 1.442695
    %v1057 = vpow.pop %v1056
    %v1058 = vmul.f32 %v1049, 1.442695
    %v1059 = vpow.pop %v1058
    %v1060 = vmul.f32 %v1050, 1.442695
    %v1061 = vpow.pop %v1060
    %v1062 = vmul.f32 %v1051, 1.442695
    %v1063 = vpow.pop %v1062
    %v1064 = vmul.f32 %v1052, 1.442695
    %v1065 = vpow.pop %v1064
    %v1066 = vmul.f32 %v1053, 1.442695
    %v1067 = vpow.pop %v1066
    %v1068 = vmul.f32 %v1054, 1.442695
    %v1069 = vpow.pop %v1068
    %v1070 = vmul.f32 %v1055, 1.442695
    %v1071 = vpow.pop %v1070
    %v1072 = vsel %vm1023, %v1057, 0.0
    %1073 = vadd.xlane.f32.xlu0 %v1072
    %v1074 = vpop.xlane.xlu0 %1073
    %v1075 = vsel %vm1023, %v1059, 0.0
    %1076 = vadd.xlane.f32.xlu0 %v1075
    %v1077 = vpop.xlane.xlu0 %1076
    %v1078 = vsel %vm1023, %v1061, 0.0
    %1079 = vadd.xlane.f32.xlu0 %v1078
    %v1080 = vpop.xlane.xlu0 %1079
    %v1081 = vsel %vm1023, %v1063, 0.0
    %1082 = vadd.xlane.f32.xlu0 %v1081
    %v1083 = vpop.xlane.xlu0 %1082
    %v1084 = vsel %vm1023, %v1065, 0.0
    %1085 = vadd.xlane.f32.xlu0 %v1084
    %v1086 = vpop.xlane.xlu0 %1085
    %v1087 = vsel %vm1023, %v1067, 0.0
    %1088 = vadd.xlane.f32.xlu0 %v1087
    %v1089 = vpop.xlane.xlu0 %1088
    %v1090 = vsel %vm1023, %v1069, 0.0
    %1091 = vadd.xlane.f32.xlu0 %v1090
    %v1092 = vpop.xlane.xlu0 %1091
    %v1093 = vsel %vm1023, %v1071, 0.0
    %1094 = vadd.xlane.f32.xlu0 %v1093
    %v1095 = vpop.xlane.xlu0 %1094
    %v1096 = vrcp.pop %v1074
    %v1097 = vrcp.pop %v1077
    %v1098 = vrcp.pop %v1080
    %v1099 = vrcp.pop %v1083
    %v1100 = vrcp.pop %v1086
    %v1101 = vrcp.pop %v1089
    %v1102 = vrcp.pop %v1092
    %v1103 = vrcp.pop %v1095
    %v1104 = vmul.f32 %v1057, %v1096
    %v1105 = vmul.f32 %v1059, %v1097
    %v1106 = vmul.f32 %v1061, %v1098
    %v1107 = vmul.f32 %v1063, %v1099
    %v1108 = vmul.f32 %v1065, %v1100
    %v1109 = vmul.f32 %v1067, %v1101
    %v1110 = vmul.f32 %v1069, %v1102
    %v1111 = vmul.f32 %v1071, %v1103
    %v1112 = vpack.c.bf16 %v1104, %v1104
    %v1113 = vpack.c.bf16 %v1105, %v1105
    %v1114 = vpack.c.bf16 %v1106, %v1106
    %v1115 = vpack.c.bf16 %v1107, %v1107
    %v1116 = vpack.c.bf16 %v1108, %v1108
    %v1117 = vpack.c.bf16 %v1109, %v1109
    %v1118 = vpack.c.bf16 %v1110, %v1110
    %v1119 = vpack.c.bf16 %v1111, %v1111
    %v1121 = vsel %vm1023, %v1112, 0
    %vm1123 = vcmask 1043456
    %v1125 = vsel %vm1123, %v616, 0
    %1127 = vmatprep.subr.bf16.mxu0 0
    %1128 = vmatpush1.bf16.msra.mxu0 0
    %1129 = vmatprep.subr.bf16.mxu0 0
    %1130 = vmatpush1.bf16.msra.mxu0 0
    %1131 = vmatprep.subr.bf16.mxu0 0
    %1132 = vmatpush1.bf16.msra.mxu0 0
    %1133 = vmatprep.subr.bf16.mxu0 0
    %1134 = vmatpush1.bf16.msra.mxu0 0
    %1135 = vmatprep.subr.bf16.mxu0 0
    %1136 = vmatpush1.bf16.msra.mxu0 0
    %1137 = vmatprep.subr.bf16.mxu0 0
    %1138 = vmatpush1.bf16.msra.mxu0 0
    %1139 = vmatprep.subr.bf16.mxu0 0
    %1140 = vmatpush1.bf16.msra.mxu0 0
    %1141 = vmatprep.subr.bf16.mxu0 0
    %1142 = vmatpush1.bf16.msra.mxu0 %v1125
    %1143 = vmatprep.subr.bf16.mxu0 0
    %1144 = vmatpush2.bf16.msra.mxu0 0
    %1145 = vmatprep.subr.bf16.mxu0 0
    %1146 = vmatpush2.bf16.msra.mxu0 0
    %1147 = vmatprep.subr.bf16.mxu0 0
    %1148 = vmatpush2.bf16.msra.mxu0 0
    %1149 = vmatprep.subr.bf16.mxu0 0
    %1150 = vmatpush2.bf16.msra.mxu0 0
    %1151 = vmatprep.subr.bf16.mxu0 0
    %1152 = vmatpush2.bf16.msra.mxu0 0
    %1153 = vmatprep.subr.bf16.mxu0 0
    %1154 = vmatpush2.bf16.msra.mxu0 0
    %1155 = vmatprep.subr.bf16.mxu0 0
    %1156 = vmatpush2.bf16.msra.mxu0 0
    %1157 = vmatprep.subr.bf16.mxu0 0
    %1158 = vmatpush2.bf16.msra.mxu0 0
    %1159 = vmatprep.mubr.bf16.mxu0 0
    %1160 = vmatmul.mubr.bf16.gmra.mxu0 %v1121
    %v1161 = vpop.f32.mrf.mxu0
    %v1162 = vadd.f32 0.0, %v1161
    %v1163 = vpop.f32.mrf.mxu0
    %v1164 = vpop.f32.mrf.mxu0
    %v1165 = vpop.f32.mrf.mxu0
    %1166 = vdwg.mxu0
    %v1168 = vsel %vm1023, %v1113, 0
    %v1171 = vsel %vm1123, %v617, 0
    %1173 = vmatprep.subr.bf16.mxu0 0
    %1174 = vmatpush1.bf16.msra.mxu0 0
    %1175 = vmatprep.subr.bf16.mxu0 0
    %1176 = vmatpush1.bf16.msra.mxu0 0
    %1177 = vmatprep.subr.bf16.mxu0 0
    %1178 = vmatpush1.bf16.msra.mxu0 0
    %1179 = vmatprep.subr.bf16.mxu0 0
    %1180 = vmatpush1.bf16.msra.mxu0 0
    %1181 = vmatprep.subr.bf16.mxu0 0
    %1182 = vmatpush1.bf16.msra.mxu0 0
    %1183 = vmatprep.subr.bf16.mxu0 0
    %1184 = vmatpush1.bf16.msra.mxu0 0
    %1185 = vmatprep.subr.bf16.mxu0 0
    %1186 = vmatpush1.bf16.msra.mxu0 0
    %1187 = vmatprep.subr.bf16.mxu0 0
    %1188 = vmatpush1.bf16.msra.mxu0 %v1171
    %1189 = vmatprep.subr.bf16.mxu0 0
    %1190 = vmatpush2.bf16.msra.mxu0 0
    %1191 = vmatprep.subr.bf16.mxu0 0
    %1192 = vmatpush2.bf16.msra.mxu0 0
    %1193 = vmatprep.subr.bf16.mxu0 0
    %1194 = vmatpush2.bf16.msra.mxu0 0
    %1195 = vmatprep.subr.bf16.mxu0 0
    %1196 = vmatpush2.bf16.msra.mxu0 0
    %1197 = vmatprep.subr.bf16.mxu0 0
    %1198 = vmatpush2.bf16.msra.mxu0 0
    %1199 = vmatprep.subr.bf16.mxu0 0
    %1200 = vmatpush2.bf16.msra.mxu0 0
    %1201 = vmatprep.subr.bf16.mxu0 0
    %1202 = vmatpush2.bf16.msra.mxu0 0
    %1203 = vmatprep.subr.bf16.mxu0 0
    %1204 = vmatpush2.bf16.msra.mxu0 0
    %1205 = vmatprep.mubr.bf16.mxu0 0
    %1206 = vmatmul.mubr.bf16.gmra.mxu0 %v1168
    %v1207 = vpop.f32.mrf.mxu0
    %v1208 = vadd.f32 0.0, %v1207
    %v1209 = vpop.f32.mrf.mxu0
    %v1210 = vpop.f32.mrf.mxu0
    %v1211 = vpop.f32.mrf.mxu0
    %1212 = vdwg.mxu0
    %v1214 = vsel %vm1023, %v1114, 0
    %v1217 = vsel %vm1123, %v643, 0
    %1219 = vmatprep.subr.bf16.mxu0 0
    %1220 = vmatpush1.bf16.msra.mxu0 0
    %1221 = vmatprep.subr.bf16.mxu0 0
    %1222 = vmatpush1.bf16.msra.mxu0 0
    %1223 = vmatprep.subr.bf16.mxu0 0
    %1224 = vmatpush1.bf16.msra.mxu0 0
    %1225 = vmatprep.subr.bf16.mxu0 0
    %1226 = vmatpush1.bf16.msra.mxu0 0
    %1227 = vmatprep.subr.bf16.mxu0 0
    %1228 = vmatpush1.bf16.msra.mxu0 0
    %1229 = vmatprep.subr.bf16.mxu0 0
    %1230 = vmatpush1.bf16.msra.mxu0 0
    %1231 = vmatprep.subr.bf16.mxu0 0
    %1232 = vmatpush1.bf16.msra.mxu0 0
    %1233 = vmatprep.subr.bf16.mxu0 0
    %1234 = vmatpush1.bf16.msra.mxu0 %v1217
    %1235 = vmatprep.subr.bf16.mxu0 0
    %1236 = vmatpush2.bf16.msra.mxu0 0
    %1237 = vmatprep.subr.bf16.mxu0 0
    %1238 = vmatpush2.bf16.msra.mxu0 0
    %1239 = vmatprep.subr.bf16.mxu0 0
    %1240 = vmatpush2.bf16.msra.mxu0 0
    %1241 = vmatprep.subr.bf16.mxu0 0
    %1242 = vmatpush2.bf16.msra.mxu0 0
    %1243 = vmatprep.subr.bf16.mxu0 0
    %1244 = vmatpush2.bf16.msra.mxu0 0
    %1245 = vmatprep.subr.bf16.mxu0 0
    %1246 = vmatpush2.bf16.msra.mxu0 0
    %1247 = vmatprep.subr.bf16.mxu0 0
    %1248 = vmatpush2.bf16.msra.mxu0 0
    %1249 = vmatprep.subr.bf16.mxu0 0
    %1250 = vmatpush2.bf16.msra.mxu0 0
    %1251 = vmatprep.mubr.bf16.mxu0 0
    %1252 = vmatmul.mubr.bf16.gmra.mxu0 %v1214
    %v1253 = vpop.f32.mrf.mxu0
    %v1254 = vadd.f32 0.0, %v1253
    %v1255 = vpop.f32.mrf.mxu0
    %v1256 = vpop.f32.mrf.mxu0
    %v1257 = vpop.f32.mrf.mxu0
    %1258 = vdwg.mxu0
    %v1260 = vsel %vm1023, %v1115, 0
    %v1263 = vsel %vm1123, %v645, 0
    %1265 = vmatprep.subr.bf16.mxu0 0
    %1266 = vmatpush1.bf16.msra.mxu0 0
    %1267 = vmatprep.subr.bf16.mxu0 0
    %1268 = vmatpush1.bf16.msra.mxu0 0
    %1269 = vmatprep.subr.bf16.mxu0 0
    %1270 = vmatpush1.bf16.msra.mxu0 0
    %1271 = vmatprep.subr.bf16.mxu0 0
    %1272 = vmatpush1.bf16.msra.mxu0 0
    %1273 = vmatprep.subr.bf16.mxu0 0
    %1274 = vmatpush1.bf16.msra.mxu0 0
    %1275 = vmatprep.subr.bf16.mxu0 0
    %1276 = vmatpush1.bf16.msra.mxu0 0
    %1277 = vmatprep.subr.bf16.mxu0 0
    %1278 = vmatpush1.bf16.msra.mxu0 0
    %1279 = vmatprep.subr.bf16.mxu0 0
    %1280 = vmatpush1.bf16.msra.mxu0 %v1263
    %1281 = vmatprep.subr.bf16.mxu0 0
    %1282 = vmatpush2.bf16.msra.mxu0 0
    %1283 = vmatprep.subr.bf16.mxu0 0
    %1284 = vmatpush2.bf16.msra.mxu0 0
    %1285 = vmatprep.subr.bf16.mxu0 0
    %1286 = vmatpush2.bf16.msra.mxu0 0
    %1287 = vmatprep.subr.bf16.mxu0 0
    %1288 = vmatpush2.bf16.msra.mxu0 0
    %1289 = vmatprep.subr.bf16.mxu0 0
    %1290 = vmatpush2.bf16.msra.mxu0 0
    %1291 = vmatprep.subr.bf16.mxu0 0
    %1292 = vmatpush2.bf16.msra.mxu0 0
    %1293 = vmatprep.subr.bf16.mxu0 0
    %1294 = vmatpush2.bf16.msra.mxu0 0
    %1295 = vmatprep.subr.bf16.mxu0 0
    %1296 = vmatpush2.bf16.msra.mxu0 0
    %1297 = vmatprep.mubr.bf16.mxu0 0
    %1298 = vmatmul.mubr.bf16.gmra.mxu0 %v1260
    %v1299 = vpop.f32.mrf.mxu0
    %v1300 = vadd.f32 0.0, %v1299
    %v1301 = vpop.f32.mrf.mxu0
    %v1302 = vpop.f32.mrf.mxu0
    %v1303 = vpop.f32.mrf.mxu0
    %1304 = vdwg.mxu0
    %v1306 = vsel %vm1023, %v1116, 0
    %v1309 = vsel %vm1123, %v647, 0
    %1311 = vmatprep.subr.bf16.mxu0 0
    %1312 = vmatpush1.bf16.msra.mxu0 0
    %1313 = vmatprep.subr.bf16.mxu0 0
    %1314 = vmatpush1.bf16.msra.mxu0 0
    %1315 = vmatprep.subr.bf16.mxu0 0
    %1316 = vmatpush1.bf16.msra.mxu0 0
    %1317 = vmatprep.subr.bf16.mxu0 0
    %1318 = vmatpush1.bf16.msra.mxu0 0
    %1319 = vmatprep.subr.bf16.mxu0 0
    %1320 = vmatpush1.bf16.msra.mxu0 0
    %1321 = vmatprep.subr.bf16.mxu0 0
    %1322 = vmatpush1.bf16.msra.mxu0 0
    %1323 = vmatprep.subr.bf16.mxu0 0
    %1324 = vmatpush1.bf16.msra.mxu0 0
    %1325 = vmatprep.subr.bf16.mxu0 0
    %1326 = vmatpush1.bf16.msra.mxu0 %v1309
    %1327 = vmatprep.subr.bf16.mxu0 0
    %1328 = vmatpush2.bf16.msra.mxu0 0
    %1329 = vmatprep.subr.bf16.mxu0 0
    %1330 = vmatpush2.bf16.msra.mxu0 0
    %1331 = vmatprep.subr.bf16.mxu0 0
    %1332 = vmatpush2.bf16.msra.mxu0 0
    %1333 = vmatprep.subr.bf16.mxu0 0
    %1334 = vmatpush2.bf16.msra.mxu0 0
    %1335 = vmatprep.subr.bf16.mxu0 0
    %1336 = vmatpush2.bf16.msra.mxu0 0
    %1337 = vmatprep.subr.bf16.mxu0 0
    %1338 = vmatpush2.bf16.msra.mxu0 0
    %1339 = vmatprep.subr.bf16.mxu0 0
    %1340 = vmatpush2.bf16.msra.mxu0 0
    %1341 = vmatprep.subr.bf16.mxu0 0
    %1342 = vmatpush2.bf16.msra.mxu0 0
    %1343 = vmatprep.mubr.bf16.mxu0 0
    %1344 = vmatmul.mubr.bf16.gmra.mxu0 %v1306
    %v1345 = vpop.f32.mrf.mxu0
    %v1346 = vadd.f32 0.0, %v1345
    %v1347 = vpop.f32.mrf.mxu0
    %v1348 = vpop.f32.mrf.mxu0
    %v1349 = vpop.f32.mrf.mxu0
    %1350 = vdwg.mxu0
    %v1352 = vsel %vm1023, %v1117, 0
    %v1355 = vsel %vm1123, %v649, 0
    %1357 = vmatprep.subr.bf16.mxu0 0
    %1358 = vmatpush1.bf16.msra.mxu0 0
    %1359 = vmatprep.subr.bf16.mxu0 0
    %1360 = vmatpush1.bf16.msra.mxu0 0
    %1361 = vmatprep.subr.bf16.mxu0 0
    %1362 = vmatpush1.bf16.msra.mxu0 0
    %1363 = vmatprep.subr.bf16.mxu0 0
    %1364 = vmatpush1.bf16.msra.mxu0 0
    %1365 = vmatprep.subr.bf16.mxu0 0
    %1366 = vmatpush1.bf16.msra.mxu0 0
    %1367 = vmatprep.subr.bf16.mxu0 0
    %1368 = vmatpush1.bf16.msra.mxu0 0
    %1369 = vmatprep.subr.bf16.mxu0 0
    %1370 = vmatpush1.bf16.msra.mxu0 0
    %1371 = vmatprep.subr.bf16.mxu0 0
    %1372 = vmatpush1.bf16.msra.mxu0 %v1355
    %1373 = vmatprep.subr.bf16.mxu0 0
    %1374 = vmatpush2.bf16.msra.mxu0 0
    %1375 = vmatprep.subr.bf16.mxu0 0
    %1376 = vmatpush2.bf16.msra.mxu0 0
    %1377 = vmatprep.subr.bf16.mxu0 0
    %1378 = vmatpush2.bf16.msra.mxu0 0
    %1379 = vmatprep.subr.bf16.mxu0 0
    %1380 = vmatpush2.bf16.msra.mxu0 0
    %1381 = vmatprep.subr.bf16.mxu0 0
    %1382 = vmatpush2.bf16.msra.mxu0 0
    %1383 = vmatprep.subr.bf16.mxu0 0
    %1384 = vmatpush2.bf16.msra.mxu0 0
    %1385 = vmatprep.subr.bf16.mxu0 0
    %1386 = vmatpush2.bf16.msra.mxu0 0
    %1387 = vmatprep.subr.bf16.mxu0 0
    %1388 = vmatpush2.bf16.msra.mxu0 0
    %1389 = vmatprep.mubr.bf16.mxu0 0
    %1390 = vmatmul.mubr.bf16.gmra.mxu0 %v1352
    %v1391 = vpop.f32.mrf.mxu0
    %v1392 = vadd.f32 0.0, %v1391
    %v1393 = vpop.f32.mrf.mxu0
    %v1394 = vpop.f32.mrf.mxu0
    %v1395 = vpop.f32.mrf.mxu0
    %1396 = vdwg.mxu0
    %v1398 = vsel %vm1023, %v1118, 0
    %v1401 = vsel %vm1123, %v651, 0
    %1403 = vmatprep.subr.bf16.mxu0 0
    %1404 = vmatpush1.bf16.msra.mxu0 0
    %1405 = vmatprep.subr.bf16.mxu0 0
    %1406 = vmatpush1.bf16.msra.mxu0 0
    %1407 = vmatprep.subr.bf16.mxu0 0
    %1408 = vmatpush1.bf16.msra.mxu0 0
    %1409 = vmatprep.subr.bf16.mxu0 0
    %1410 = vmatpush1.bf16.msra.mxu0 0
    %1411 = vmatprep.subr.bf16.mxu0 0
    %1412 = vmatpush1.bf16.msra.mxu0 0
    %1413 = vmatprep.subr.bf16.mxu0 0
    %1414 = vmatpush1.bf16.msra.mxu0 0
    %1415 = vmatprep.subr.bf16.mxu0 0
    %1416 = vmatpush1.bf16.msra.mxu0 0
    %1417 = vmatprep.subr.bf16.mxu0 0
    %1418 = vmatpush1.bf16.msra.mxu0 %v1401
    %1419 = vmatprep.subr.bf16.mxu0 0
    %1420 = vmatpush2.bf16.msra.mxu0 0
    %1421 = vmatprep.subr.bf16.mxu0 0
    %1422 = vmatpush2.bf16.msra.mxu0 0
    %1423 = vmatprep.subr.bf16.mxu0 0
    %1424 = vmatpush2.bf16.msra.mxu0 0
    %1425 = vmatprep.subr.bf16.mxu0 0
    %1426 = vmatpush2.bf16.msra.mxu0 0
    %1427 = vmatprep.subr.bf16.mxu0 0
    %1428 = vmatpush2.bf16.msra.mxu0 0
    %1429 = vmatprep.subr.bf16.mxu0 0
    %1430 = vmatpush2.bf16.msra.mxu0 0
    %1431 = vmatprep.subr.bf16.mxu0 0
    %1432 = vmatpush2.bf16.msra.mxu0 0
    %1433 = vmatprep.subr.bf16.mxu0 0
    %1434 = vmatpush2.bf16.msra.mxu0 0
    %1435 = vmatprep.mubr.bf16.mxu0 0
    %1436 = vmatmul.mubr.bf16.gmra.mxu0 %v1398
    %v1437 = vpop.f32.mrf.mxu0
    %v1438 = vadd.f32 0.0, %v1437
    %v1439 = vpop.f32.mrf.mxu0
    %v1440 = vpop.f32.mrf.mxu0
    %v1441 = vpop.f32.mrf.mxu0
    %1442 = vdwg.mxu0
    %v1444 = vsel %vm1023, %v1119, 0
    %v1447 = vsel %vm1123, %v653, 0
    %1449 = vmatprep.subr.bf16.mxu0 0
    %1450 = vmatpush1.bf16.msra.mxu0 0
    %1451 = vmatprep.subr.bf16.mxu0 0
    %1452 = vmatpush1.bf16.msra.mxu0 0
    %1453 = vmatprep.subr.bf16.mxu0 0
    %1454 = vmatpush1.bf16.msra.mxu0 0
    %1455 = vmatprep.subr.bf16.mxu0 0
    %1456 = vmatpush1.bf16.msra.mxu0 0
    %1457 = vmatprep.subr.bf16.mxu0 0
    %1458 = vmatpush1.bf16.msra.mxu0 0
    %1459 = vmatprep.subr.bf16.mxu0 0
    %1460 = vmatpush1.bf16.msra.mxu0 0
    %1461 = vmatprep.subr.bf16.mxu0 0
    %1462 = vmatpush1.bf16.msra.mxu0 0
    %1463 = vmatprep.subr.bf16.mxu0 0
    %1464 = vmatpush1.bf16.msra.mxu0 %v1447
    %1465 = vmatprep.subr.bf16.mxu0 0
    %1466 = vmatpush2.bf16.msra.mxu0 0
    %1467 = vmatprep.subr.bf16.mxu0 0
    %1468 = vmatpush2.bf16.msra.mxu0 0
    %1469 = vmatprep.subr.bf16.mxu0 0
    %1470 = vmatpush2.bf16.msra.mxu0 0
    %1471 = vmatprep.subr.bf16.mxu0 0
    %1472 = vmatpush2.bf16.msra.mxu0 0
    %1473 = vmatprep.subr.bf16.mxu0 0
    %1474 = vmatpush2.bf16.msra.mxu0 0
    %1475 = vmatprep.subr.bf16.mxu0 0
    %1476 = vmatpush2.bf16.msra.mxu0 0
    %1477 = vmatprep.subr.bf16.mxu0 0
    %1478 = vmatpush2.bf16.msra.mxu0 0
    %1479 = vmatprep.subr.bf16.mxu0 0
    %1480 = vmatpush2.bf16.msra.mxu0 0
    %1481 = vmatprep.mubr.bf16.mxu0 0
    %1482 = vmatmul.mubr.bf16.gmra.mxu0 %v1444
    %v1483 = vpop.f32.mrf.mxu0
    %v1484 = vadd.f32 0.0, %v1483
    %v1485 = vpop.f32.mrf.mxu0
    %v1486 = vpop.f32.mrf.mxu0
    %v1487 = vpop.f32.mrf.mxu0
    %1488 = vdwg.mxu0
    %v1489 = vpack.c.bf16 %v1162, %v1162
    %v1490 = vpack.c.bf16 %v1208, %v1208
    %v1491 = vpack.c.bf16 %v1254, %v1254
    %v1492 = vpack.c.bf16 %v1300, %v1300
    %v1493 = vpack.c.bf16 %v1346, %v1346
    %v1494 = vpack.c.bf16 %v1392, %v1392
    %v1495 = vpack.c.bf16 %v1438, %v1438
    %v1496 = vpack.c.bf16 %v1484, %v1484
    %1499 = vrot.lane.b32.xlu0 %v1491, 32
    %v1500 = vpop.permute.xlu0 %1499
    %1501 = vrot.lane.b32.xlu0 %v1492, 32
    %v1502 = vpop.permute.xlu0 %1501
    %1505 = vrot.lane.b32.xlu0 %v1493, 64
    %v1506 = vpop.permute.xlu0 %1505
    %1507 = vrot.lane.b32.xlu0 %v1494, 64
    %v1508 = vpop.permute.xlu0 %1507
    %1511 = vrot.lane.b32.xlu0 %v1495, 96
    %v1512 = vpop.permute.xlu0 %1511
    %1513 = vrot.lane.b32.xlu0 %v1496, 96
    %v1514 = vpop.permute.xlu0 %1513
    %v1517 = vsel %vm654, %v1489, %v1500
    %v1520 = vsel %vm654, %v1490, %v1502
    %v1522 = vsel %vm290, %v1517, %v1506
    %v1524 = vsel %vm290, %v1520, %v1508
    %vm1525 = vcmask 785408
    %v1527 = vsel %vm1525, %v1522, %v1512
    %v1529 = vsel %vm1525, %v1524, %v1514
    %v1530 = vld [vmem:[#allocation7] sm:$0xf]
    %v1531 = vld [vmem:[#allocation7 + $0x4] sm:$0xf]
    %v1532 = vld [vmem:[#allocation7 + $0x8] sm:$0xf]
    %v1533 = vld [vmem:[#allocation7 + $0xc] sm:$0xf]
    %v1534 = vld [vmem:[#allocation7 + $0x10] sm:$0xf]
    %v1535 = vld [vmem:[#allocation7 + $0x14] sm:$0xf]
    %v1536 = vld [vmem:[#allocation7 + $0x18] sm:$0xf]
    %v1537 = vld [vmem:[#allocation7 + $0x1c] sm:$0xf]
    %v1538 = vld [vmem:[#allocation7 + $0x20] sm:$0xf]
    %v1539 = vld [vmem:[#allocation7 + $0x24] sm:$0xf]
    %v1540 = vld [vmem:[#allocation7 + $0x28] sm:$0xf]
    %v1541 = vld [vmem:[#allocation7 + $0x2c] sm:$0xf]
    %v1542 = vld [vmem:[#allocation7 + $0x30] sm:$0xf]
    %v1543 = vld [vmem:[#allocation7 + $0x34] sm:$0xf]
    %v1544 = vld [vmem:[#allocation7 + $0x38] sm:$0xf]
    %v1545 = vld [vmem:[#allocation7 + $0x3c] sm:$0xf]
    %v1546 = vld [vmem:[%s6] sm:$0x1]
    %v1548 = vlaneseq
    %v1549 = vshrl.u32 %v1548, 7
    %v1550 = vsub.s32 0, %v1549
    %v1551 = vrot.slane %v1546, %v1550
    %v1555 = vunpack.c.l.b16 %v1527
    %v1556 = vunpack.c.l.b16 %v1529
    %v1557 = vpack.c.b16 %v1556, %v1555
    %v1575 = vunpack.c.l.b16 %v1530
    %v1576 = vunpack.c.l.b16 %v1531
    %v1577 = vunpack.c.l.b16 %v1532
    %v1578 = vunpack.c.l.b16 %v1533
    %v1579 = vunpack.c.l.b16 %v1534
    %v1580 = vunpack.c.l.b16 %v1535
    %v1581 = vunpack.c.l.b16 %v1536
    %v1582 = vunpack.c.l.b16 %v1537
    %v1583 = vunpack.c.l.b16 %v1538
    %v1584 = vunpack.c.l.b16 %v1539
    %v1585 = vunpack.c.l.b16 %v1540
    %v1586 = vunpack.c.l.b16 %v1541
    %v1587 = vunpack.c.l.b16 %v1542
    %v1588 = vunpack.c.l.b16 %v1543
    %v1589 = vunpack.c.l.b16 %v1544
    %v1590 = vunpack.c.l.b16 %v1545
    %v1591 = vpack.c.b16 %v1576, %v1575
    %v1592 = vpack.c.b16 %v1578, %v1577
    %v1593 = vpack.c.b16 %v1580, %v1579
    %v1594 = vpack.c.b16 %v1582, %v1581
    %v1595 = vpack.c.b16 %v1584, %v1583
    %v1596 = vpack.c.b16 %v1586, %v1585
    %v1597 = vpack.c.b16 %v1588, %v1587
    %v1598 = vpack.c.b16 %v1590, %v1589
    %1607 = vmatprep.subr.bf16.mxu0 0
    %1608 = vmatpush1.bf16.msra.mxu0 %v1598
    %1609 = vmatprep.subr.bf16.mxu0 0
    %1610 = vmatpush1.bf16.msra.mxu0 %v1597
    %1611 = vmatprep.subr.bf16.mxu0 0
    %1612 = vmatpush1.bf16.msra.mxu0 %v1596
    %1613 = vmatprep.subr.bf16.mxu0 0
    %1614 = vmatpush1.bf16.msra.mxu0 %v1595
    %1615 = vmatprep.subr.bf16.mxu0 0
    %1616 = vmatpush1.bf16.msra.mxu0 %v1594
    %1617 = vmatprep.subr.bf16.mxu0 0
    %1618 = vmatpush1.bf16.msra.mxu0 %v1593
    %1619 = vmatprep.subr.bf16.mxu0 0
    %1620 = vmatpush1.bf16.msra.mxu0 %v1592
    %1621 = vmatprep.subr.bf16.mxu0 0
    %1622 = vmatpush1.bf16.msra.mxu0 %v1591
    %1623 = vmatprep.subr.bf16.mxu0 0
    %1624 = vmatpush2.bf16.msra.mxu0 0
    %1625 = vmatprep.subr.bf16.mxu0 0
    %1626 = vmatpush2.bf16.msra.mxu0 0
    %1627 = vmatprep.subr.bf16.mxu0 0
    %1628 = vmatpush2.bf16.msra.mxu0 0
    %1629 = vmatprep.subr.bf16.mxu0 0
    %1630 = vmatpush2.bf16.msra.mxu0 0
    %1631 = vmatprep.subr.bf16.mxu0 0
    %1632 = vmatpush2.bf16.msra.mxu0 0
    %1633 = vmatprep.subr.bf16.mxu0 0
    %1634 = vmatpush2.bf16.msra.mxu0 0
    %1635 = vmatprep.subr.bf16.mxu0 0
    %1636 = vmatpush2.bf16.msra.mxu0 0
    %1637 = vmatprep.subr.bf16.mxu0 0
    %1638 = vmatpush2.bf16.msra.mxu0 0
    %1639 = vmatprep.mubr.bf16.mxu0 0
    %1640 = vmatmul.mubr.bf16.gmra.mxu0 %v1557
    %v1641 = vpop.f32.mrf.mxu0
    %v1642 = vadd.f32 %v1551, %v1641
    %v1643 = vpop.f32.mrf.mxu0
    %v1644 = vpop.f32.mrf.mxu0
    %v1645 = vadd.f32 %v1551, %v1644
    %v1646 = vpop.f32.mrf.mxu0
    %1647 = vdwg.mxu0
    %v1648 = vadd.f32 %v336, %v1642
    %v1649 = vadd.f32 %v337, %v1645
    %v1650 = vld [vmem:[%s7] sm:$0x1]
    %v1651 = vld [vmem:[%s8] sm:$0x1]
    %1652 = vadd.xlane.f32.xlu0 %v1648
    %v1653 = vpop.xlane.xlu0 %1652
    %1654 = vadd.xlane.f32.xlu0 %v1649
    %v1655 = vpop.xlane.xlu0 %1654
    %v1656 = vrcp.pop 128.0
    %v1657 = vmul.f32 %v1653, %v1656
    %v1658 = vmul.f32 %v1655, %v1656
    %v1659 = vmul.f32 %v1648, %v1648
    %v1660 = vmul.f32 %v1649, %v1649
    %1661 = vadd.xlane.f32.xlu0 %v1659
    %v1662 = vpop.xlane.xlu0 %1661
    %1663 = vadd.xlane.f32.xlu0 %v1660
    %v1664 = vpop.xlane.xlu0 %1663
    %v1665 = vmul.f32 %v1662, %v1656
    %v1666 = vmul.f32 %v1664, %v1656
    %v1667 = vmul.f32 %v1657, %v1657
    %v1668 = vmul.f32 %v1658, %v1658
    %v1669 = vsub.f32 %v1665, %v1667
    %v1670 = vsub.f32 %v1666, %v1668
    %v1671 = vsub.f32 %v1648, %v1657
    %v1672 = vsub.f32 %v1649, %v1658
    %v1673 = vadd.f32 %v1669, 1e-05
    %v1674 = vadd.f32 %v1670, 1e-05
    %v1675 = vrsqrt.pop %v1673
    %v1676 = vrsqrt.pop %v1674
    %v1677 = vmul.f32 %v1671, %v1675
    %v1678 = vmul.f32 %v1672, %v1676
    %v1680 = vlaneseq
    %v1681 = vshrl.u32 %v1680, 7
    %v1682 = vsub.s32 0, %v1681
    %v1683 = vrot.slane %v1650, %v1682
    %v1685 = vmul.f32 %v1677, %v1683
    %v1686 = vmul.f32 %v1678, %v1683
    %v1688 = vlaneseq
    %v1689 = vshrl.u32 %v1688, 7
    %v1690 = vsub.s32 0, %v1689
    %v1691 = vrot.slane %v1651, %v1690
    %v1693 = vadd.f32 %v1685, %v1691
    %v1694 = vadd.f32 %v1686, %v1691
    %v1695 = vpack.c.bf16 %v1694, %v1693
    %v1696 = vld [vmem:[#allocation8] sm:$0xf]
    %v1697 = vld [vmem:[#allocation8 + $0x4] sm:$0xf]
    %v1698 = vld [vmem:[#allocation8 + $0x8] sm:$0xf]
    %v1699 = vld [vmem:[#allocation8 + $0xc] sm:$0xf]
    %v1700 = vld [vmem:[#allocation8 + $0x10] sm:$0xf]
    %v1701 = vld [vmem:[#allocation8 + $0x14] sm:$0xf]
    %v1702 = vld [vmem:[#allocation8 + $0x18] sm:$0xf]
    %v1703 = vld [vmem:[#allocation8 + $0x1c] sm:$0xf]
    %v1704 = vld [vmem:[#allocation8 + $0x20] sm:$0xf]
    %v1705 = vld [vmem:[#allocation8 + $0x24] sm:$0xf]
    %v1706 = vld [vmem:[#allocation8 + $0x28] sm:$0xf]
    %v1707 = vld [vmem:[#allocation8 + $0x2c] sm:$0xf]
    %v1708 = vld [vmem:[#allocation8 + $0x30] sm:$0xf]
    %v1709 = vld [vmem:[#allocation8 + $0x34] sm:$0xf]
    %v1710 = vld [vmem:[#allocation8 + $0x38] sm:$0xf]
    %v1711 = vld [vmem:[#allocation8 + $0x3c] sm:$0xf]
    %v1712 = vld [vmem:[#allocation10] sm:$0x1]
    %v1714 = vlaneseq
    %v1715 = vshrl.u32 %v1714, 7
    %v1716 = vsub.s32 0, %v1715
    %v1717 = vrot.slane %v1712, %v1716
    %v1735 = vunpack.c.l.b16 %v1696
    %v1736 = vunpack.c.l.b16 %v1697
    %v1737 = vunpack.c.l.b16 %v1698
    %v1738 = vunpack.c.l.b16 %v1699
    %v1739 = vunpack.c.l.b16 %v1700
    %v1740 = vunpack.c.l.b16 %v1701
    %v1741 = vunpack.c.l.b16 %v1702
    %v1742 = vunpack.c.l.b16 %v1703
    %v1743 = vunpack.c.l.b16 %v1704
    %v1744 = vunpack.c.l.b16 %v1705
    %v1745 = vunpack.c.l.b16 %v1706
    %v1746 = vunpack.c.l.b16 %v1707
    %v1747 = vunpack.c.l.b16 %v1708
    %v1748 = vunpack.c.l.b16 %v1709
    %v1749 = vunpack.c.l.b16 %v1710
    %v1750 = vunpack.c.l.b16 %v1711
    %v1751 = vpack.c.b16 %v1736, %v1735
    %v1752 = vpack.c.b16 %v1738, %v1737
    %v1753 = vpack.c.b16 %v1740, %v1739
    %v1754 = vpack.c.b16 %v1742, %v1741
    %v1755 = vpack.c.b16 %v1744, %v1743
    %v1756 = vpack.c.b16 %v1746, %v1745
    %v1757 = vpack.c.b16 %v1748, %v1747
    %v1758 = vpack.c.b16 %v1750, %v1749
    %1767 = vmatprep.subr.bf16.mxu0 0
    %1768 = vmatpush1.bf16.msra.mxu0 %v1758
    %1769 = vmatprep.subr.bf16.mxu0 0
    %1770 = vmatpush1.bf16.msra.mxu0 %v1757
    %1771 = vmatprep.subr.bf16.mxu0 0
    %1772 = vmatpush1.bf16.msra.mxu0 %v1756
    %1773 = vmatprep.subr.bf16.mxu0 0
    %1774 = vmatpush1.bf16.msra.mxu0 %v1755
    %1775 = vmatprep.subr.bf16.mxu0 0
    %1776 = vmatpush1.bf16.msra.mxu0 %v1754
    %1777 = vmatprep.subr.bf16.mxu0 0
    %1778 = vmatpush1.bf16.msra.mxu0 %v1753
    %1779 = vmatprep.subr.bf16.mxu0 0
    %1780 = vmatpush1.bf16.msra.mxu0 %v1752
    %1781 = vmatprep.subr.bf16.mxu0 0
    %1782 = vmatpush1.bf16.msra.mxu0 %v1751
    %1783 = vmatprep.subr.bf16.mxu0 0
    %1784 = vmatpush2.bf16.msra.mxu0 0
    %1785 = vmatprep.subr.bf16.mxu0 0
    %1786 = vmatpush2.bf16.msra.mxu0 0
    %1787 = vmatprep.subr.bf16.mxu0 0
    %1788 = vmatpush2.bf16.msra.mxu0 0
    %1789 = vmatprep.subr.bf16.mxu0 0
    %1790 = vmatpush2.bf16.msra.mxu0 0
    %1791 = vmatprep.subr.bf16.mxu0 0
    %1792 = vmatpush2.bf16.msra.mxu0 0
    %1793 = vmatprep.subr.bf16.mxu0 0
    %1794 = vmatpush2.bf16.msra.mxu0 0
    %1795 = vmatprep.subr.bf16.mxu0 0
    %1796 = vmatpush2.bf16.msra.mxu0 0
    %1797 = vmatprep.subr.bf16.mxu0 0
    %1798 = vmatpush2.bf16.msra.mxu0 0
    %1799 = vmatprep.mubr.bf16.mxu0 0
    %1800 = vmatmul.mubr.bf16.gmra.mxu0 %v1695
    %v1801 = vpop.f32.mrf.mxu0
    %v1802 = vadd.f32 %v1717, %v1801
    %v1803 = vpop.f32.mrf.mxu0
    %v1804 = vpop.f32.mrf.mxu0
    %v1805 = vadd.f32 %v1717, %v1804
    %v1806 = vpop.f32.mrf.mxu0
    %1807 = vdwg.mxu0
    %v1808 = vmax.f32 %v1802, 0.0
    %v1809 = vmax.f32 %v1805, 0.0
    %v1810 = vpack.c.bf16 %v1809, %v1808
    %v1811 = vld [vmem:[#allocation11] sm:$0xf]
    %v1812 = vld [vmem:[#allocation11 + $0x4] sm:$0xf]
    %v1813 = vld [vmem:[#allocation11 + $0x8] sm:$0xf]
    %v1814 = vld [vmem:[#allocation11 + $0xc] sm:$0xf]
    %v1815 = vld [vmem:[#allocation11 + $0x10] sm:$0xf]
    %v1816 = vld [vmem:[#allocation11 + $0x14] sm:$0xf]
    %v1817 = vld [vmem:[#allocation11 + $0x18] sm:$0xf]
    %v1818 = vld [vmem:[#allocation11 + $0x1c] sm:$0xf]
    %v1819 = vld [vmem:[#allocation11 + $0x20] sm:$0xf]
    %v1820 = vld [vmem:[#allocation11 + $0x24] sm:$0xf]
    %v1821 = vld [vmem:[#allocation11 + $0x28] sm:$0xf]
    %v1822 = vld [vmem:[#allocation11 + $0x2c] sm:$0xf]
    %v1823 = vld [vmem:[#allocation11 + $0x30] sm:$0xf]
    %v1824 = vld [vmem:[#allocation11 + $0x34] sm:$0xf]
    %v1825 = vld [vmem:[#allocation11 + $0x38] sm:$0xf]
    %v1826 = vld [vmem:[#allocation11 + $0x3c] sm:$0xf]
    %v1827 = vld [vmem:[#allocation13] sm:$0x1]
    %v1829 = vlaneseq
    %v1830 = vshrl.u32 %v1829, 7
    %v1831 = vsub.s32 0, %v1830
    %v1832 = vrot.slane %v1827, %v1831
    %v1850 = vunpack.c.l.b16 %v1811
    %v1851 = vunpack.c.l.b16 %v1812
    %v1852 = vunpack.c.l.b16 %v1813
    %v1853 = vunpack.c.l.b16 %v1814
    %v1854 = vunpack.c.l.b16 %v1815
    %v1855 = vunpack.c.l.b16 %v1816
    %v1856 = vunpack.c.l.b16 %v1817
    %v1857 = vunpack.c.l.b16 %v1818
    %v1858 = vunpack.c.l.b16 %v1819
    %v1859 = vunpack.c.l.b16 %v1820
    %v1860 = vunpack.c.l.b16 %v1821
    %v1861 = vunpack.c.l.b16 %v1822
    %v1862 = vunpack.c.l.b16 %v1823
    %v1863 = vunpack.c.l.b16 %v1824
    %v1864 = vunpack.c.l.b16 %v1825
    %v1865 = vunpack.c.l.b16 %v1826
    %v1866 = vpack.c.b16 %v1851, %v1850
    %v1867 = vpack.c.b16 %v1853, %v1852
    %v1868 = vpack.c.b16 %v1855, %v1854
    %v1869 = vpack.c.b16 %v1857, %v1856
    %v1870 = vpack.c.b16 %v1859, %v1858
    %v1871 = vpack.c.b16 %v1861, %v1860
    %v1872 = vpack.c.b16 %v1863, %v1862
    %v1873 = vpack.c.b16 %v1865, %v1864
    %1882 = vmatprep.subr.bf16.mxu0 0
    %1883 = vmatpush1.bf16.msra.mxu0 %v1873
    %1884 = vmatprep.subr.bf16.mxu0 0
    %1885 = vmatpush1.bf16.msra.mxu0 %v1872
    %1886 = vmatprep.subr.bf16.mxu0 0
    %1887 = vmatpush1.bf16.msra.mxu0 %v1871
    %1888 = vmatprep.subr.bf16.mxu0 0
    %1889 = vmatpush1.bf16.msra.mxu0 %v1870
    %1890 = vmatprep.subr.bf16.mxu0 0
    %1891 = vmatpush1.bf16.msra.mxu0 %v1869
    %1892 = vmatprep.subr.bf16.mxu0 0
    %1893 = vmatpush1.bf16.msra.mxu0 %v1868
    %1894 = vmatprep.subr.bf16.mxu0 0
    %1895 = vmatpush1.bf16.msra.mxu0 %v1867
    %1896 = vmatprep.subr.bf16.mxu0 0
    %1897 = vmatpush1.bf16.msra.mxu0 %v1866
    %1898 = vmatprep.subr.bf16.mxu0 0
    %1899 = vmatpush2.bf16.msra.mxu0 0
    %1900 = vmatprep.subr.bf16.mxu0 0
    %1901 = vmatpush2.bf16.msra.mxu0 0
    %1902 = vmatprep.subr.bf16.mxu0 0
    %1903 = vmatpush2.bf16.msra.mxu0 0
    %1904 = vmatprep.subr.bf16.mxu0 0
    %1905 = vmatpush2.bf16.msra.mxu0 0
    %1906 = vmatprep.subr.bf16.mxu0 0
    %1907 = vmatpush2.bf16.msra.mxu0 0
    %1908 = vmatprep.subr.bf16.mxu0 0
    %1909 = vmatpush2.bf16.msra.mxu0 0
    %1910 = vmatprep.subr.bf16.mxu0 0
    %1911 = vmatpush2.bf16.msra.mxu0 0
    %1912 = vmatprep.subr.bf16.mxu0 0
    %1913 = vmatpush2.bf16.msra.mxu0 0
    %1914 = vmatprep.mubr.bf16.mxu0 0
    %1915 = vmatmul.mubr.bf16.gmra.mxu0 %v1810
    %v1916 = vpop.f32.mrf.mxu0
    %v1917 = vadd.f32 %v1832, %v1916
    %v1918 = vpop.f32.mrf.mxu0
    %v1919 = vpop.f32.mrf.mxu0
    %v1920 = vadd.f32 %v1832, %v1919
    %v1921 = vpop.f32.mrf.mxu0
    %1922 = vdwg.mxu0
    %v1923 = vadd.f32 %v1693, %v1917
    %v1924 = vadd.f32 %v1694, %v1920
    %v1925 = vld [vmem:[#allocation14] sm:$0x1]
    %v1926 = vld [vmem:[#allocation16] sm:$0x1]
    %1927 = vadd.xlane.f32.xlu0 %v1923
    %v1928 = vpop.xlane.xlu0 %1927
    %1929 = vadd.xlane.f32.xlu0 %v1924
    %v1930 = vpop.xlane.xlu0 %1929
    %v1931 = vmul.f32 %v1928, %v1656
    %v1932 = vmul.f32 %v1930, %v1656
    %v1933 = vmul.f32 %v1923, %v1923
    %v1934 = vmul.f32 %v1924, %v1924
    %1935 = vadd.xlane.f32.xlu0 %v1933
    %v1936 = vpop.xlane.xlu0 %1935
    %1937 = vadd.xlane.f32.xlu0 %v1934
    %v1938 = vpop.xlane.xlu0 %1937
    %v1939 = vmul.f32 %v1936, %v1656
    %v1940 = vmul.f32 %v1938, %v1656
    %v1941 = vmul.f32 %v1931, %v1931
    %v1942 = vmul.f32 %v1932, %v1932
    %v1943 = vsub.f32 %v1939, %v1941
    %v1944 = vsub.f32 %v1940, %v1942
    %v1945 = vsub.f32 %v1923, %v1931
    %v1946 = vsub.f32 %v1924, %v1932
    %v1947 = vadd.f32 %v1943, 1e-05
    %v1948 = vadd.f32 %v1944, 1e-05
    %v1949 = vrsqrt.pop %v1947
    %v1950 = vrsqrt.pop %v1948
    %v1951 = vmul.f32 %v1945, %v1949
    %v1952 = vmul.f32 %v1946, %v1950
    %v1954 = vlaneseq
    %v1955 = vshrl.u32 %v1954, 7
    %v1956 = vsub.s32 0, %v1955
    %v1957 = vrot.slane %v1925, %v1956
    %v1959 = vmul.f32 %v1951, %v1957
    %v1960 = vmul.f32 %v1952, %v1957
    %v1962 = vlaneseq
    %v1963 = vshrl.u32 %v1962, 7
    %v1964 = vsub.s32 0, %v1963
    %v1965 = vrot.slane %v1926, %v1964
    %v1967 = vadd.f32 %v1959, %v1965
    %v1968 = vadd.f32 %v1960, %v1965
    %v1969 = vpack.c.bf16 %v1968, %v1967
    %s1970 = scalar_lea.vmem [#allocation5], 192
    %v1971 = vld [vmem:[%s1970] sm:$0xff]
    %v1972 = vld [vmem:[%s1970 + $0x8] sm:$0xf]
    %v1973 = vld [vmem:[%s1970 + $0xc] sm:$0xff]
    %v1974 = vld [vmem:[%s1970 + $0x14] sm:$0xf]
    %v1975 = vld [vmem:[%s1970 + $0x18] sm:$0xff]
    %v1976 = vld [vmem:[%s1970 + $0x20] sm:$0xf]
    %v1977 = vld [vmem:[%s1970 + $0x24] sm:$0xff]
    %v1978 = vld [vmem:[%s1970 + $0x2c] sm:$0xf]
    %v1979 = vld [vmem:[%s1970 + $0x30] sm:$0xff]
    %v1980 = vld [vmem:[%s1970 + $0x38] sm:$0xf]
    %v1981 = vld [vmem:[%s1970 + $0x3c] sm:$0xff]
    %v1982 = vld [vmem:[%s1970 + $0x44] sm:$0xf]
    %v1983 = vld [vmem:[%s1970 + $0x48] sm:$0xff]
    %v1984 = vld [vmem:[%s1970 + $0x50] sm:$0xf]
    %v1985 = vld [vmem:[%s1970 + $0x54] sm:$0xff]
    %v1986 = vld [vmem:[%s1970 + $0x5c] sm:$0xf]
    %v1987 = vld [vmem:[%s1970 + $0x60] sm:$0xff]
    %v1988 = vld [vmem:[%s1970 + $0x68] sm:$0xf]
    %v1989 = vld [vmem:[%s1970 + $0x6c] sm:$0xff]
    %v1990 = vld [vmem:[%s1970 + $0x74] sm:$0xf]
    %v1991 = vld [vmem:[%s1970 + $0x78] sm:$0xff]
    %v1992 = vld [vmem:[%s1970 + $0x80] sm:$0xf]
    %v1993 = vld [vmem:[%s1970 + $0x84] sm:$0xff]
    %v1994 = vld [vmem:[%s1970 + $0x8c] sm:$0xf]
    %v1995 = vld [vmem:[%s1970 + $0x90] sm:$0xff]
    %v1996 = vld [vmem:[%s1970 + $0x98] sm:$0xf]
    %v1997 = vld [vmem:[%s1970 + $0x9c] sm:$0xff]
    %v1998 = vld [vmem:[%s1970 + $0xa4] sm:$0xf]
    %v1999 = vld [vmem:[%s1970 + $0xa8] sm:$0xff]
    %v2000 = vld [vmem:[%s1970 + $0xb0] sm:$0xf]
    %v2001 = vld [vmem:[%s1970 + $0xb4] sm:$0xff]
    %v2002 = vld [vmem:[%s1970 + $0xbc] sm:$0xf]
    %s2003 = scalar_lea.vmem %s4, 3
    %v2004 = vld [vmem:[%s2003] sm:$0x7]
    %v2006 = vlaneseq
    %v2007 = vshrl.u32 %v2006, 7
    %v2008 = vsub.s32 0, %v2007
    %v2009 = vrot.slane %v2004, %v2008
    %v2010 = vlaneseq
    %v2011 = vshrl.u32 %v2010, 7
    %v2012 = vsub.s32 1, %v2011
    %v2013 = vrot.slane %v2004, %v2012
    %v2014 = vlaneseq
    %v2015 = vshrl.u32 %v2014, 7
    %v2016 = vsub.s32 2, %v2015
    %v2017 = vrot.slane %v2004, %v2016
    %v2053 = vunpack.c.l.b16 %v1971
    %v2054 = vunpack.c.h.b16 %v1971
    %v2055 = vunpack.c.l.b16 %v1972
    %v2056 = vunpack.c.l.b16 %v1973
    %v2057 = vunpack.c.h.b16 %v1973
    %v2058 = vunpack.c.l.b16 %v1974
    %v2059 = vunpack.c.l.b16 %v1975
    %v2060 = vunpack.c.h.b16 %v1975
    %v2061 = vunpack.c.l.b16 %v1976
    %v2062 = vunpack.c.l.b16 %v1977
    %v2063 = vunpack.c.h.b16 %v1977
    %v2064 = vunpack.c.l.b16 %v1978
    %v2065 = vunpack.c.l.b16 %v1979
    %v2066 = vunpack.c.h.b16 %v1979
    %v2067 = vunpack.c.l.b16 %v1980
    %v2068 = vunpack.c.l.b16 %v1981
    %v2069 = vunpack.c.h.b16 %v1981
    %v2070 = vunpack.c.l.b16 %v1982
    %v2071 = vunpack.c.l.b16 %v1983
    %v2072 = vunpack.c.h.b16 %v1983
    %v2073 = vunpack.c.l.b16 %v1984
    %v2074 = vunpack.c.l.b16 %v1985
    %v2075 = vunpack.c.h.b16 %v1985
    %v2076 = vunpack.c.l.b16 %v1986
    %v2077 = vunpack.c.l.b16 %v1987
    %v2078 = vunpack.c.h.b16 %v1987
    %v2079 = vunpack.c.l.b16 %v1988
    %v2080 = vunpack.c.l.b16 %v1989
    %v2081 = vunpack.c.h.b16 %v1989
    %v2082 = vunpack.c.l.b16 %v1990
    %v2083 = vunpack.c.l.b16 %v1991
    %v2084 = vunpack.c.h.b16 %v1991
    %v2085 = vunpack.c.l.b16 %v1992
    %v2086 = vunpack.c.l.b16 %v1993
    %v2087 = vunpack.c.h.b16 %v1993
    %v2088 = vunpack.c.l.b16 %v1994
    %v2089 = vunpack.c.l.b16 %v1995
    %v2090 = vunpack.c.h.b16 %v1995
    %v2091 = vunpack.c.l.b16 %v1996
    %v2092 = vunpack.c.l.b16 %v1997
    %v2093 = vunpack.c.h.b16 %v1997
    %v2094 = vunpack.c.l.b16 %v1998
    %v2095 = vunpack.c.l.b16 %v1999
    %v2096 = vunpack.c.h.b16 %v1999
    %v2097 = vunpack.c.l.b16 %v2000
    %v2098 = vunpack.c.l.b16 %v2001
    %v2099 = vunpack.c.h.b16 %v2001
    %v2100 = vunpack.c.l.b16 %v2002
    %v2101 = vpack.c.b16 %v2056, %v2053
    %v2102 = vpack.c.b16 %v2057, %v2054
    %v2103 = vpack.c.b16 %v2058, %v2055
    %v2104 = vpack.c.b16 %v2062, %v2059
    %v2105 = vpack.c.b16 %v2063, %v2060
    %v2106 = vpack.c.b16 %v2064, %v2061
    %v2107 = vpack.c.b16 %v2068, %v2065
    %v2108 = vpack.c.b16 %v2069, %v2066
    %v2109 = vpack.c.b16 %v2070, %v2067
    %v2110 = vpack.c.b16 %v2074, %v2071
    %v2111 = vpack.c.b16 %v2075, %v2072
    %v2112 = vpack.c.b16 %v2076, %v2073
    %v2113 = vpack.c.b16 %v2080, %v2077
    %v2114 = vpack.c.b16 %v2081, %v2078
    %v2115 = vpack.c.b16 %v2082, %v2079
    %v2116 = vpack.c.b16 %v2086, %v2083
    %v2117 = vpack.c.b16 %v2087, %v2084
    %v2118 = vpack.c.b16 %v2088, %v2085
    %v2119 = vpack.c.b16 %v2092, %v2089
    %v2120 = vpack.c.b16 %v2093, %v2090
    %v2121 = vpack.c.b16 %v2094, %v2091
    %v2122 = vpack.c.b16 %v2098, %v2095
    %v2123 = vpack.c.b16 %v2099, %v2096
    %v2124 = vpack.c.b16 %v2100, %v2097
    %2149 = vmatprep.subr.bf16.mxu0 %v2123
    %2150 = vmatpush1.bf16.msra.mxu0 %v2122
    %2151 = vmatprep.subr.bf16.mxu0 %v2120
    %2152 = vmatpush1.bf16.msra.mxu0 %v2119
    %2153 = vmatprep.subr.bf16.mxu0 %v2117
    %2154 = vmatpush1.bf16.msra.mxu0 %v2116
    %2155 = vmatprep.subr.bf16.mxu0 %v2114
    %2156 = vmatpush1.bf16.msra.mxu0 %v2113
    %2157 = vmatprep.subr.bf16.mxu0 %v2111
    %2158 = vmatpush1.bf16.msra.mxu0 %v2110
    %2159 = vmatprep.subr.bf16.mxu0 %v2108
    %2160 = vmatpush1.bf16.msra.mxu0 %v2107
    %2161 = vmatprep.subr.bf16.mxu0 %v2105
    %2162 = vmatpush1.bf16.msra.mxu0 %v2104
    %2163 = vmatprep.subr.bf16.mxu0 %v2102
    %2164 = vmatpush1.bf16.msra.mxu0 %v2101
    %2165 = vmatprep.subr.bf16.mxu0 0
    %2166 = vmatpush2.bf16.msra.mxu0 0
    %2167 = vmatprep.subr.bf16.mxu0 0
    %2168 = vmatpush2.bf16.msra.mxu0 0
    %2169 = vmatprep.subr.bf16.mxu0 0
    %2170 = vmatpush2.bf16.msra.mxu0 0
    %2171 = vmatprep.subr.bf16.mxu0 0
    %2172 = vmatpush2.bf16.msra.mxu0 0
    %2173 = vmatprep.subr.bf16.mxu0 0
    %2174 = vmatpush2.bf16.msra.mxu0 0
    %2175 = vmatprep.subr.bf16.mxu0 0
    %2176 = vmatpush2.bf16.msra.mxu0 0
    %2177 = vmatprep.subr.bf16.mxu0 0
    %2178 = vmatpush2.bf16.msra.mxu0 0
    %2179 = vmatprep.subr.bf16.mxu0 0
    %2180 = vmatpush2.bf16.msra.mxu0 0
    %2181 = vmatprep.mubr.bf16.mxu0 0
    %2182 = vmatmul.mubr.bf16.gmra.mxu0 %v1969
    %v2183 = vpop.f32.mrf.mxu0
    %v2184 = vadd.f32 %v2009, %v2183
    %v2185 = vpop.f32.mrf.mxu0
    %v2186 = vadd.f32 %v2013, %v2185
    %v2187 = vpop.f32.mrf.mxu0
    %v2188 = vadd.f32 %v2009, %v2187
    %v2189 = vpop.f32.mrf.mxu0
    %v2190 = vadd.f32 %v2013, %v2189
    %2191 = vdwg.mxu0
    %2192 = vmatprep.subr.bf16.mxu0 0
    %2193 = vmatpush1.bf16.msra.mxu0 %v2124
    %2194 = vmatprep.subr.bf16.mxu0 0
    %2195 = vmatpush1.bf16.msra.mxu0 %v2121
    %2196 = vmatprep.subr.bf16.mxu0 0
    %2197 = vmatpush1.bf16.msra.mxu0 %v2118
    %2198 = vmatprep.subr.bf16.mxu0 0
    %2199 = vmatpush1.bf16.msra.mxu0 %v2115
    %2200 = vmatprep.subr.bf16.mxu0 0
    %2201 = vmatpush1.bf16.msra.mxu0 %v2112
    %2202 = vmatprep.subr.bf16.mxu0 0
    %2203 = vmatpush1.bf16.msra.mxu0 %v2109
    %2204 = vmatprep.subr.bf16.mxu0 0
    %2205 = vmatpush1.bf16.msra.mxu0 %v2106
    %2206 = vmatprep.subr.bf16.mxu0 0
    %2207 = vmatpush1.bf16.msra.mxu0 %v2103
    %2208 = vmatprep.subr.bf16.mxu0 0
    %2209 = vmatpush2.bf16.msra.mxu0 0
    %2210 = vmatprep.subr.bf16.mxu0 0
    %2211 = vmatpush2.bf16.msra.mxu0 0
    %2212 = vmatprep.subr.bf16.mxu0 0
    %2213 = vmatpush2.bf16.msra.mxu0 0
    %2214 = vmatprep.subr.bf16.mxu0 0
    %2215 = vmatpush2.bf16.msra.mxu0 0
    %2216 = vmatprep.subr.bf16.mxu0 0
    %2217 = vmatpush2.bf16.msra.mxu0 0
    %2218 = vmatprep.subr.bf16.mxu0 0
    %2219 = vmatpush2.bf16.msra.mxu0 0
    %2220 = vmatprep.subr.bf16.mxu0 0
    %2221 = vmatpush2.bf16.msra.mxu0 0
    %2222 = vmatprep.subr.bf16.mxu0 0
    %2223 = vmatpush2.bf16.msra.mxu0 0
    %2224 = vmatprep.mubr.bf16.mxu0 0
    %2225 = vmatmul.mubr.bf16.gmra.mxu0 %v1969
    %v2226 = vpop.f32.mrf.mxu0
    %v2227 = vadd.f32 %v2017, %v2226
    %v2228 = vpop.f32.mrf.mxu0
    %v2229 = vpop.f32.mrf.mxu0
    %v2230 = vadd.f32 %v2017, %v2229
    %v2231 = vpop.f32.mrf.mxu0
    %2232 = vdwg.mxu0
    %v2233 = vpack.c.bf16 %v2188, %v2184
    %v2234 = vpack.c.bf16 %v2190, %v2186
    %v2235 = vpack.c.bf16 %v2230, %v2227
    %v2237 = vunpack.c.l.b16 %v2233
    %v2238 = vunpack.c.h.b16 %v2233
    %v2239 = vpack.c.b16 %v2237, %v2237
    %v2240 = vpack.c.b16 %v2238, %v2238
    %v2242 = vunpack.c.l.b16 %v2234
    %v2243 = vunpack.c.h.b16 %v2234
    %v2244 = vpack.c.b16 %v2242, %v2242
    %v2245 = vpack.c.b16 %v2243, %v2243
    %v2247 = vunpack.c.l.b16 %v2235
    %v2248 = vunpack.c.h.b16 %v2235
    %v2249 = vpack.c.b16 %v2247, %v2247
    %v2250 = vpack.c.b16 %v2248, %v2248
    %2251 = vrot.lane.b32.xlu0 %v2239, 96
    %v2252 = vpop.permute.xlu0 %2251
    %2253 = vrot.lane.b32.xlu0 %v2240, 96
    %v2254 = vpop.permute.xlu0 %2253
    %2255 = vrot.lane.b32.xlu0 %v2239, 64
    %v2256 = vpop.permute.xlu0 %2255
    %2257 = vrot.lane.b32.xlu0 %v2240, 64
    %v2258 = vpop.permute.xlu0 %2257
    %2259 = vrot.lane.b32.xlu0 %v2239, 32
    %v2260 = vpop.permute.xlu0 %2259
    %2261 = vrot.lane.b32.xlu0 %v2240, 32
    %v2262 = vpop.permute.xlu0 %2261
    %2263 = vrot.lane.b32.xlu0 %v2244, 96
    %v2264 = vpop.permute.xlu0 %2263
    %2265 = vrot.lane.b32.xlu0 %v2245, 96
    %v2266 = vpop.permute.xlu0 %2265
    %2267 = vrot.lane.b32.xlu0 %v2244, 64
    %v2268 = vpop.permute.xlu0 %2267
    %2269 = vrot.lane.b32.xlu0 %v2245, 64
    %v2270 = vpop.permute.xlu0 %2269
    %2271 = vrot.lane.b32.xlu0 %v2244, 32
    %v2272 = vpop.permute.xlu0 %2271
    %2273 = vrot.lane.b32.xlu0 %v2245, 32
    %v2274 = vpop.permute.xlu0 %2273
    %2275 = vrot.lane.b32.xlu0 %v2249, 96
    %v2276 = vpop.permute.xlu0 %2275
    %2277 = vrot.lane.b32.xlu0 %v2250, 96
    %v2278 = vpop.permute.xlu0 %2277
    %2279 = vrot.lane.b32.xlu0 %v2249, 64
    %v2280 = vpop.permute.xlu0 %2279
    %2281 = vrot.lane.b32.xlu0 %v2250, 64
    %v2282 = vpop.permute.xlu0 %2281
    %2283 = vrot.lane.b32.xlu0 %v2249, 32
    %v2284 = vpop.permute.xlu0 %2283
    %2285 = vrot.lane.b32.xlu0 %v2250, 32
    %v2286 = vpop.permute.xlu0 %2285
    %v2288 = vsel %vm654, %v2239, 0
    %v2291 = vsel %vm654, %v2244, 0
    %2293 = vmatprep.subr.bf16.mxu0 0
    %2294 = vmatpush1.bf16.xpose.msra.mxu0 0
    %2295 = vmatprep.subr.bf16.mxu0 0
    %2296 = vmatpush1.bf16.xpose.msra.mxu0 0
    %2297 = vmatprep.subr.bf16.mxu0 0
    %2298 = vmatpush1.bf16.xpose.msra.mxu0 0
    %2299 = vmatprep.subr.bf16.mxu0 0
    %2300 = vmatpush1.bf16.xpose.msra.mxu0 0
    %2301 = vmatprep.subr.bf16.mxu0 0
    %2302 = vmatpush1.bf16.xpose.msra.mxu0 0
    %2303 = vmatprep.subr.bf16.mxu0 0
    %2304 = vmatpush1.bf16.xpose.msra.mxu0 0
    %2305 = vmatprep.subr.bf16.mxu0 0
    %2306 = vmatpush1.bf16.xpose.msra.mxu0 0
    %2307 = vmatprep.subr.bf16.mxu0 0
    %2308 = vmatpush1.bf16.xpose.msra.mxu0 %v2291
    %2309 = vmatprep.subr.bf16.mxu0 0
    %2310 = vmatpush2.bf16.xpose.msra.mxu0 0
    %2311 = vmatprep.subr.bf16.mxu0 0
    %2312 = vmatpush2.bf16.xpose.msra.mxu0 0
    %2313 = vmatprep.subr.bf16.mxu0 0
    %2314 = vmatpush2.bf16.xpose.msra.mxu0 0
    %2315 = vmatprep.subr.bf16.mxu0 0
    %2316 = vmatpush2.bf16.xpose.msra.mxu0 0
    %2317 = vmatprep.subr.bf16.mxu0 0
    %2318 = vmatpush2.bf16.xpose.msra.mxu0 0
    %2319 = vmatprep.subr.bf16.mxu0 0
    %2320 = vmatpush2.bf16.xpose.msra.mxu0 0
    %2321 = vmatprep.subr.bf16.mxu0 0
    %2322 = vmatpush2.bf16.xpose.msra.mxu0 0
    %2323 = vmatprep.subr.bf16.mxu0 0
    %2324 = vmatpush2.bf16.xpose.msra.mxu0 0
    %2325 = vmatprep.mubr.bf16.mxu0 0
    %2326 = vmatmul.mubr.bf16.gmra.mxu0 %v2288
    %v2327 = vpop.f32.mrf.mxu0
    %v2328 = vadd.f32 0.0, %v2327
    %v2329 = vpop.f32.mrf.mxu0
    %v2330 = vpop.f32.mrf.mxu0
    %v2331 = vpop.f32.mrf.mxu0
    %2332 = vdwg.mxu0
    %v2334 = vsel %vm654, %v2240, 0
    %v2337 = vsel %vm654, %v2245, 0
    %2339 = vmatprep.subr.bf16.mxu0 0
    %2340 = vmatpush1.bf16.xpose.msra.mxu0 0
    %2341 = vmatprep.subr.bf16.mxu0 0
    %2342 = vmatpush1.bf16.xpose.msra.mxu0 0
    %2343 = vmatprep.subr.bf16.mxu0 0
    %2344 = vmatpush1.bf16.xpose.msra.mxu0 0
    %2345 = vmatprep.subr.bf16.mxu0 0
    %2346 = vmatpush1.bf16.xpose.msra.mxu0 0
    %2347 = vmatprep.subr.bf16.mxu0 0
    %2348 = vmatpush1.bf16.xpose.msra.mxu0 0
    %2349 = vmatprep.subr.bf16.mxu0 0
    %2350 = vmatpush1.bf16.xpose.msra.mxu0 0
    %2351 = vmatprep.subr.bf16.mxu0 0
    %2352 = vmatpush1.bf16.xpose.msra.mxu0 0
    %2353 = vmatprep.subr.bf16.mxu0 0
    %2354 = vmatpush1.bf16.xpose.msra.mxu0 %v2337
    %2355 = vmatprep.subr.bf16.mxu0 0
    %2356 = vmatpush2.bf16.xpose.msra.mxu0 0
    %2357 = vmatprep.subr.bf16.mxu0 0
    %2358 = vmatpush2.bf16.xpose.msra.mxu0 0
    %2359 = vmatprep.subr.bf16.mxu0 0
    %2360 = vmatpush2.bf16.xpose.msra.mxu0 0
    %2361 = vmatprep.subr.bf16.mxu0 0
    %2362 = vmatpush2.bf16.xpose.msra.mxu0 0
    %2363 = vmatprep.subr.bf16.mxu0 0
    %2364 = vmatpush2.bf16.xpose.msra.mxu0 0
    %2365 = vmatprep.subr.bf16.mxu0 0
    %2366 = vmatpush2.bf16.xpose.msra.mxu0 0
    %2367 = vmatprep.subr.bf16.mxu0 0
    %2368 = vmatpush2.bf16.xpose.msra.mxu0 0
    %2369 = vmatprep.subr.bf16.mxu0 0
    %2370 = vmatpush2.bf16.xpose.msra.mxu0 0
    %2371 = vmatprep.mubr.bf16.mxu0 0
    %2372 = vmatmul.mubr.bf16.gmra.mxu0 %v2334
    %v2373 = vpop.f32.mrf.mxu0
    %v2374 = vadd.f32 0.0, %v2373
    %v2375 = vpop.f32.mrf.mxu0
    %v2376 = vpop.f32.mrf.mxu0
    %v2377 = vpop.f32.mrf.mxu0
    %2378 = vdwg.mxu0
    %v2380 = vsel %vm654, %v2252, 0
    %v2383 = vsel %vm654, %v2264, 0
    %2385 = vmatprep.subr.bf16.mxu0 0
    %2386 = vmatpush1.bf16.xpose.msra.mxu0 0
    %2387 = vmatprep.subr.bf16.mxu0 0
    %2388 = vmatpush1.bf16.xpose.msra.mxu0 0
    %2389 = vmatprep.subr.bf16.mxu0 0
    %2390 = vmatpush1.bf16.xpose.msra.mxu0 0
    %2391 = vmatprep.subr.bf16.mxu0 0
    %2392 = vmatpush1.bf16.xpose.msra.mxu0 0
    %2393 = vmatprep.subr.bf16.mxu0 0
    %2394 = vmatpush1.bf16.xpose.msra.mxu0 0
    %2395 = vmatprep.subr.bf16.mxu0 0
    %2396 = vmatpush1.bf16.xpose.msra.mxu0 0
    %2397 = vmatprep.subr.bf16.mxu0 0
    %2398 = vmatpush1.bf16.xpose.msra.mxu0 0
    %2399 = vmatprep.subr.bf16.mxu0 0
    %2400 = vmatpush1.bf16.xpose.msra.mxu0 %v2383
    %2401 = vmatprep.subr.bf16.mxu0 0
    %2402 = vmatpush2.bf16.xpose.msra.mxu0 0
    %2403 = vmatprep.subr.bf16.mxu0 0
    %2404 = vmatpush2.bf16.xpose.msra.mxu0 0
    %2405 = vmatprep.subr.bf16.mxu0 0
    %2406 = vmatpush2.bf16.xpose.msra.mxu0 0
    %2407 = vmatprep.subr.bf16.mxu0 0
    %2408 = vmatpush2.bf16.xpose.msra.mxu0 0
    %2409 = vmatprep.subr.bf16.mxu0 0
    %2410 = vmatpush2.bf16.xpose.msra.mxu0 0
    %2411 = vmatprep.subr.bf16.mxu0 0
    %2412 = vmatpush2.bf16.xpose.msra.mxu0 0
    %2413 = vmatprep.subr.bf16.mxu0 0
    %2414 = vmatpush2.bf16.xpose.msra.mxu0 0
    %2415 = vmatprep.subr.bf16.mxu0 0
    %2416 = vmatpush2.bf16.xpose.msra.mxu0 0
    %2417 = vmatprep.mubr.bf16.mxu0 0
    %2418 = vmatmul.mubr.bf16.gmra.mxu0 %v2380
    %v2419 = vpop.f32.mrf.mxu0
    %v2420 = vadd.f32 0.0, %v2419
    %v2421 = vpop.f32.mrf.mxu0
    %v2422 = vpop.f32.mrf.mxu0
    %v2423 = vpop.f32.mrf.mxu0
    %2424 = vdwg.mxu0
    %v2426 = vsel %vm654, %v2254, 0
    %v2429 = vsel %vm654, %v2266, 0
    %2431 = vmatprep.subr.bf16.mxu0 0
    %2432 = vmatpush1.bf16.xpose.msra.mxu0 0
    %2433 = vmatprep.subr.bf16.mxu0 0
    %2434 = vmatpush1.bf16.xpose.msra.mxu0 0
    %2435 = vmatprep.subr.bf16.mxu0 0
    %2436 = vmatpush1.bf16.xpose.msra.mxu0 0
    %2437 = vmatprep.subr.bf16.mxu0 0
    %2438 = vmatpush1.bf16.xpose.msra.mxu0 0
    %2439 = vmatprep.subr.bf16.mxu0 0
    %2440 = vmatpush1.bf16.xpose.msra.mxu0 0
    %2441 = vmatprep.subr.bf16.mxu0 0
    %2442 = vmatpush1.bf16.xpose.msra.mxu0 0
    %2443 = vmatprep.subr.bf16.mxu0 0
    %2444 = vmatpush1.bf16.xpose.msra.mxu0 0
    %2445 = vmatprep.subr.bf16.mxu0 0
    %2446 = vmatpush1.bf16.xpose.msra.mxu0 %v2429
    %2447 = vmatprep.subr.bf16.mxu0 0
    %2448 = vmatpush2.bf16.xpose.msra.mxu0 0
    %2449 = vmatprep.subr.bf16.mxu0 0
    %2450 = vmatpush2.bf16.xpose.msra.mxu0 0
    %2451 = vmatprep.subr.bf16.mxu0 0
    %2452 = vmatpush2.bf16.xpose.msra.mxu0 0
    %2453 = vmatprep.subr.bf16.mxu0 0
    %2454 = vmatpush2.bf16.xpose.msra.mxu0 0
    %2455 = vmatprep.subr.bf16.mxu0 0
    %2456 = vmatpush2.bf16.xpose.msra.mxu0 0
    %2457 = vmatprep.subr.bf16.mxu0 0
    %2458 = vmatpush2.bf16.xpose.msra.mxu0 0
    %2459 = vmatprep.subr.bf16.mxu0 0
    %2460 = vmatpush2.bf16.xpose.msra.mxu0 0
    %2461 = vmatprep.subr.bf16.mxu0 0
    %2462 = vmatpush2.bf16.xpose.msra.mxu0 0
    %2463 = vmatprep.mubr.bf16.mxu0 0
    %2464 = vmatmul.mubr.bf16.gmra.mxu0 %v2426
    %v2465 = vpop.f32.mrf.mxu0
    %v2466 = vadd.f32 0.0, %v2465
    %v2467 = vpop.f32.mrf.mxu0
    %v2468 = vpop.f32.mrf.mxu0
    %v2469 = vpop.f32.mrf.mxu0
    %2470 = vdwg.mxu0
    %v2472 = vsel %vm654, %v2256, 0
    %v2475 = vsel %vm654, %v2268, 0
    %2477 = vmatprep.subr.bf16.mxu0 0
    %2478 = vmatpush1.bf16.xpose.msra.mxu0 0
    %2479 = vmatprep.subr.bf16.mxu0 0
    %2480 = vmatpush1.bf16.xpose.msra.mxu0 0
    %2481 = vmatprep.subr.bf16.mxu0 0
    %2482 = vmatpush1.bf16.xpose.msra.mxu0 0
    %2483 = vmatprep.subr.bf16.mxu0 0
    %2484 = vmatpush1.bf16.xpose.msra.mxu0 0
    %2485 = vmatprep.subr.bf16.mxu0 0
    %2486 = vmatpush1.bf16.xpose.msra.mxu0 0
    %2487 = vmatprep.subr.bf16.mxu0 0
    %2488 = vmatpush1.bf16.xpose.msra.mxu0 0
    %2489 = vmatprep.subr.bf16.mxu0 0
    %2490 = vmatpush1.bf16.xpose.msra.mxu0 0
    %2491 = vmatprep.subr.bf16.mxu0 0
    %2492 = vmatpush1.bf16.xpose.msra.mxu0 %v2475
    %2493 = vmatprep.subr.bf16.mxu0 0
    %2494 = vmatpush2.bf16.xpose.msra.mxu0 0
    %2495 = vmatprep.subr.bf16.mxu0 0
    %2496 = vmatpush2.bf16.xpose.msra.mxu0 0
    %2497 = vmatprep.subr.bf16.mxu0 0
    %2498 = vmatpush2.bf16.xpose.msra.mxu0 0
    %2499 = vmatprep.subr.bf16.mxu0 0
    %2500 = vmatpush2.bf16.xpose.msra.mxu0 0
    %2501 = vmatprep.subr.bf16.mxu0 0
    %2502 = vmatpush2.bf16.xpose.msra.mxu0 0
    %2503 = vmatprep.subr.bf16.mxu0 0
    %2504 = vmatpush2.bf16.xpose.msra.mxu0 0
    %2505 = vmatprep.subr.bf16.mxu0 0
    %2506 = vmatpush2.bf16.xpose.msra.mxu0 0
    %2507 = vmatprep.subr.bf16.mxu0 0
    %2508 = vmatpush2.bf16.xpose.msra.mxu0 0
    %2509 = vmatprep.mubr.bf16.mxu0 0
    %2510 = vmatmul.mubr.bf16.gmra.mxu0 %v2472
    %v2511 = vpop.f32.mrf.mxu0
    %v2512 = vadd.f32 0.0, %v2511
    %v2513 = vpop.f32.mrf.mxu0
    %v2514 = vpop.f32.mrf.mxu0
    %v2515 = vpop.f32.mrf.mxu0
    %2516 = vdwg.mxu0
    %v2518 = vsel %vm654, %v2258, 0
    %v2521 = vsel %vm654, %v2270, 0
    %2523 = vmatprep.subr.bf16.mxu0 0
    %2524 = vmatpush1.bf16.xpose.msra.mxu0 0
    %2525 = vmatprep.subr.bf16.mxu0 0
    %2526 = vmatpush1.bf16.xpose.msra.mxu0 0
    %2527 = vmatprep.subr.bf16.mxu0 0
    %2528 = vmatpush1.bf16.xpose.msra.mxu0 0
    %2529 = vmatprep.subr.bf16.mxu0 0
    %2530 = vmatpush1.bf16.xpose.msra.mxu0 0
    %2531 = vmatprep.subr.bf16.mxu0 0
    %2532 = vmatpush1.bf16.xpose.msra.mxu0 0
    %2533 = vmatprep.subr.bf16.mxu0 0
    %2534 = vmatpush1.bf16.xpose.msra.mxu0 0
    %2535 = vmatprep.subr.bf16.mxu0 0
    %2536 = vmatpush1.bf16.xpose.msra.mxu0 0
    %2537 = vmatprep.subr.bf16.mxu0 0
    %2538 = vmatpush1.bf16.xpose.msra.mxu0 %v2521
    %2539 = vmatprep.subr.bf16.mxu0 0
    %2540 = vmatpush2.bf16.xpose.msra.mxu0 0
    %2541 = vmatprep.subr.bf16.mxu0 0
    %2542 = vmatpush2.bf16.xpose.msra.mxu0 0
    %2543 = vmatprep.subr.bf16.mxu0 0
    %2544 = vmatpush2.bf16.xpose.msra.mxu0 0
    %2545 = vmatprep.subr.bf16.mxu0 0
    %2546 = vmatpush2.bf16.xpose.msra.mxu0 0
    %2547 = vmatprep.subr.bf16.mxu0 0
    %2548 = vmatpush2.bf16.xpose.msra.mxu0 0
    %2549 = vmatprep.subr.bf16.mxu0 0
    %2550 = vmatpush2.bf16.xpose.msra.mxu0 0
    %2551 = vmatprep.subr.bf16.mxu0 0
    %2552 = vmatpush2.bf16.xpose.msra.mxu0 0
    %2553 = vmatprep.subr.bf16.mxu0 0
    %2554 = vmatpush2.bf16.xpose.msra.mxu0 0
    %2555 = vmatprep.mubr.bf16.mxu0 0
    %2556 = vmatmul.mubr.bf16.gmra.mxu0 %v2518
    %v2557 = vpop.f32.mrf.mxu0
    %v2558 = vadd.f32 0.0, %v2557
    %v2559 = vpop.f32.mrf.mxu0
    %v2560 = vpop.f32.mrf.mxu0
    %v2561 = vpop.f32.mrf.mxu0
    %2562 = vdwg.mxu0
    %v2564 = vsel %vm654, %v2260, 0
    %v2567 = vsel %vm654, %v2272, 0
    %2569 = vmatprep.subr.bf16.mxu0 0
    %2570 = vmatpush1.bf16.xpose.msra.mxu0 0
    %2571 = vmatprep.subr.bf16.mxu0 0
    %2572 = vmatpush1.bf16.xpose.msra.mxu0 0
    %2573 = vmatprep.subr.bf16.mxu0 0
    %2574 = vmatpush1.bf16.xpose.msra.mxu0 0
    %2575 = vmatprep.subr.bf16.mxu0 0
    %2576 = vmatpush1.bf16.xpose.msra.mxu0 0
    %2577 = vmatprep.subr.bf16.mxu0 0
    %2578 = vmatpush1.bf16.xpose.msra.mxu0 0
    %2579 = vmatprep.subr.bf16.mxu0 0
    %2580 = vmatpush1.bf16.xpose.msra.mxu0 0
    %2581 = vmatprep.subr.bf16.mxu0 0
    %2582 = vmatpush1.bf16.xpose.msra.mxu0 0
    %2583 = vmatprep.subr.bf16.mxu0 0
    %2584 = vmatpush1.bf16.xpose.msra.mxu0 %v2567
    %2585 = vmatprep.subr.bf16.mxu0 0
    %2586 = vmatpush2.bf16.xpose.msra.mxu0 0
    %2587 = vmatprep.subr.bf16.mxu0 0
    %2588 = vmatpush2.bf16.xpose.msra.mxu0 0
    %2589 = vmatprep.subr.bf16.mxu0 0
    %2590 = vmatpush2.bf16.xpose.msra.mxu0 0
    %2591 = vmatprep.subr.bf16.mxu0 0
    %2592 = vmatpush2.bf16.xpose.msra.mxu0 0
    %2593 = vmatprep.subr.bf16.mxu0 0
    %2594 = vmatpush2.bf16.xpose.msra.mxu0 0
    %2595 = vmatprep.subr.bf16.mxu0 0
    %2596 = vmatpush2.bf16.xpose.msra.mxu0 0
    %2597 = vmatprep.subr.bf16.mxu0 0
    %2598 = vmatpush2.bf16.xpose.msra.mxu0 0
    %2599 = vmatprep.subr.bf16.mxu0 0
    %2600 = vmatpush2.bf16.xpose.msra.mxu0 0
    %2601 = vmatprep.mubr.bf16.mxu0 0
    %2602 = vmatmul.mubr.bf16.gmra.mxu0 %v2564
    %v2603 = vpop.f32.mrf.mxu0
    %v2604 = vadd.f32 0.0, %v2603
    %v2605 = vpop.f32.mrf.mxu0
    %v2606 = vpop.f32.mrf.mxu0
    %v2607 = vpop.f32.mrf.mxu0
    %2608 = vdwg.mxu0
    %v2610 = vsel %vm654, %v2262, 0
    %v2613 = vsel %vm654, %v2274, 0
    %2615 = vmatprep.subr.bf16.mxu0 0
    %2616 = vmatpush1.bf16.xpose.msra.mxu0 0
    %2617 = vmatprep.subr.bf16.mxu0 0
    %2618 = vmatpush1.bf16.xpose.msra.mxu0 0
    %2619 = vmatprep.subr.bf16.mxu0 0
    %2620 = vmatpush1.bf16.xpose.msra.mxu0 0
    %2621 = vmatprep.subr.bf16.mxu0 0
    %2622 = vmatpush1.bf16.xpose.msra.mxu0 0
    %2623 = vmatprep.subr.bf16.mxu0 0
    %2624 = vmatpush1.bf16.xpose.msra.mxu0 0
    %2625 = vmatprep.subr.bf16.mxu0 0
    %2626 = vmatpush1.bf16.xpose.msra.mxu0 0
    %2627 = vmatprep.subr.bf16.mxu0 0
    %2628 = vmatpush1.bf16.xpose.msra.mxu0 0
    %2629 = vmatprep.subr.bf16.mxu0 0
    %2630 = vmatpush1.bf16.xpose.msra.mxu0 %v2613
    %2631 = vmatprep.subr.bf16.mxu0 0
    %2632 = vmatpush2.bf16.xpose.msra.mxu0 0
    %2633 = vmatprep.subr.bf16.mxu0 0
    %2634 = vmatpush2.bf16.xpose.msra.mxu0 0
    %2635 = vmatprep.subr.bf16.mxu0 0
    %2636 = vmatpush2.bf16.xpose.msra.mxu0 0
    %2637 = vmatprep.subr.bf16.mxu0 0
    %2638 = vmatpush2.bf16.xpose.msra.mxu0 0
    %2639 = vmatprep.subr.bf16.mxu0 0
    %2640 = vmatpush2.bf16.xpose.msra.mxu0 0
    %2641 = vmatprep.subr.bf16.mxu0 0
    %2642 = vmatpush2.bf16.xpose.msra.mxu0 0
    %2643 = vmatprep.subr.bf16.mxu0 0
    %2644 = vmatpush2.bf16.xpose.msra.mxu0 0
    %2645 = vmatprep.subr.bf16.mxu0 0
    %2646 = vmatpush2.bf16.xpose.msra.mxu0 0
    %2647 = vmatprep.mubr.bf16.mxu0 0
    %2648 = vmatmul.mubr.bf16.gmra.mxu0 %v2610
    %v2649 = vpop.f32.mrf.mxu0
    %v2650 = vadd.f32 0.0, %v2649
    %v2651 = vpop.f32.mrf.mxu0
    %v2652 = vpop.f32.mrf.mxu0
    %v2653 = vpop.f32.mrf.mxu0
    %2654 = vdwg.mxu0
    %v2655 = vsel %vm1023, %v2328, -inf
    %2656 = vmax.xlane.f32.xlu0 %v2655
    %v2657 = vpop.xlane.xlu0 %2656
    %v2658 = vsel %vm1023, %v2374, -inf
    %2659 = vmax.xlane.f32.xlu0 %v2658
    %v2660 = vpop.xlane.xlu0 %2659
    %v2661 = vsel %vm1023, %v2420, -inf
    %2662 = vmax.xlane.f32.xlu0 %v2661
    %v2663 = vpop.xlane.xlu0 %2662
    %v2664 = vsel %vm1023, %v2466, -inf
    %2665 = vmax.xlane.f32.xlu0 %v2664
    %v2666 = vpop.xlane.xlu0 %2665
    %v2667 = vsel %vm1023, %v2512, -inf
    %2668 = vmax.xlane.f32.xlu0 %v2667
    %v2669 = vpop.xlane.xlu0 %2668
    %v2670 = vsel %vm1023, %v2558, -inf
    %2671 = vmax.xlane.f32.xlu0 %v2670
    %v2672 = vpop.xlane.xlu0 %2671
    %v2673 = vsel %vm1023, %v2604, -inf
    %2674 = vmax.xlane.f32.xlu0 %v2673
    %v2675 = vpop.xlane.xlu0 %2674
    %v2676 = vsel %vm1023, %v2650, -inf
    %2677 = vmax.xlane.f32.xlu0 %v2676
    %v2678 = vpop.xlane.xlu0 %2677
    %v2679 = vsub.f32 %v2328, %v2657
    %v2680 = vsub.f32 %v2374, %v2660
    %v2681 = vsub.f32 %v2420, %v2663
    %v2682 = vsub.f32 %v2466, %v2666
    %v2683 = vsub.f32 %v2512, %v2669
    %v2684 = vsub.f32 %v2558, %v2672
    %v2685 = vsub.f32 %v2604, %v2675
    %v2686 = vsub.f32 %v2650, %v2678
    %v2687 = vmul.f32 %v2679, 1.442695
    %v2688 = vpow.pop %v2687
    %v2689 = vmul.f32 %v2680, 1.442695
    %v2690 = vpow.pop %v2689
    %v2691 = vmul.f32 %v2681, 1.442695
    %v2692 = vpow.pop %v2691
    %v2693 = vmul.f32 %v2682, 1.442695
    %v2694 = vpow.pop %v2693
    %v2695 = vmul.f32 %v2683, 1.442695
    %v2696 = vpow.pop %v2695
    %v2697 = vmul.f32 %v2684, 1.442695
    %v2698 = vpow.pop %v2697
    %v2699 = vmul.f32 %v2685, 1.442695
    %v2700 = vpow.pop %v2699
    %v2701 = vmul.f32 %v2686, 1.442695
    %v2702 = vpow.pop %v2701
    %v2703 = vsel %vm1023, %v2688, 0.0
    %2704 = vadd.xlane.f32.xlu0 %v2703
    %v2705 = vpop.xlane.xlu0 %2704
    %v2706 = vsel %vm1023, %v2690, 0.0
    %2707 = vadd.xlane.f32.xlu0 %v2706
    %v2708 = vpop.xlane.xlu0 %2707
    %v2709 = vsel %vm1023, %v2692, 0.0
    %2710 = vadd.xlane.f32.xlu0 %v2709
    %v2711 = vpop.xlane.xlu0 %2710
    %v2712 = vsel %vm1023, %v2694, 0.0
    %2713 = vadd.xlane.f32.xlu0 %v2712
    %v2714 = vpop.xlane.xlu0 %2713
    %v2715 = vsel %vm1023, %v2696, 0.0
    %2716 = vadd.xlane.f32.xlu0 %v2715
    %v2717 = vpop.xlane.xlu0 %2716
    %v2718 = vsel %vm1023, %v2698, 0.0
    %2719 = vadd.xlane.f32.xlu0 %v2718
    %v2720 = vpop.xlane.xlu0 %2719
    %v2721 = vsel %vm1023, %v2700, 0.0
    %2722 = vadd.xlane.f32.xlu0 %v2721
    %v2723 = vpop.xlane.xlu0 %2722
    %v2724 = vsel %vm1023, %v2702, 0.0
    %2725 = vadd.xlane.f32.xlu0 %v2724
    %v2726 = vpop.xlane.xlu0 %2725
    %v2727 = vrcp.pop %v2705
    %v2728 = vrcp.pop %v2708
    %v2729 = vrcp.pop %v2711
    %v2730 = vrcp.pop %v2714
    %v2731 = vrcp.pop %v2717
    %v2732 = vrcp.pop %v2720
    %v2733 = vrcp.pop %v2723
    %v2734 = vrcp.pop %v2726
    %v2735 = vmul.f32 %v2688, %v2727
    %v2736 = vmul.f32 %v2690, %v2728
    %v2737 = vmul.f32 %v2692, %v2729
    %v2738 = vmul.f32 %v2694, %v2730
    %v2739 = vmul.f32 %v2696, %v2731
    %v2740 = vmul.f32 %v2698, %v2732
    %v2741 = vmul.f32 %v2700, %v2733
    %v2742 = vmul.f32 %v2702, %v2734
    %v2743 = vpack.c.bf16 %v2735, %v2735
    %v2744 = vpack.c.bf16 %v2736, %v2736
    %v2745 = vpack.c.bf16 %v2737, %v2737
    %v2746 = vpack.c.bf16 %v2738, %v2738
    %v2747 = vpack.c.bf16 %v2739, %v2739
    %v2748 = vpack.c.bf16 %v2740, %v2740
    %v2749 = vpack.c.bf16 %v2741, %v2741
    %v2750 = vpack.c.bf16 %v2742, %v2742
    %v2752 = vsel %vm1023, %v2743, 0
    %v2755 = vsel %vm1123, %v2249, 0
    %2757 = vmatprep.subr.bf16.mxu0 0
    %2758 = vmatpush1.bf16.msra.mxu0 0
    %2759 = vmatprep.subr.bf16.mxu0 0
    %2760 = vmatpush1.bf16.msra.mxu0 0
    %2761 = vmatprep.subr.bf16.mxu0 0
    %2762 = vmatpush1.bf16.msra.mxu0 0
    %2763 = vmatprep.subr.bf16.mxu0 0
    %2764 = vmatpush1.bf16.msra.mxu0 0
    %2765 = vmatprep.subr.bf16.mxu0 0
    %2766 = vmatpush1.bf16.msra.mxu0 0
    %2767 = vmatprep.subr.bf16.mxu0 0
    %2768 = vmatpush1.bf16.msra.mxu0 0
    %2769 = vmatprep.subr.bf16.mxu0 0
    %2770 = vmatpush1.bf16.msra.mxu0 0
    %2771 = vmatprep.subr.bf16.mxu0 0
    %2772 = vmatpush1.bf16.msra.mxu0 %v2755
    %2773 = vmatprep.subr.bf16.mxu0 0
    %2774 = vmatpush2.bf16.msra.mxu0 0
    %2775 = vmatprep.subr.bf16.mxu0 0
    %2776 = vmatpush2.bf16.msra.mxu0 0
    %2777 = vmatprep.subr.bf16.mxu0 0
    %2778 = vmatpush2.bf16.msra.mxu0 0
    %2779 = vmatprep.subr.bf16.mxu0 0
    %2780 = vmatpush2.bf16.msra.mxu0 0
    %2781 = vmatprep.subr.bf16.mxu0 0
    %2782 = vmatpush2.bf16.msra.mxu0 0
    %2783 = vmatprep.subr.bf16.mxu0 0
    %2784 = vmatpush2.bf16.msra.mxu0 0
    %2785 = vmatprep.subr.bf16.mxu0 0
    %2786 = vmatpush2.bf16.msra.mxu0 0
    %2787 = vmatprep.subr.bf16.mxu0 0
    %2788 = vmatpush2.bf16.msra.mxu0 0
    %2789 = vmatprep.mubr.bf16.mxu0 0
    %2790 = vmatmul.mubr.bf16.gmra.mxu0 %v2752
    %v2791 = vpop.f32.mrf.mxu0
    %v2792 = vadd.f32 0.0, %v2791
    %v2793 = vpop.f32.mrf.mxu0
    %v2794 = vpop.f32.mrf.mxu0
    %v2795 = vpop.f32.mrf.mxu0
    %2796 = vdwg.mxu0
    %v2798 = vsel %vm1023, %v2744, 0
    %v2801 = vsel %vm1123, %v2250, 0
    %2803 = vmatprep.subr.bf16.mxu0 0
    %2804 = vmatpush1.bf16.msra.mxu0 0
    %2805 = vmatprep.subr.bf16.mxu0 0
    %2806 = vmatpush1.bf16.msra.mxu0 0
    %2807 = vmatprep.subr.bf16.mxu0 0
    %2808 = vmatpush1.bf16.msra.mxu0 0
    %2809 = vmatprep.subr.bf16.mxu0 0
    %2810 = vmatpush1.bf16.msra.mxu0 0
    %2811 = vmatprep.subr.bf16.mxu0 0
    %2812 = vmatpush1.bf16.msra.mxu0 0
    %2813 = vmatprep.subr.bf16.mxu0 0
    %2814 = vmatpush1.bf16.msra.mxu0 0
    %2815 = vmatprep.subr.bf16.mxu0 0
    %2816 = vmatpush1.bf16.msra.mxu0 0
    %2817 = vmatprep.subr.bf16.mxu0 0
    %2818 = vmatpush1.bf16.msra.mxu0 %v2801
    %2819 = vmatprep.subr.bf16.mxu0 0
    %2820 = vmatpush2.bf16.msra.mxu0 0
    %2821 = vmatprep.subr.bf16.mxu0 0
    %2822 = vmatpush2.bf16.msra.mxu0 0
    %2823 = vmatprep.subr.bf16.mxu0 0
    %2824 = vmatpush2.bf16.msra.mxu0 0
    %2825 = vmatprep.subr.bf16.mxu0 0
    %2826 = vmatpush2.bf16.msra.mxu0 0
    %2827 = vmatprep.subr.bf16.mxu0 0
    %2828 = vmatpush2.bf16.msra.mxu0 0
    %2829 = vmatprep.subr.bf16.mxu0 0
    %2830 = vmatpush2.bf16.msra.mxu0 0
    %2831 = vmatprep.subr.bf16.mxu0 0
    %2832 = vmatpush2.bf16.msra.mxu0 0
    %2833 = vmatprep.subr.bf16.mxu0 0
    %2834 = vmatpush2.bf16.msra.mxu0 0
    %2835 = vmatprep.mubr.bf16.mxu0 0
    %2836 = vmatmul.mubr.bf16.gmra.mxu0 %v2798
    %v2837 = vpop.f32.mrf.mxu0
    %v2838 = vadd.f32 0.0, %v2837
    %v2839 = vpop.f32.mrf.mxu0
    %v2840 = vpop.f32.mrf.mxu0
    %v2841 = vpop.f32.mrf.mxu0
    %2842 = vdwg.mxu0
    %v2844 = vsel %vm1023, %v2745, 0
    %v2847 = vsel %vm1123, %v2276, 0
    %2849 = vmatprep.subr.bf16.mxu0 0
    %2850 = vmatpush1.bf16.msra.mxu0 0
    %2851 = vmatprep.subr.bf16.mxu0 0
    %2852 = vmatpush1.bf16.msra.mxu0 0
    %2853 = vmatprep.subr.bf16.mxu0 0
    %2854 = vmatpush1.bf16.msra.mxu0 0
    %2855 = vmatprep.subr.bf16.mxu0 0
    %2856 = vmatpush1.bf16.msra.mxu0 0
    %2857 = vmatprep.subr.bf16.mxu0 0
    %2858 = vmatpush1.bf16.msra.mxu0 0
    %2859 = vmatprep.subr.bf16.mxu0 0
    %2860 = vmatpush1.bf16.msra.mxu0 0
    %2861 = vmatprep.subr.bf16.mxu0 0
    %2862 = vmatpush1.bf16.msra.mxu0 0
    %2863 = vmatprep.subr.bf16.mxu0 0
    %2864 = vmatpush1.bf16.msra.mxu0 %v2847
    %2865 = vmatprep.subr.bf16.mxu0 0
    %2866 = vmatpush2.bf16.msra.mxu0 0
    %2867 = vmatprep.subr.bf16.mxu0 0
    %2868 = vmatpush2.bf16.msra.mxu0 0
    %2869 = vmatprep.subr.bf16.mxu0 0
    %2870 = vmatpush2.bf16.msra.mxu0 0
    %2871 = vmatprep.subr.bf16.mxu0 0
    %2872 = vmatpush2.bf16.msra.mxu0 0
    %2873 = vmatprep.subr.bf16.mxu0 0
    %2874 = vmatpush2.bf16.msra.mxu0 0
    %2875 = vmatprep.subr.bf16.mxu0 0
    %2876 = vmatpush2.bf16.msra.mxu0 0
    %2877 = vmatprep.subr.bf16.mxu0 0
    %2878 = vmatpush2.bf16.msra.mxu0 0
    %2879 = vmatprep.subr.bf16.mxu0 0
    %2880 = vmatpush2.bf16.msra.mxu0 0
    %2881 = vmatprep.mubr.bf16.mxu0 0
    %2882 = vmatmul.mubr.bf16.gmra.mxu0 %v2844
    %v2883 = vpop.f32.mrf.mxu0
    %v2884 = vadd.f32 0.0, %v2883
    %v2885 = vpop.f32.mrf.mxu0
    %v2886 = vpop.f32.mrf.mxu0
    %v2887 = vpop.f32.mrf.mxu0
    %2888 = vdwg.mxu0
    %v2890 = vsel %vm1023, %v2746, 0
    %v2893 = vsel %vm1123, %v2278, 0
    %2895 = vmatprep.subr.bf16.mxu0 0
    %2896 = vmatpush1.bf16.msra.mxu0 0
    %2897 = vmatprep.subr.bf16.mxu0 0
    %2898 = vmatpush1.bf16.msra.mxu0 0
    %2899 = vmatprep.subr.bf16.mxu0 0
    %2900 = vmatpush1.bf16.msra.mxu0 0
    %2901 = vmatprep.subr.bf16.mxu0 0
    %2902 = vmatpush1.bf16.msra.mxu0 0
    %2903 = vmatprep.subr.bf16.mxu0 0
    %2904 = vmatpush1.bf16.msra.mxu0 0
    %2905 = vmatprep.subr.bf16.mxu0 0
    %2906 = vmatpush1.bf16.msra.mxu0 0
    %2907 = vmatprep.subr.bf16.mxu0 0
    %2908 = vmatpush1.bf16.msra.mxu0 0
    %2909 = vmatprep.subr.bf16.mxu0 0
    %2910 = vmatpush1.bf16.msra.mxu0 %v2893
    %2911 = vmatprep.subr.bf16.mxu0 0
    %2912 = vmatpush2.bf16.msra.mxu0 0
    %2913 = vmatprep.subr.bf16.mxu0 0
    %2914 = vmatpush2.bf16.msra.mxu0 0
    %2915 = vmatprep.subr.bf16.mxu0 0
    %2916 = vmatpush2.bf16.msra.mxu0 0
    %2917 = vmatprep.subr.bf16.mxu0 0
    %2918 = vmatpush2.bf16.msra.mxu0 0
    %2919 = vmatprep.subr.bf16.mxu0 0
    %2920 = vmatpush2.bf16.msra.mxu0 0
    %2921 = vmatprep.subr.bf16.mxu0 0
    %2922 = vmatpush2.bf16.msra.mxu0 0
    %2923 = vmatprep.subr.bf16.mxu0 0
    %2924 = vmatpush2.bf16.msra.mxu0 0
    %2925 = vmatprep.subr.bf16.mxu0 0
    %2926 = vmatpush2.bf16.msra.mxu0 0
    %2927 = vmatprep.mubr.bf16.mxu0 0
    %2928 = vmatmul.mubr.bf16.gmra.mxu0 %v2890
    %v2929 = vpop.f32.mrf.mxu0
    %v2930 = vadd.f32 0.0, %v2929
    %v2931 = vpop.f32.mrf.mxu0
    %v2932 = vpop.f32.mrf.mxu0
    %v2933 = vpop.f32.mrf.mxu0
    %2934 = vdwg.mxu0
    %v2936 = vsel %vm1023, %v2747, 0
    %v2939 = vsel %vm1123, %v2280, 0
    %2941 = vmatprep.subr.bf16.mxu0 0
    %2942 = vmatpush1.bf16.msra.mxu0 0
    %2943 = vmatprep.subr.bf16.mxu0 0
    %2944 = vmatpush1.bf16.msra.mxu0 0
    %2945 = vmatprep.subr.bf16.mxu0 0
    %2946 = vmatpush1.bf16.msra.mxu0 0
    %2947 = vmatprep.subr.bf16.mxu0 0
    %2948 = vmatpush1.bf16.msra.mxu0 0
    %2949 = vmatprep.subr.bf16.mxu0 0
    %2950 = vmatpush1.bf16.msra.mxu0 0
    %2951 = vmatprep.subr.bf16.mxu0 0
    %2952 = vmatpush1.bf16.msra.mxu0 0
    %2953 = vmatprep.subr.bf16.mxu0 0
    %2954 = vmatpush1.bf16.msra.mxu0 0
    %2955 = vmatprep.subr.bf16.mxu0 0
    %2956 = vmatpush1.bf16.msra.mxu0 %v2939
    %2957 = vmatprep.subr.bf16.mxu0 0
    %2958 = vmatpush2.bf16.msra.mxu0 0
    %2959 = vmatprep.subr.bf16.mxu0 0
    %2960 = vmatpush2.bf16.msra.mxu0 0
    %2961 = vmatprep.subr.bf16.mxu0 0
    %2962 = vmatpush2.bf16.msra.mxu0 0
    %2963 = vmatprep.subr.bf16.mxu0 0
    %2964 = vmatpush2.bf16.msra.mxu0 0
    %2965 = vmatprep.subr.bf16.mxu0 0
    %2966 = vmatpush2.bf16.msra.mxu0 0
    %2967 = vmatprep.subr.bf16.mxu0 0
    %2968 = vmatpush2.bf16.msra.mxu0 0
    %2969 = vmatprep.subr.bf16.mxu0 0
    %2970 = vmatpush2.bf16.msra.mxu0 0
    %2971 = vmatprep.subr.bf16.mxu0 0
    %2972 = vmatpush2.bf16.msra.mxu0 0
    %2973 = vmatprep.mubr.bf16.mxu0 0
    %2974 = vmatmul.mubr.bf16.gmra.mxu0 %v2936
    %v2975 = vpop.f32.mrf.mxu0
    %v2976 = vadd.f32 0.0, %v2975
    %v2977 = vpop.f32.mrf.mxu0
    %v2978 = vpop.f32.mrf.mxu0
    %v2979 = vpop.f32.mrf.mxu0
    %2980 = vdwg.mxu0
    %v2982 = vsel %vm1023, %v2748, 0
    %v2985 = vsel %vm1123, %v2282, 0
    %2987 = vmatprep.subr.bf16.mxu0 0
    %2988 = vmatpush1.bf16.msra.mxu0 0
    %2989 = vmatprep.subr.bf16.mxu0 0
    %2990 = vmatpush1.bf16.msra.mxu0 0
    %2991 = vmatprep.subr.bf16.mxu0 0
    %2992 = vmatpush1.bf16.msra.mxu0 0
    %2993 = vmatprep.subr.bf16.mxu0 0
    %2994 = vmatpush1.bf16.msra.mxu0 0
    %2995 = vmatprep.subr.bf16.mxu0 0
    %2996 = vmatpush1.bf16.msra.mxu0 0
    %2997 = vmatprep.subr.bf16.mxu0 0
    %2998 = vmatpush1.bf16.msra.mxu0 0
    %2999 = vmatprep.subr.bf16.mxu0 0
    %3000 = vmatpush1.bf16.msra.mxu0 0
    %3001 = vmatprep.subr.bf16.mxu0 0
    %3002 = vmatpush1.bf16.msra.mxu0 %v2985
    %3003 = vmatprep.subr.bf16.mxu0 0
    %3004 = vmatpush2.bf16.msra.mxu0 0
    %3005 = vmatprep.subr.bf16.mxu0 0
    %3006 = vmatpush2.bf16.msra.mxu0 0
    %3007 = vmatprep.subr.bf16.mxu0 0
    %3008 = vmatpush2.bf16.msra.mxu0 0
    %3009 = vmatprep.subr.bf16.mxu0 0
    %3010 = vmatpush2.bf16.msra.mxu0 0
    %3011 = vmatprep.subr.bf16.mxu0 0
    %3012 = vmatpush2.bf16.msra.mxu0 0
    %3013 = vmatprep.subr.bf16.mxu0 0
    %3014 = vmatpush2.bf16.msra.mxu0 0
    %3015 = vmatprep.subr.bf16.mxu0 0
    %3016 = vmatpush2.bf16.msra.mxu0 0
    %3017 = vmatprep.subr.bf16.mxu0 0
    %3018 = vmatpush2.bf16.msra.mxu0 0
    %3019 = vmatprep.mubr.bf16.mxu0 0
    %3020 = vmatmul.mubr.bf16.gmra.mxu0 %v2982
    %v3021 = vpop.f32.mrf.mxu0
    %v3022 = vadd.f32 0.0, %v3021
    %v3023 = vpop.f32.mrf.mxu0
    %v3024 = vpop.f32.mrf.mxu0
    %v3025 = vpop.f32.mrf.mxu0
    %3026 = vdwg.mxu0
    %v3028 = vsel %vm1023, %v2749, 0
    %v3031 = vsel %vm1123, %v2284, 0
    %3033 = vmatprep.subr.bf16.mxu0 0
    %3034 = vmatpush1.bf16.msra.mxu0 0
    %3035 = vmatprep.subr.bf16.mxu0 0
    %3036 = vmatpush1.bf16.msra.mxu0 0
    %3037 = vmatprep.subr.bf16.mxu0 0
    %3038 = vmatpush1.bf16.msra.mxu0 0
    %3039 = vmatprep.subr.bf16.mxu0 0
    %3040 = vmatpush1.bf16.msra.mxu0 0
    %3041 = vmatprep.subr.bf16.mxu0 0
    %3042 = vmatpush1.bf16.msra.mxu0 0
    %3043 = vmatprep.subr.bf16.mxu0 0
    %3044 = vmatpush1.bf16.msra.mxu0 0
    %3045 = vmatprep.subr.bf16.mxu0 0
    %3046 = vmatpush1.bf16.msra.mxu0 0
    %3047 = vmatprep.subr.bf16.mxu0 0
    %3048 = vmatpush1.bf16.msra.mxu0 %v3031
    %3049 = vmatprep.subr.bf16.mxu0 0
    %3050 = vmatpush2.bf16.msra.mxu0 0
    %3051 = vmatprep.subr.bf16.mxu0 0
    %3052 = vmatpush2.bf16.msra.mxu0 0
    %3053 = vmatprep.subr.bf16.mxu0 0
    %3054 = vmatpush2.bf16.msra.mxu0 0
    %3055 = vmatprep.subr.bf16.mxu0 0
    %3056 = vmatpush2.bf16.msra.mxu0 0
    %3057 = vmatprep.subr.bf16.mxu0 0
    %3058 = vmatpush2.bf16.msra.mxu0 0
    %3059 = vmatprep.subr.bf16.mxu0 0
    %3060 = vmatpush2.bf16.msra.mxu0 0
    %3061 = vmatprep.subr.bf16.mxu0 0
    %3062 = vmatpush2.bf16.msra.mxu0 0
    %3063 = vmatprep.subr.bf16.mxu0 0
    %3064 = vmatpush2.bf16.msra.mxu0 0
    %3065 = vmatprep.mubr.bf16.mxu0 0
    %3066 = vmatmul.mubr.bf16.gmra.mxu0 %v3028
    %v3067 = vpop.f32.mrf.mxu0
    %v3068 = vadd.f32 0.0, %v3067
    %v3069 = vpop.f32.mrf.mxu0
    %v3070 = vpop.f32.mrf.mxu0
    %v3071 = vpop.f32.mrf.mxu0
    %3072 = vdwg.mxu0
    %v3074 = vsel %vm1023, %v2750, 0
    %v3077 = vsel %vm1123, %v2286, 0
    %3079 = vmatprep.subr.bf16.mxu0 0
    %3080 = vmatpush1.bf16.msra.mxu0 0
    %3081 = vmatprep.subr.bf16.mxu0 0
    %3082 = vmatpush1.bf16.msra.mxu0 0
    %3083 = vmatprep.subr.bf16.mxu0 0
    %3084 = vmatpush1.bf16.msra.mxu0 0
    %3085 = vmatprep.subr.bf16.mxu0 0
    %3086 = vmatpush1.bf16.msra.mxu0 0
    %3087 = vmatprep.subr.bf16.mxu0 0
    %3088 = vmatpush1.bf16.msra.mxu0 0
    %3089 = vmatprep.subr.bf16.mxu0 0
    %3090 = vmatpush1.bf16.msra.mxu0 0
    %3091 = vmatprep.subr.bf16.mxu0 0
    %3092 = vmatpush1.bf16.msra.mxu0 0
    %3093 = vmatprep.subr.bf16.mxu0 0
    %3094 = vmatpush1.bf16.msra.mxu0 %v3077
    %3095 = vmatprep.subr.bf16.mxu0 0
    %3096 = vmatpush2.bf16.msra.mxu0 0
    %3097 = vmatprep.subr.bf16.mxu0 0
    %3098 = vmatpush2.bf16.msra.mxu0 0
    %3099 = vmatprep.subr.bf16.mxu0 0
    %3100 = vmatpush2.bf16.msra.mxu0 0
    %3101 = vmatprep.subr.bf16.mxu0 0
    %3102 = vmatpush2.bf16.msra.mxu0 0
    %3103 = vmatprep.subr.bf16.mxu0 0
    %3104 = vmatpush2.bf16.msra.mxu0 0
    %3105 = vmatprep.subr.bf16.mxu0 0
    %3106 = vmatpush2.bf16.msra.mxu0 0
    %3107 = vmatprep.subr.bf16.mxu0 0
    %3108 = vmatpush2.bf16.msra.mxu0 0
    %3109 = vmatprep.subr.bf16.mxu0 0
    %3110 = vmatpush2.bf16.msra.mxu0 0
    %3111 = vmatprep.mubr.bf16.mxu0 0
    %3112 = vmatmul.mubr.bf16.gmra.mxu0 %v3074
    %v3113 = vpop.f32.mrf.mxu0
    %v3114 = vadd.f32 0.0, %v3113
    %v3115 = vpop.f32.mrf.mxu0
    %v3116 = vpop.f32.mrf.mxu0
    %v3117 = vpop.f32.mrf.mxu0
    %3118 = vdwg.mxu0
    %v3119 = vpack.c.bf16 %v2792, %v2792
    %v3120 = vpack.c.bf16 %v2838, %v2838
    %v3121 = vpack.c.bf16 %v2884, %v2884
    %v3122 = vpack.c.bf16 %v2930, %v2930
    %v3123 = vpack.c.bf16 %v2976, %v2976
    %v3124 = vpack.c.bf16 %v3022, %v3022
    %v3125 = vpack.c.bf16 %v3068, %v3068
    %v3126 = vpack.c.bf16 %v3114, %v3114
    %3129 = vrot.lane.b32.xlu0 %v3121, 32
    %v3130 = vpop.permute.xlu0 %3129
    %3131 = vrot.lane.b32.xlu0 %v3122, 32
    %v3132 = vpop.permute.xlu0 %3131
    %3135 = vrot.lane.b32.xlu0 %v3123, 64
    %v3136 = vpop.permute.xlu0 %3135
    %3137 = vrot.lane.b32.xlu0 %v3124, 64
    %v3138 = vpop.permute.xlu0 %3137
    %3141 = vrot.lane.b32.xlu0 %v3125, 96
    %v3142 = vpop.permute.xlu0 %3141
    %3143 = vrot.lane.b32.xlu0 %v3126, 96
    %v3144 = vpop.permute.xlu0 %3143
    %v3147 = vsel %vm654, %v3119, %v3130
    %v3150 = vsel %vm654, %v3120, %v3132
    %v3152 = vsel %vm290, %v3147, %v3136
    %v3154 = vsel %vm290, %v3150, %v3138
    %v3156 = vsel %vm1525, %v3152, %v3142
    %v3158 = vsel %vm1525, %v3154, %v3144
    %s3159 = scalar_lea.vmem [#allocation7], 64
    %v3160 = vld [vmem:[%s3159] sm:$0xf]
    %v3161 = vld [vmem:[%s3159 + $0x4] sm:$0xf]
    %v3162 = vld [vmem:[%s3159 + $0x8] sm:$0xf]
    %v3163 = vld [vmem:[%s3159 + $0xc] sm:$0xf]
    %v3164 = vld [vmem:[%s3159 + $0x10] sm:$0xf]
    %v3165 = vld [vmem:[%s3159 + $0x14] sm:$0xf]
    %v3166 = vld [vmem:[%s3159 + $0x18] sm:$0xf]
    %v3167 = vld [vmem:[%s3159 + $0x1c] sm:$0xf]
    %v3168 = vld [vmem:[%s3159 + $0x20] sm:$0xf]
    %v3169 = vld [vmem:[%s3159 + $0x24] sm:$0xf]
    %v3170 = vld [vmem:[%s3159 + $0x28] sm:$0xf]
    %v3171 = vld [vmem:[%s3159 + $0x2c] sm:$0xf]
    %v3172 = vld [vmem:[%s3159 + $0x30] sm:$0xf]
    %v3173 = vld [vmem:[%s3159 + $0x34] sm:$0xf]
    %v3174 = vld [vmem:[%s3159 + $0x38] sm:$0xf]
    %v3175 = vld [vmem:[%s3159 + $0x3c] sm:$0xf]
    %s3176 = scalar_lea.vmem %s6, 1
    %v3177 = vld [vmem:[%s3176] sm:$0x1]
    %v3179 = vlaneseq
    %v3180 = vshrl.u32 %v3179, 7
    %v3181 = vsub.s32 0, %v3180
    %v3182 = vrot.slane %v3177, %v3181
    %v3186 = vunpack.c.l.b16 %v3156
    %v3187 = vunpack.c.l.b16 %v3158
    %v3188 = vpack.c.b16 %v3187, %v3186
    %v3206 = vunpack.c.l.b16 %v3160
    %v3207 = vunpack.c.l.b16 %v3161
    %v3208 = vunpack.c.l.b16 %v3162
    %v3209 = vunpack.c.l.b16 %v3163
    %v3210 = vunpack.c.l.b16 %v3164
    %v3211 = vunpack.c.l.b16 %v3165
    %v3212 = vunpack.c.l.b16 %v3166
    %v3213 = vunpack.c.l.b16 %v3167
    %v3214 = vunpack.c.l.b16 %v3168
    %v3215 = vunpack.c.l.b16 %v3169
    %v3216 = vunpack.c.l.b16 %v3170
    %v3217 = vunpack.c.l.b16 %v3171
    %v3218 = vunpack.c.l.b16 %v3172
    %v3219 = vunpack.c.l.b16 %v3173
    %v3220 = vunpack.c.l.b16 %v3174
    %v3221 = vunpack.c.l.b16 %v3175
    %v3222 = vpack.c.b16 %v3207, %v3206
    %v3223 = vpack.c.b16 %v3209, %v3208
    %v3224 = vpack.c.b16 %v3211, %v3210
    %v3225 = vpack.c.b16 %v3213, %v3212
    %v3226 = vpack.c.b16 %v3215, %v3214
    %v3227 = vpack.c.b16 %v3217, %v3216
    %v3228 = vpack.c.b16 %v3219, %v3218
    %v3229 = vpack.c.b16 %v3221, %v3220
    %3238 = vmatprep.subr.bf16.mxu0 0
    %3239 = vmatpush1.bf16.msra.mxu0 %v3229
    %3240 = vmatprep.subr.bf16.mxu0 0
    %3241 = vmatpush1.bf16.msra.mxu0 %v3228
    %3242 = vmatprep.subr.bf16.mxu0 0
    %3243 = vmatpush1.bf16.msra.mxu0 %v3227
    %3244 = vmatprep.subr.bf16.mxu0 0
    %3245 = vmatpush1.bf16.msra.mxu0 %v3226
    %3246 = vmatprep.subr.bf16.mxu0 0
    %3247 = vmatpush1.bf16.msra.mxu0 %v3225
    %3248 = vmatprep.subr.bf16.mxu0 0
    %3249 = vmatpush1.bf16.msra.mxu0 %v3224
    %3250 = vmatprep.subr.bf16.mxu0 0
    %3251 = vmatpush1.bf16.msra.mxu0 %v3223
    %3252 = vmatprep.subr.bf16.mxu0 0
    %3253 = vmatpush1.bf16.msra.mxu0 %v3222
    %3254 = vmatprep.subr.bf16.mxu0 0
    %3255 = vmatpush2.bf16.msra.mxu0 0
    %3256 = vmatprep.subr.bf16.mxu0 0
    %3257 = vmatpush2.bf16.msra.mxu0 0
    %3258 = vmatprep.subr.bf16.mxu0 0
    %3259 = vmatpush2.bf16.msra.mxu0 0
    %3260 = vmatprep.subr.bf16.mxu0 0
    %3261 = vmatpush2.bf16.msra.mxu0 0
    %3262 = vmatprep.subr.bf16.mxu0 0
    %3263 = vmatpush2.bf16.msra.mxu0 0
    %3264 = vmatprep.subr.bf16.mxu0 0
    %3265 = vmatpush2.bf16.msra.mxu0 0
    %3266 = vmatprep.subr.bf16.mxu0 0
    %3267 = vmatpush2.bf16.msra.mxu0 0
    %3268 = vmatprep.subr.bf16.mxu0 0
    %3269 = vmatpush2.bf16.msra.mxu0 0
    %3270 = vmatprep.mubr.bf16.mxu0 0
    %3271 = vmatmul.mubr.bf16.gmra.mxu0 %v3188
    %v3272 = vpop.f32.mrf.mxu0
    %v3273 = vadd.f32 %v3182, %v3272
    %v3274 = vpop.f32.mrf.mxu0
    %v3275 = vpop.f32.mrf.mxu0
    %v3276 = vadd.f32 %v3182, %v3275
    %v3277 = vpop.f32.mrf.mxu0
    %3278 = vdwg.mxu0
    %v3279 = vadd.f32 %v1967, %v3273
    %v3280 = vadd.f32 %v1968, %v3276
    %s3281 = scalar_lea.vmem %s7, 1
    %v3282 = vld [vmem:[%s3281] sm:$0x1]
    %s3283 = scalar_lea.vmem %s8, 1
    %v3284 = vld [vmem:[%s3283] sm:$0x1]
    %3285 = vadd.xlane.f32.xlu0 %v3279
    %v3286 = vpop.xlane.xlu0 %3285
    %3287 = vadd.xlane.f32.xlu0 %v3280
    %v3288 = vpop.xlane.xlu0 %3287
    %v3289 = vmul.f32 %v3286, %v1656
    %v3290 = vmul.f32 %v3288, %v1656
    %v3291 = vmul.f32 %v3279, %v3279
    %v3292 = vmul.f32 %v3280, %v3280
    %3293 = vadd.xlane.f32.xlu0 %v3291
    %v3294 = vpop.xlane.xlu0 %3293
    %3295 = vadd.xlane.f32.xlu0 %v3292
    %v3296 = vpop.xlane.xlu0 %3295
    %v3297 = vmul.f32 %v3294, %v1656
    %v3298 = vmul.f32 %v3296, %v1656
    %v3299 = vmul.f32 %v3289, %v3289
    %v3300 = vmul.f32 %v3290, %v3290
    %v3301 = vsub.f32 %v3297, %v3299
    %v3302 = vsub.f32 %v3298, %v3300
    %v3303 = vsub.f32 %v3279, %v3289
    %v3304 = vsub.f32 %v3280, %v3290
    %v3305 = vadd.f32 %v3301, 1e-05
    %v3306 = vadd.f32 %v3302, 1e-05
    %v3307 = vrsqrt.pop %v3305
    %v3308 = vrsqrt.pop %v3306
    %v3309 = vmul.f32 %v3303, %v3307
    %v3310 = vmul.f32 %v3304, %v3308
    %v3312 = vlaneseq
    %v3313 = vshrl.u32 %v3312, 7
    %v3314 = vsub.s32 0, %v3313
    %v3315 = vrot.slane %v3282, %v3314
    %v3317 = vmul.f32 %v3309, %v3315
    %v3318 = vmul.f32 %v3310, %v3315
    %v3320 = vlaneseq
    %v3321 = vshrl.u32 %v3320, 7
    %v3322 = vsub.s32 0, %v3321
    %v3323 = vrot.slane %v3284, %v3322
    %v3325 = vadd.f32 %v3317, %v3323
    %v3326 = vadd.f32 %v3318, %v3323
    %v3327 = vpack.c.bf16 %v3326, %v3325
    %s3328 = scalar_lea.vmem [#allocation8], 64
    %v3329 = vld [vmem:[%s3328] sm:$0xf]
    %v3330 = vld [vmem:[%s3328 + $0x4] sm:$0xf]
    %v3331 = vld [vmem:[%s3328 + $0x8] sm:$0xf]
    %v3332 = vld [vmem:[%s3328 + $0xc] sm:$0xf]
    %v3333 = vld [vmem:[%s3328 + $0x10] sm:$0xf]
    %v3334 = vld [vmem:[%s3328 + $0x14] sm:$0xf]
    %v3335 = vld [vmem:[%s3328 + $0x18] sm:$0xf]
    %v3336 = vld [vmem:[%s3328 + $0x1c] sm:$0xf]
    %v3337 = vld [vmem:[%s3328 + $0x20] sm:$0xf]
    %v3338 = vld [vmem:[%s3328 + $0x24] sm:$0xf]
    %v3339 = vld [vmem:[%s3328 + $0x28] sm:$0xf]
    %v3340 = vld [vmem:[%s3328 + $0x2c] sm:$0xf]
    %v3341 = vld [vmem:[%s3328 + $0x30] sm:$0xf]
    %v3342 = vld [vmem:[%s3328 + $0x34] sm:$0xf]
    %v3343 = vld [vmem:[%s3328 + $0x38] sm:$0xf]
    %v3344 = vld [vmem:[%s3328 + $0x3c] sm:$0xf]
    %s3345 = scalar_lea.vmem [#allocation10], 1
    %v3346 = vld [vmem:[%s3345] sm:$0x1]
    %v3348 = vlaneseq
    %v3349 = vshrl.u32 %v3348, 7
    %v3350 = vsub.s32 0, %v3349
    %v3351 = vrot.slane %v3346, %v3350
    %v3369 = vunpack.c.l.b16 %v3329
    %v3370 = vunpack.c.l.b16 %v3330
    %v3371 = vunpack.c.l.b16 %v3331
    %v3372 = vunpack.c.l.b16 %v3332
    %v3373 = vunpack.c.l.b16 %v3333
    %v3374 = vunpack.c.l.b16 %v3334
    %v3375 = vunpack.c.l.b16 %v3335
    %v3376 = vunpack.c.l.b16 %v3336
    %v3377 = vunpack.c.l.b16 %v3337
    %v3378 = vunpack.c.l.b16 %v3338
    %v3379 = vunpack.c.l.b16 %v3339
    %v3380 = vunpack.c.l.b16 %v3340
    %v3381 = vunpack.c.l.b16 %v3341
    %v3382 = vunpack.c.l.b16 %v3342
    %v3383 = vunpack.c.l.b16 %v3343
    %v3384 = vunpack.c.l.b16 %v3344
    %v3385 = vpack.c.b16 %v3370, %v3369
    %v3386 = vpack.c.b16 %v3372, %v3371
    %v3387 = vpack.c.b16 %v3374, %v3373
    %v3388 = vpack.c.b16 %v3376, %v3375
    %v3389 = vpack.c.b16 %v3378, %v3377
    %v3390 = vpack.c.b16 %v3380, %v3379
    %v3391 = vpack.c.b16 %v3382, %v3381
    %v3392 = vpack.c.b16 %v3384, %v3383
    %3401 = vmatprep.subr.bf16.mxu0 0
    %3402 = vmatpush1.bf16.msra.mxu0 %v3392
    %3403 = vmatprep.subr.bf16.mxu0 0
    %3404 = vmatpush1.bf16.msra.mxu0 %v3391
    %3405 = vmatprep.subr.bf16.mxu0 0
    %3406 = vmatpush1.bf16.msra.mxu0 %v3390
    %3407 = vmatprep.subr.bf16.mxu0 0
    %3408 = vmatpush1.bf16.msra.mxu0 %v3389
    %3409 = vmatprep.subr.bf16.mxu0 0
    %3410 = vmatpush1.bf16.msra.mxu0 %v3388
    %3411 = vmatprep.subr.bf16.mxu0 0
    %3412 = vmatpush1.bf16.msra.mxu0 %v3387
    %3413 = vmatprep.subr.bf16.mxu0 0
    %3414 = vmatpush1.bf16.msra.mxu0 %v3386
    %3415 = vmatprep.subr.bf16.mxu0 0
    %3416 = vmatpush1.bf16.msra.mxu0 %v3385
    %3417 = vmatprep.subr.bf16.mxu0 0
    %3418 = vmatpush2.bf16.msra.mxu0 0
    %3419 = vmatprep.subr.bf16.mxu0 0
    %3420 = vmatpush2.bf16.msra.mxu0 0
    %3421 = vmatprep.subr.bf16.mxu0 0
    %3422 = vmatpush2.bf16.msra.mxu0 0
    %3423 = vmatprep.subr.bf16.mxu0 0
    %3424 = vmatpush2.bf16.msra.mxu0 0
    %3425 = vmatprep.subr.bf16.mxu0 0
    %3426 = vmatpush2.bf16.msra.mxu0 0
    %3427 = vmatprep.subr.bf16.mxu0 0
    %3428 = vmatpush2.bf16.msra.mxu0 0
    %3429 = vmatprep.subr.bf16.mxu0 0
    %3430 = vmatpush2.bf16.msra.mxu0 0
    %3431 = vmatprep.subr.bf16.mxu0 0
    %3432 = vmatpush2.bf16.msra.mxu0 0
    %3433 = vmatprep.mubr.bf16.mxu0 0
    %3434 = vmatmul.mubr.bf16.gmra.mxu0 %v3327
    %v3435 = vpop.f32.mrf.mxu0
    %v3436 = vadd.f32 %v3351, %v3435
    %v3437 = vpop.f32.mrf.mxu0
    %v3438 = vpop.f32.mrf.mxu0
    %v3439 = vadd.f32 %v3351, %v3438
    %v3440 = vpop.f32.mrf.mxu0
    %3441 = vdwg.mxu0
    %v3442 = vmax.f32 %v3436, 0.0
    %v3443 = vmax.f32 %v3439, 0.0
    %v3444 = vpack.c.bf16 %v3443, %v3442
    %s3445 = scalar_lea.vmem [#allocation11], 64
    %v3446 = vld [vmem:[%s3445] sm:$0xf]
    %v3447 = vld [vmem:[%s3445 + $0x4] sm:$0xf]
    %v3448 = vld [vmem:[%s3445 + $0x8] sm:$0xf]
    %v3449 = vld [vmem:[%s3445 + $0xc] sm:$0xf]
    %v3450 = vld [vmem:[%s3445 + $0x10] sm:$0xf]
    %v3451 = vld [vmem:[%s3445 + $0x14] sm:$0xf]
    %v3452 = vld [vmem:[%s3445 + $0x18] sm:$0xf]
    %v3453 = vld [vmem:[%s3445 + $0x1c] sm:$0xf]
    %v3454 = vld [vmem:[%s3445 + $0x20] sm:$0xf]
    %v3455 = vld [vmem:[%s3445 + $0x24] sm:$0xf]
    %v3456 = vld [vmem:[%s3445 + $0x28] sm:$0xf]
    %v3457 = vld [vmem:[%s3445 + $0x2c] sm:$0xf]
    %v3458 = vld [vmem:[%s3445 + $0x30] sm:$0xf]
    %v3459 = vld [vmem:[%s3445 + $0x34] sm:$0xf]
    %v3460 = vld [vmem:[%s3445 + $0x38] sm:$0xf]
    %v3461 = vld [vmem:[%s3445 + $0x3c] sm:$0xf]
    %s3462 = scalar_lea.vmem [#allocation13], 1
    %v3463 = vld [vmem:[%s3462] sm:$0x1]
    %v3465 = vlaneseq
    %v3466 = vshrl.u32 %v3465, 7
    %v3467 = vsub.s32 0, %v3466
    %v3468 = vrot.slane %v3463, %v3467
    %v3486 = vunpack.c.l.b16 %v3446
    %v3487 = vunpack.c.l.b16 %v3447
    %v3488 = vunpack.c.l.b16 %v3448
    %v3489 = vunpack.c.l.b16 %v3449
    %v3490 = vunpack.c.l.b16 %v3450
    %v3491 = vunpack.c.l.b16 %v3451
    %v3492 = vunpack.c.l.b16 %v3452
    %v3493 = vunpack.c.l.b16 %v3453
    %v3494 = vunpack.c.l.b16 %v3454
    %v3495 = vunpack.c.l.b16 %v3455
    %v3496 = vunpack.c.l.b16 %v3456
    %v3497 = vunpack.c.l.b16 %v3457
    %v3498 = vunpack.c.l.b16 %v3458
    %v3499 = vunpack.c.l.b16 %v3459
    %v3500 = vunpack.c.l.b16 %v3460
    %v3501 = vunpack.c.l.b16 %v3461
    %v3502 = vpack.c.b16 %v3487, %v3486
    %v3503 = vpack.c.b16 %v3489, %v3488
    %v3504 = vpack.c.b16 %v3491, %v3490
    %v3505 = vpack.c.b16 %v3493, %v3492
    %v3506 = vpack.c.b16 %v3495, %v3494
    %v3507 = vpack.c.b16 %v3497, %v3496
    %v3508 = vpack.c.b16 %v3499, %v3498
    %v3509 = vpack.c.b16 %v3501, %v3500
    %3518 = vmatprep.subr.bf16.mxu0 0
    %3519 = vmatpush1.bf16.msra.mxu0 %v3509
    %3520 = vmatprep.subr.bf16.mxu0 0
    %3521 = vmatpush1.bf16.msra.mxu0 %v3508
    %3522 = vmatprep.subr.bf16.mxu0 0
    %3523 = vmatpush1.bf16.msra.mxu0 %v3507
    %3524 = vmatprep.subr.bf16.mxu0 0
    %3525 = vmatpush1.bf16.msra.mxu0 %v3506
    %3526 = vmatprep.subr.bf16.mxu0 0
    %3527 = vmatpush1.bf16.msra.mxu0 %v3505
    %3528 = vmatprep.subr.bf16.mxu0 0
    %3529 = vmatpush1.bf16.msra.mxu0 %v3504
    %3530 = vmatprep.subr.bf16.mxu0 0
    %3531 = vmatpush1.bf16.msra.mxu0 %v3503
    %3532 = vmatprep.subr.bf16.mxu0 0
    %3533 = vmatpush1.bf16.msra.mxu0 %v3502
    %3534 = vmatprep.subr.bf16.mxu0 0
    %3535 = vmatpush2.bf16.msra.mxu0 0
    %3536 = vmatprep.subr.bf16.mxu0 0
    %3537 = vmatpush2.bf16.msra.mxu0 0
    %3538 = vmatprep.subr.bf16.mxu0 0
    %3539 = vmatpush2.bf16.msra.mxu0 0
    %3540 = vmatprep.subr.bf16.mxu0 0
    %3541 = vmatpush2.bf16.msra.mxu0 0
    %3542 = vmatprep.subr.bf16.mxu0 0
    %3543 = vmatpush2.bf16.msra.mxu0 0
    %3544 = vmatprep.subr.bf16.mxu0 0
    %3545 = vmatpush2.bf16.msra.mxu0 0
    %3546 = vmatprep.subr.bf16.mxu0 0
    %3547 = vmatpush2.bf16.msra.mxu0 0
    %3548 = vmatprep.subr.bf16.mxu0 0
    %3549 = vmatpush2.bf16.msra.mxu0 0
    %3550 = vmatprep.mubr.bf16.mxu0 0
    %3551 = vmatmul.mubr.bf16.gmra.mxu0 %v3444
    %v3552 = vpop.f32.mrf.mxu0
    %v3553 = vadd.f32 %v3468, %v3552
    %v3554 = vpop.f32.mrf.mxu0
    %v3555 = vpop.f32.mrf.mxu0
    %v3556 = vadd.f32 %v3468, %v3555
    %v3557 = vpop.f32.mrf.mxu0
    %3558 = vdwg.mxu0
    %v3559 = vadd.f32 %v3325, %v3553
    %v3560 = vadd.f32 %v3326, %v3556
    %s3561 = scalar_lea.vmem [#allocation14], 1
    %v3562 = vld [vmem:[%s3561] sm:$0x1]
    %s3563 = scalar_lea.vmem [#allocation16], 1
    %v3564 = vld [vmem:[%s3563] sm:$0x1]
    %3565 = vadd.xlane.f32.xlu0 %v3559
    %v3566 = vpop.xlane.xlu0 %3565
    %3567 = vadd.xlane.f32.xlu0 %v3560
    %v3568 = vpop.xlane.xlu0 %3567
    %v3569 = vmul.f32 %v3566, %v1656
    %v3570 = vmul.f32 %v3568, %v1656
    %v3571 = vmul.f32 %v3559, %v3559
    %v3572 = vmul.f32 %v3560, %v3560
    %3573 = vadd.xlane.f32.xlu0 %v3571
    %v3574 = vpop.xlane.xlu0 %3573
    %3575 = vadd.xlane.f32.xlu0 %v3572
    %v3576 = vpop.xlane.xlu0 %3575
    %v3577 = vmul.f32 %v3574, %v1656
    %v3578 = vmul.f32 %v3576, %v1656
    %v3579 = vmul.f32 %v3569, %v3569
    %v3580 = vmul.f32 %v3570, %v3570
    %v3581 = vsub.f32 %v3577, %v3579
    %v3582 = vsub.f32 %v3578, %v3580
    %v3583 = vsub.f32 %v3559, %v3569
    %v3584 = vsub.f32 %v3560, %v3570
    %v3585 = vadd.f32 %v3581, 1e-05
    %v3586 = vadd.f32 %v3582, 1e-05
    %v3587 = vrsqrt.pop %v3585
    %v3588 = vrsqrt.pop %v3586
    %v3589 = vmul.f32 %v3583, %v3587
    %v3590 = vmul.f32 %v3584, %v3588
    %v3592 = vlaneseq
    %v3593 = vshrl.u32 %v3592, 7
    %v3594 = vsub.s32 0, %v3593
    %v3595 = vrot.slane %v3562, %v3594
    %v3597 = vmul.f32 %v3589, %v3595
    %v3598 = vmul.f32 %v3590, %v3595
    %v3600 = vlaneseq
    %v3601 = vshrl.u32 %v3600, 7
    %v3602 = vsub.s32 0, %v3601
    %v3603 = vrot.slane %v3564, %v3602
    %v3605 = vadd.f32 %v3597, %v3603
    %v3606 = vadd.f32 %v3598, %v3603
    %v3607 = vrot.slane %v3605, 4
    %v3608 = vmax.f32 %v3605, %v3607
    %v3609 = vrot.slane %v3608, 2
    %v3610 = vmax.f32 %v3608, %v3609
    %v3611 = vrot.slane %v3610, 1
    %v3612 = vmax.f32 %v3610, %v3611
    %v3613 = vrot.slane %v3606, 4
    %v3614 = vmax.f32 %v3606, %v3613
    %v3615 = vrot.slane %v3614, 2
    %v3616 = vmax.f32 %v3614, %v3615
    %v3617 = vrot.slane %v3616, 1
    %v3618 = vmax.f32 %v3616, %v3617
    %v3619 = vpack.c.bf16 %v3605, %v3605
    %v3620 = vpack.c.bf16 %v3606, %v3606
    %v3621 = vld [vmem:[#allocation17] sm:$0xf]
    %v3622 = vld [vmem:[#allocation17 + $0x4] sm:$0xf]
    %v3623 = vld [vmem:[#allocation17 + $0x8] sm:$0xf]
    %v3624 = vld [vmem:[#allocation17 + $0xc] sm:$0xf]
    %v3625 = vld [vmem:[#allocation17 + $0x10] sm:$0xf]
    %v3626 = vld [vmem:[#allocation17 + $0x14] sm:$0xf]
    %v3627 = vld [vmem:[#allocation17 + $0x18] sm:$0xf]
    %v3628 = vld [vmem:[#allocation17 + $0x1c] sm:$0xf]
    %v3629 = vld [vmem:[#allocation17 + $0x20] sm:$0xf]
    %v3630 = vld [vmem:[#allocation17 + $0x24] sm:$0xf]
    %v3631 = vld [vmem:[#allocation17 + $0x28] sm:$0xf]
    %v3632 = vld [vmem:[#allocation17 + $0x2c] sm:$0xf]
    %v3633 = vld [vmem:[#allocation17 + $0x30] sm:$0xf]
    %v3634 = vld [vmem:[#allocation17 + $0x34] sm:$0xf]
    %v3635 = vld [vmem:[#allocation17 + $0x38] sm:$0xf]
    %v3636 = vld [vmem:[#allocation17 + $0x3c] sm:$0xf]
    %v3637 = vpack.c.bf16 %v3612, %v3612
    %v3638 = vpack.c.bf16 %v3618, %v3618
    %v3639 = vld [vmem:[#allocation19] sm:$0xf]
    %v3640 = vld [vmem:[#allocation19 + $0x4] sm:$0xf]
    %v3641 = vld [vmem:[#allocation19 + $0x8] sm:$0xf]
    %v3642 = vld [vmem:[#allocation19 + $0xc] sm:$0xf]
    %v3643 = vld [vmem:[#allocation19 + $0x10] sm:$0xf]
    %v3644 = vld [vmem:[#allocation19 + $0x14] sm:$0xf]
    %v3645 = vld [vmem:[#allocation19 + $0x18] sm:$0xf]
    %v3646 = vld [vmem:[#allocation19 + $0x1c] sm:$0xf]
    %v3647 = vld [vmem:[#allocation19 + $0x20] sm:$0xf]
    %v3648 = vld [vmem:[#allocation19 + $0x24] sm:$0xf]
    %v3649 = vld [vmem:[#allocation19 + $0x28] sm:$0xf]
    %v3650 = vld [vmem:[#allocation19 + $0x2c] sm:$0xf]
    %v3651 = vld [vmem:[#allocation19 + $0x30] sm:$0xf]
    %v3652 = vld [vmem:[#allocation19 + $0x34] sm:$0xf]
    %v3653 = vld [vmem:[#allocation19 + $0x38] sm:$0xf]
    %v3654 = vld [vmem:[#allocation19 + $0x3c] sm:$0xf]
    %v3657 = vunpack.c.l.b16 %v3637
    %v3658 = vunpack.c.l.b16 %v3638
    %vm3659 = vcmask 1041409
    %v3660 = vsel %vm3659, %v3658, %v3657
    %v3661 = vpack.c.b16 %v3660, %v3660
    %v3679 = vunpack.c.l.b16 %v3639
    %v3680 = vunpack.c.l.b16 %v3640
    %v3681 = vunpack.c.l.b16 %v3641
    %v3682 = vunpack.c.l.b16 %v3642
    %v3683 = vunpack.c.l.b16 %v3643
    %v3684 = vunpack.c.l.b16 %v3644
    %v3685 = vunpack.c.l.b16 %v3645
    %v3686 = vunpack.c.l.b16 %v3646
    %v3687 = vunpack.c.l.b16 %v3647
    %v3688 = vunpack.c.l.b16 %v3648
    %v3689 = vunpack.c.l.b16 %v3649
    %v3690 = vunpack.c.l.b16 %v3650
    %v3691 = vunpack.c.l.b16 %v3651
    %v3692 = vunpack.c.l.b16 %v3652
    %v3693 = vunpack.c.l.b16 %v3653
    %v3694 = vunpack.c.l.b16 %v3654
    %v3695 = vpack.c.b16 %v3680, %v3679
    %v3696 = vpack.c.b16 %v3682, %v3681
    %v3697 = vpack.c.b16 %v3684, %v3683
    %v3698 = vpack.c.b16 %v3686, %v3685
    %v3699 = vpack.c.b16 %v3688, %v3687
    %v3700 = vpack.c.b16 %v3690, %v3689
    %v3701 = vpack.c.b16 %v3692, %v3691
    %v3702 = vpack.c.b16 %v3694, %v3693
    %3711 = vmatprep.subr.bf16.mxu0 0
    %3712 = vmatpush1.bf16.msra.mxu0 %v3702
    %3713 = vmatprep.subr.bf16.mxu0 0
    %3714 = vmatpush1.bf16.msra.mxu0 %v3701
    %3715 = vmatprep.subr.bf16.mxu0 0
    %3716 = vmatpush1.bf16.msra.mxu0 %v3700
    %3717 = vmatprep.subr.bf16.mxu0 0
    %3718 = vmatpush1.bf16.msra.mxu0 %v3699
    %3719 = vmatprep.subr.bf16.mxu0 0
    %3720 = vmatpush1.bf16.msra.mxu0 %v3698
    %3721 = vmatprep.subr.bf16.mxu0 0
    %3722 = vmatpush1.bf16.msra.mxu0 %v3697
    %3723 = vmatprep.subr.bf16.mxu0 0
    %3724 = vmatpush1.bf16.msra.mxu0 %v3696
    %3725 = vmatprep.subr.bf16.mxu0 0
    %3726 = vmatpush1.bf16.msra.mxu0 %v3695
    %3727 = vmatprep.subr.bf16.mxu0 0
    %3728 = vmatpush2.bf16.msra.mxu0 0
    %3729 = vmatprep.subr.bf16.mxu0 0
    %3730 = vmatpush2.bf16.msra.mxu0 0
    %3731 = vmatprep.subr.bf16.mxu0 0
    %3732 = vmatpush2.bf16.msra.mxu0 0
    %3733 = vmatprep.subr.bf16.mxu0 0
    %3734 = vmatpush2.bf16.msra.mxu0 0
    %3735 = vmatprep.subr.bf16.mxu0 0
    %3736 = vmatpush2.bf16.msra.mxu0 0
    %3737 = vmatprep.subr.bf16.mxu0 0
    %3738 = vmatpush2.bf16.msra.mxu0 0
    %3739 = vmatprep.subr.bf16.mxu0 0
    %3740 = vmatpush2.bf16.msra.mxu0 0
    %3741 = vmatprep.subr.bf16.mxu0 0
    %3742 = vmatpush2.bf16.msra.mxu0 0
    %3743 = vmatprep.mubr.bf16.mxu0 0
    %3744 = vmatmul.mubr.bf16.gmra.mxu0 %v3661
    %v3745 = vpop.f32.mrf.mxu0
    %v3746 = vadd.f32 0.0, %v3745
    %v3747 = vpop.f32.mrf.mxu0
    %v3748 = vpop.f32.mrf.mxu0
    %v3749 = vpop.f32.mrf.mxu0
    %3750 = vdwg.mxu0
    %v3753 = vunpack.c.l.b16 %v3619
    %v3754 = vunpack.c.l.b16 %v3620
    %v3755 = vrot.slane %v3754, 7
    %v3756 = vsel %vm3659, %v3755, %v3753
    %v3757 = vpack.c.b16 %v3756, %v3756
    %v3775 = vunpack.c.l.b16 %v3621
    %v3776 = vunpack.c.l.b16 %v3622
    %v3777 = vunpack.c.l.b16 %v3623
    %v3778 = vunpack.c.l.b16 %v3624
    %v3779 = vunpack.c.l.b16 %v3625
    %v3780 = vunpack.c.l.b16 %v3626
    %v3781 = vunpack.c.l.b16 %v3627
    %v3782 = vunpack.c.l.b16 %v3628
    %v3783 = vunpack.c.l.b16 %v3629
    %v3784 = vunpack.c.l.b16 %v3630
    %v3785 = vunpack.c.l.b16 %v3631
    %v3786 = vunpack.c.l.b16 %v3632
    %v3787 = vunpack.c.l.b16 %v3633
    %v3788 = vunpack.c.l.b16 %v3634
    %v3789 = vunpack.c.l.b16 %v3635
    %v3790 = vunpack.c.l.b16 %v3636
    %v3791 = vpack.c.b16 %v3776, %v3775
    %v3792 = vpack.c.b16 %v3778, %v3777
    %v3793 = vpack.c.b16 %v3780, %v3779
    %v3794 = vpack.c.b16 %v3782, %v3781
    %v3795 = vpack.c.b16 %v3784, %v3783
    %v3796 = vpack.c.b16 %v3786, %v3785
    %v3797 = vpack.c.b16 %v3788, %v3787
    %v3798 = vpack.c.b16 %v3790, %v3789
    %3807 = vmatprep.subr.bf16.mxu0 0
    %3808 = vmatpush1.bf16.msra.mxu0 %v3798
    %3809 = vmatprep.subr.bf16.mxu0 0
    %3810 = vmatpush1.bf16.msra.mxu0 %v3797
    %3811 = vmatprep.subr.bf16.mxu0 0
    %3812 = vmatpush1.bf16.msra.mxu0 %v3796
    %3813 = vmatprep.subr.bf16.mxu0 0
    %3814 = vmatpush1.bf16.msra.mxu0 %v3795
    %3815 = vmatprep.subr.bf16.mxu0 0
    %3816 = vmatpush1.bf16.msra.mxu0 %v3794
    %3817 = vmatprep.subr.bf16.mxu0 0
    %3818 = vmatpush1.bf16.msra.mxu0 %v3793
    %3819 = vmatprep.subr.bf16.mxu0 0
    %3820 = vmatpush1.bf16.msra.mxu0 %v3792
    %3821 = vmatprep.subr.bf16.mxu0 0
    %3822 = vmatpush1.bf16.msra.mxu0 %v3791
    %3823 = vmatprep.subr.bf16.mxu0 0
    %3824 = vmatpush2.bf16.msra.mxu0 0
    %3825 = vmatprep.subr.bf16.mxu0 0
    %3826 = vmatpush2.bf16.msra.mxu0 0
    %3827 = vmatprep.subr.bf16.mxu0 0
    %3828 = vmatpush2.bf16.msra.mxu0 0
    %3829 = vmatprep.subr.bf16.mxu0 0
    %3830 = vmatpush2.bf16.msra.mxu0 0
    %3831 = vmatprep.subr.bf16.mxu0 0
    %3832 = vmatpush2.bf16.msra.mxu0 0
    %3833 = vmatprep.subr.bf16.mxu0 0
    %3834 = vmatpush2.bf16.msra.mxu0 0
    %3835 = vmatprep.subr.bf16.mxu0 0
    %3836 = vmatpush2.bf16.msra.mxu0 0
    %3837 = vmatprep.subr.bf16.mxu0 0
    %3838 = vmatpush2.bf16.msra.mxu0 0
    %3839 = vmatprep.mubr.bf16.mxu0 0
    %3840 = vmatmul.mubr.bf16.gmra.mxu0 %v3757
    %v3841 = vpop.f32.mrf.mxu0
    %v3842 = vadd.f32 %v3746, %v3841
    %v3843 = vpop.f32.mrf.mxu0
    %v3844 = vpop.f32.mrf.mxu0
    %v3845 = vpop.f32.mrf.mxu0
    %3846 = vdwg.mxu0
    %v3847 = vld [vmem:[%s17] sm:$0x1]
    %v3849 = vlaneseq
    %v3850 = vshrl.u32 %v3849, 7
    %v3851 = vsub.s32 0, %v3850
    %v3852 = vrot.slane %v3847, %v3851
    %v3854 = vadd.f32 %v3842, %v3852
    %v3855 = vmul.f32 %v3854, 0.5
    %v3856 = vmul.f32 %v3854, %v3854
    %v3857 = vmul.f32 %v3854, %v3856
    %v3858 = vmul.f32 %v3857, 0.044715
    %v3859 = vadd.f32 %v3854, %v3858
    %v3860 = vmul.f32 %v3859, 0.7978846
    %v3861 = vtanh.pop %v3860
    %v3862 = vadd.f32 %v3861, 1.0
    %v3863 = vmul.f32 %v3855, %v3862
    %v3864 = vpack.c.bf16 %v3863, %v3863
    %v3865 = vld [vmem:[#allocation20] sm:$0xf]
    %v3866 = vld [vmem:[#allocation20 + $0x4] sm:$0xf]
    %v3867 = vld [vmem:[#allocation20 + $0x8] sm:$0xf]
    %v3868 = vld [vmem:[#allocation20 + $0xc] sm:$0xf]
    %v3869 = vld [vmem:[#allocation20 + $0x10] sm:$0xf]
    %v3870 = vld [vmem:[#allocation20 + $0x14] sm:$0xf]
    %v3871 = vld [vmem:[#allocation20 + $0x18] sm:$0xf]
    %v3872 = vld [vmem:[#allocation20 + $0x1c] sm:$0xf]
    %v3873 = vld [vmem:[#allocation20 + $0x20] sm:$0xf]
    %v3874 = vld [vmem:[#allocation20 + $0x24] sm:$0xf]
    %v3875 = vld [vmem:[#allocation20 + $0x28] sm:$0xf]
    %v3876 = vld [vmem:[#allocation20 + $0x2c] sm:$0xf]
    %v3877 = vld [vmem:[#allocation20 + $0x30] sm:$0xf]
    %v3878 = vld [vmem:[#allocation20 + $0x34] sm:$0xf]
    %v3879 = vld [vmem:[#allocation20 + $0x38] sm:$0xf]
    %v3880 = vld [vmem:[#allocation20 + $0x3c] sm:$0xf]
    %v3881 = vld [vmem:[#allocation22] sm:$0x1]
    %v3883 = vlaneseq
    %v3884 = vshrl.u32 %v3883, 7
    %v3885 = vsub.s32 0, %v3884
    %v3886 = vrot.slane %v3881, %v3885
    %v3904 = vunpack.c.l.b16 %v3865
    %v3905 = vunpack.c.l.b16 %v3866
    %v3906 = vunpack.c.l.b16 %v3867
    %v3907 = vunpack.c.l.b16 %v3868
    %v3908 = vunpack.c.l.b16 %v3869
    %v3909 = vunpack.c.l.b16 %v3870
    %v3910 = vunpack.c.l.b16 %v3871
    %v3911 = vunpack.c.l.b16 %v3872
    %v3912 = vunpack.c.l.b16 %v3873
    %v3913 = vunpack.c.l.b16 %v3874
    %v3914 = vunpack.c.l.b16 %v3875
    %v3915 = vunpack.c.l.b16 %v3876
    %v3916 = vunpack.c.l.b16 %v3877
    %v3917 = vunpack.c.l.b16 %v3878
    %v3918 = vunpack.c.l.b16 %v3879
    %v3919 = vunpack.c.l.b16 %v3880
    %v3920 = vpack.c.b16 %v3905, %v3904
    %v3921 = vpack.c.b16 %v3907, %v3906
    %v3922 = vpack.c.b16 %v3909, %v3908
    %v3923 = vpack.c.b16 %v3911, %v3910
    %v3924 = vpack.c.b16 %v3913, %v3912
    %v3925 = vpack.c.b16 %v3915, %v3914
    %v3926 = vpack.c.b16 %v3917, %v3916
    %v3927 = vpack.c.b16 %v3919, %v3918
    %3936 = vmatprep.subr.bf16.mxu0 0
    %3937 = vmatpush1.bf16.msra.mxu0 %v3927
    %3938 = vmatprep.subr.bf16.mxu0 0
    %3939 = vmatpush1.bf16.msra.mxu0 %v3926
    %3940 = vmatprep.subr.bf16.mxu0 0
    %3941 = vmatpush1.bf16.msra.mxu0 %v3925
    %3942 = vmatprep.subr.bf16.mxu0 0
    %3943 = vmatpush1.bf16.msra.mxu0 %v3924
    %3944 = vmatprep.subr.bf16.mxu0 0
    %3945 = vmatpush1.bf16.msra.mxu0 %v3923
    %3946 = vmatprep.subr.bf16.mxu0 0
    %3947 = vmatpush1.bf16.msra.mxu0 %v3922
    %3948 = vmatprep.subr.bf16.mxu0 0
    %3949 = vmatpush1.bf16.msra.mxu0 %v3921
    %3950 = vmatprep.subr.bf16.mxu0 0
    %3951 = vmatpush1.bf16.msra.mxu0 %v3920
    %3952 = vmatprep.subr.bf16.mxu0 0
    %3953 = vmatpush2.bf16.msra.mxu0 0
    %3954 = vmatprep.subr.bf16.mxu0 0
    %3955 = vmatpush2.bf16.msra.mxu0 0
    %3956 = vmatprep.subr.bf16.mxu0 0
    %3957 = vmatpush2.bf16.msra.mxu0 0
    %3958 = vmatprep.subr.bf16.mxu0 0
    %3959 = vmatpush2.bf16.msra.mxu0 0
    %3960 = vmatprep.subr.bf16.mxu0 0
    %3961 = vmatpush2.bf16.msra.mxu0 0
    %3962 = vmatprep.subr.bf16.mxu0 0
    %3963 = vmatpush2.bf16.msra.mxu0 0
    %3964 = vmatprep.subr.bf16.mxu0 0
    %3965 = vmatpush2.bf16.msra.mxu0 0
    %3966 = vmatprep.subr.bf16.mxu0 0
    %3967 = vmatpush2.bf16.msra.mxu0 0
    %3968 = vmatprep.mubr.bf16.mxu0 0
    %3969 = vmatmul.mubr.bf16.gmra.mxu0 %v3864
    %v3970 = vpop.f32.mrf.mxu0
    %v3971 = vadd.f32 %v3886, %v3970
    %v3972 = vpop.f32.mrf.mxu0
    %v3973 = vpop.f32.mrf.mxu0
    %v3974 = vpop.f32.mrf.mxu0
    %3975 = vdwg.mxu0
    %3976 = vst [vmem:[#allocation23] sm:$0x3] %v3971
    // Predicated region
    $region134: #{forward.1} parent=1 // pred_check
      _
    $region135: #{forward.1} parent=1 // pred_check_branch
      %3978 = sbr.rel (0) target = $region137
    $region136: #{forward.1} parent=1 // pred_region
      %s3980 = ssub.s32 32, 32
      %3981 = vsyncadd [#allocation4], %s3980
      %s3983 = sshll.u32 [#allocation23], 4
      %s3984 = int_to_ptr.vmem [resolvable:$true] %s3983
      %3986 = dma.vmem_to_hbm [thread:$0]  %s3984, 32, %s20, [#allocation4]
    $region137: #{forward.1} parent=1 // pred_fallthru
      _
    // Predicated region
    $region138: #{forward.1} parent=1 // pred_check
      _
    $region139: #{forward.1} parent=1 // pred_check_branch
      %3988 = sbr.rel (0) target = $region141
    $region140: #{forward.1} parent=1 // pred_region
      %3989 = dma.done [#allocation4], 32
    $region141: #{forward.1} parent=1 // pred_fallthru
      _
    %3990 = vsyncpa [#allocation3], 1
    %3991 = vsyncpa [#allocation6], 1
    %3992 = vsyncpa [#allocation9], 1
    %3993 = vsyncpa [#allocation12], 1
    %3994 = vsyncpa [#allocation15], 1
    %3995 = vsyncpa [#allocation18], 1
    %3996 = vsyncpa [#allocation21], 1
    %3997 = vsyncpa [#allocation4], 1

</llo_original>
